<compile_context>
chip_gen: v5e
topology: v5e:2x2
jax: 0.10.0
libtpu: 0.0.40
codegen_flags: <defaults>
</compile_context>

<pallas_src>
import functools

import jax
import jax.numpy as jnp
import numpy as np
from jax import lax
from jax.experimental import pallas as pl
from jax.experimental.pallas import tpu as pltpu

NUM_CLASSES = 10  # `num_classes` is free in the reference module; fixed to 10 (MNIST).


def _round_up(x, m):
    return (x + m - 1) // m * m


# ---------------------------------------------------------------------------
# Fused conv5x5 (stride 1, pad 2) + bias + ReLU + 2x2 max-pool  — one image per grid step
# ---------------------------------------------------------------------------
def _conv_relu_pool_kernel(xpar_ref, band_ref, bias_ref, out_ref, *, hq, half, n_valid):
    """Fused conv+ReLU+pool for ONE image.

    xpar_ref : (1, 2, hq+2, K)  padded input rows split by row parity, K = (W+4)*Cin
    band_ref : (5, K, 2*half)   banded weights; output cols ordered (dx, wq, co), 128-padded
    bias_ref : (1, 2*half)      bias tiled into the same column order
    out_ref  : (1, hq, n_valid) pooled output in row-flat NHWC (col = wq*Cout + co)
    """
    acc = [None, None]  # accumulator for conv-output rows y = 2*hq + dy, dy in {0, 1}
    for ky in range(5):
        wk = band_ref[ky]                                   # (K, 2*half)
        for dy in range(2):
            t = dy + ky                                     # padded-input row = 2*hq + t
            lhs = xpar_ref[0, t % 2, (t // 2):(t // 2) + hq, :]   # (hq, K)
            d = jnp.dot(lhs, wk, preferred_element_type=jnp.float32)
            acc[dy] = d if acc[dy] is None else acc[dy] + d
    bias = bias_ref[...]                                    # (1, 2*half), broadcasts
    row = jnp.maximum(jnp.maximum(acc[0] + bias, 0.0),
                      jnp.maximum(acc[1] + bias, 0.0))      # ReLU + pool over dy
    pooled = jnp.maximum(row[:, :half], row[:, half:])      # pool over dx (aligned halves)
    out_ref[0] = pooled[:, :n_valid]


def conv5x5_relu_pool(x, band, bias_row, *, H, W, Cin, Cout):
    """x: (B, H, W*Cin) row-flat NHWC  ->  (B, H//2, (W//2)*Cout) row-flat NHWC."""
    B = x.shape[0]
    Hq, Wq, Wp = H // 2, W // 2, W + 4
    K = Wp * Cin
    half = _round_up(Wq * Cout, 128)
    n_valid = Wq * Cout
    # Zero-pad 2 px on each side (x-padding is 2*Cin flat elements in the row-flat layout).
    xp = jnp.pad(x, ((0, 0), (2, 2), (2 * Cin, 2 * Cin)))          # (B, H+4, K)
    # Split padded rows by parity so the kernel needs only contiguous, static slices.
    xpar = jnp.stack([xp[:, 0::2, :], xp[:, 1::2, :]], axis=1)     # (B, 2, Hq+2, K)
    kern = functools.partial(_conv_relu_pool_kernel, hq=Hq, half=half, n_valid=n_valid)
    return pl.pallas_call(
        kern,
        out_shape=jax.ShapeDtypeStruct((B, Hq, n_valid), jnp.float32),
        grid=(B,),
        in_specs=[
            pl.BlockSpec((1, 2, Hq + 2, K), lambda b: (b, 0, 0, 0)),
            pl.BlockSpec((5, K, 2 * half), lambda b: (0, 0, 0)),
            pl.BlockSpec((1, 2 * half), lambda b: (0, 0)),
        ],
        out_specs=pl.BlockSpec((1, Hq, n_valid), lambda b: (b, 0, 0)),
        compiler_params=pltpu.CompilerParams(dimension_semantics=("parallel",)),
    )(xpar, band, bias_row)


# ---------------------------------------------------------------------------
# Fused matmul + bias (final Linear), cdiv grid over M
# ---------------------------------------------------------------------------
def _matmul_bias_kernel(x_ref, w_ref, b_ref, o_ref):
    o_ref[...] = (jnp.dot(x_ref[...], w_ref[...], preferred_element_type=jnp.float32)
                  + b_ref[...]).astype(o_ref.dtype)


def linear(x, w, b, *, tm=256):
    """(M, K) @ (K, N) + b with a cdiv grid over M (ragged tail handled by Pallas)."""
    M, K = x.shape
    N = w.shape[1]
    tm = M if M <= tm else tm
    return pl.pallas_call(
        _matmul_bias_kernel,
        out_shape=jax.ShapeDtypeStruct((M, N), jnp.float32),
        grid=(pl.cdiv(M, tm),),
        in_specs=[
            pl.BlockSpec((tm, K), lambda i: (i, 0)),
            pl.BlockSpec((K, N), lambda i: (0, 0)),
            pl.BlockSpec((1, N), lambda i: (0, 0)),
        ],
        out_specs=pl.BlockSpec((tm, N), lambda i: (i, 0)),
        compiler_params=pltpu.CompilerParams(dimension_semantics=("parallel",)),
    )(x, w, b.reshape(1, N))


# ---------------------------------------------------------------------------
# Full forward pass (mirrors the PyTorch CNN.forward)
# ---------------------------------------------------------------------------
def cnn_forward(x_nchw, kp):
    B = x_nchw.shape[0]
    x = x_nchw.reshape(B, 28, 28)                  # Cin=1: NCHW == row-flat NHWC (free)
    x = conv5x5_relu_pool(x, kp["band1"], kp["bias1"], H=28, W=28, Cin=1, Cout=16)   # (B,14,224)
    x = conv5x5_relu_pool(x, kp["band2"], kp["bias2"], H=14, W=14, Cin=16, Cout=32)  # (B,7,224)
    x = x.reshape(B, 7 * 7 * 32)                   # NHWC flatten (free reshape)
    logits = linear(x, kp["w_fc"], kp["b_fc"])     # (B, 128); cols >= 10 are zero padding
    return logits[:, :NUM_CLASSES]


# ---------------------------------------------------------------------------
# One-time parameter repacking (PyTorch layout -> kernel layout)
# ---------------------------------------------------------------------------
def _band_weight(w_oihw, W):
    """Repack (Cout, Cin, 5, 5) conv weight into 5 banded (Wp*Cin, 2*half) matrices."""
    Cout, Cin, KH, KW = w_oihw.shape
    Wp, Wq = W + 4, W // 2
    half = _round_up(Wq * Cout, 128)
    band = np.zeros((KH, Wp * Cin, 2 * half), np.float32)
    for x in range(W):
        wq, dx = divmod(x, 2)
        c0 = dx * half + wq * Cout
        for ky in range(KH):
            for kx in range(KW):
                band[ky, (x + kx) * Cin:(x + kx + 1) * Cin, c0:c0 + Cout] = w_oihw[:, :, ky, kx].T
    return band


def _tiled_bias(bvec, W, Cout):
    Wq = W // 2
    half = _round_up(Wq * Cout, 128)
    row = np.zeros((1, 2 * half), np.float32)
    for x in range(W):
        wq, dx = divmod(x, 2)
        c0 = dx * half + wq * Cout
        row[0, c0:c0 + Cout] = bvec
    return row


def pack_params(p):
    """Convert PyTorch-layout params to the layouts the Pallas kernels consume (done once)."""
    w_out = np.asarray(p["w_out"], np.float32)          # (10, 32*7*7), torch CHW flatten order
    # Permute columns to NHWC flatten order so no runtime transpose is needed.
    w_fc = w_out.reshape(NUM_CLASSES, 32, 7, 7).transpose(2, 3, 1, 0).reshape(7 * 7 * 32, NUM_CLASSES)
    n_pad = _round_up(NUM_CLASSES, 128)
    w_fc_pad = np.zeros((7 * 7 * 32, n_pad), np.float32)
    w_fc_pad[:, :NUM_CLASSES] = w_fc
    b_fc_pad = np.zeros((n_pad,), np.float32)
    b_fc_pad[:NUM_CLASSES] = np.asarray(p["b_out"], np.float32)
    return dict(
        band1=jnp.asarray(_band_weight(np.asarray(p["w1"], np.float32), W=28)),
        bias1=jnp.asarray(_tiled_bias(np.asarray(p["b1"], np.float32), W=28, Cout=16)),
        band2=jnp.asarray(_band_weight(np.asarray(p["w2"], np.float32), W=14)),
        bias2=jnp.asarray(_tiled_bias(np.asarray(p["b2"], np.float32), W=14, Cout=32)),
        w_fc=jnp.asarray(w_fc_pad),
        b_fc=jnp.asarray(b_fc_pad),
    )


# ---------------------------------------------------------------------------
# Deterministic PyTorch-style parameter init (torch layouts)
# ---------------------------------------------------------------------------
def init_params(key):
    k1, k2, k3 = jax.random.split(key, 3)

    def u(k, shape, fan_in):
        bound = 1.0 / np.sqrt(fan_in)
        return jax.random.uniform(k, shape, jnp.float32, -bound, bound)

    return dict(
        w1=u(k1, (16, 1, 5, 5), 1 * 25),
        b1=u(jax.random.fold_in(k1, 1), (16,), 1 * 25),
        w2=u(k2, (32, 16, 5, 5), 16 * 25),
        b2=u(jax.random.fold_in(k2, 1), (32,), 16 * 25),
        w_out=u(k3, (NUM_CLASSES, 32 * 7 * 7), 32 * 7 * 7),
        b_out=u(jax.random.fold_in(k3, 1), (NUM_CLASSES,), 32 * 7 * 7),
    )


# ---------------------------------------------------------------------------
# Pure-JAX reference (for a correctness assertion), straight from torch-layout params
# ---------------------------------------------------------------------------
def cnn_reference(x_nchw, p):
    def conv(x, w, b):
        y = lax.conv_general_dilated(x, w, (1, 1), ((2, 2), (2, 2)),
                                     dimension_numbers=("NCHW", "OIHW", "NCHW"))
        return jax.nn.relu(y + b[None, :, None, None])

    def pool(x):
        return lax.reduce_window(x, -jnp.inf, lax.max, (1, 1, 2, 2), (1, 1, 2, 2), "VALID")

    x = pool(conv(x_nchw, p["w1"], p["b1"]))
    x = pool(conv(x, p["w2"], p["b2"]))
    x = x.reshape(x.shape[0], -1)                  # torch CHW flatten
    return x @ p["w_out"].T + p["b_out"]


if __name__ == "__main__":
    key = jax.random.PRNGKey(0)
    pkey, xkey = jax.random.split(key)
    params = init_params(pkey)
    kparams = pack_params(params)
    # PyTorch-convention NCHW input; 28x28 is implied by 32*7*7 in the Linear layer.
    x = jax.random.normal(xkey, (2, 1, 28, 28), jnp.float32)

    out = jax.block_until_ready(jax.jit(cnn_forward)(x, kparams))
    assert out.shape == (2, NUM_CLASSES) and out.dtype == jnp.float32

    ref = cnn_reference(x, params)
    np.testing.assert_allclose(np.asarray(out), np.asarray(ref), rtol=1e-3, atol=1e-3)
    print("KERNEL_OK")
</pallas_src>

<mosaic_0001>
module attributes {stable_mosaic.version = 11 : i64} {
  func.func @_conv_relu_pool_kernel(%arg0: i32, %arg1: memref<1x2x16x32xf32, #tpu.memory_space<vmem>>, %arg2: memref<5x32x512xf32, #tpu.memory_space<vmem>>, %arg3: memref<1x512xf32, #tpu.memory_space<vmem>>, %arg4: memref<1x14x224xf32, #tpu.memory_space<vmem>>) attributes {dimension_semantics = [#tpu.dimension_semantics<parallel>], iteration_bounds = array<i64: 2>, scalar_prefetch = 0 : i64, scratch_operands = 0 : i64, tpu.core_type = #tpu.core_type<tc>, window_params = [{transform_indices = @transform_0, window_bounds = array<i64: 1, 2, 16, 32>}, {pipeline_mode = #tpu.pipeline_mode<synchronous>, transform_indices = @transform_1, window_bounds = array<i64: 5, 32, 512>}, {pipeline_mode = #tpu.pipeline_mode<synchronous>, transform_indices = @transform_2, window_bounds = array<i64: 1, 512>}, {transform_indices = @transform_3, window_bounds = array<i64: 1, 14, 224>}]} {
    %c0 = arith.constant 0 : index
    %c0_0 = arith.constant 0 : index
    %c0_1 = arith.constant 0 : index
    %0 = vector.load %arg2[%c0, %c0_0, %c0_1] : memref<5x32x512xf32, #tpu.memory_space<vmem>>, vector<1x32x512xf32>
    %1 = vector.shape_cast %0 : vector<1x32x512xf32> to vector<32x512xf32>
    %c0_2 = arith.constant 0 : index
    %c0_3 = arith.constant 0 : index
    %c0_4 = arith.constant 0 : index
    %c0_5 = arith.constant 0 : index
    %2 = vector.load %arg1[%c0_2, %c0_3, %c0_4, %c0_5] : memref<1x2x16x32xf32, #tpu.memory_space<vmem>>, vector<1x1x14x32xf32>
    %3 = vector.shape_cast %2 : vector<1x1x14x32xf32> to vector<14x32xf32>
    %cst = arith.constant dense<0.000000e+00> : vector<14x512xf32>
    %4 = tpu.matmul %3, %1, %cst {dimension_numbers = #tpu.dot_dimension_numbers<[1], [0], [0], [1], [0, 0, 1, 1], [], []>} : vector<14x32xf32>, vector<32x512xf32>, vector<14x512xf32> -> vector<14x512xf32>
    %c0_6 = arith.constant 0 : index
    %c1 = arith.constant 1 : index
    %c0_7 = arith.constant 0 : index
    %c0_8 = arith.constant 0 : index
    %5 = vector.load %arg1[%c0_6, %c1, %c0_7, %c0_8] : memref<1x2x16x32xf32, #tpu.memory_space<vmem>>, vector<1x1x14x32xf32>
    %6 = vector.shape_cast %5 : vector<1x1x14x32xf32> to vector<14x32xf32>
    %cst_9 = arith.constant dense<0.000000e+00> : vector<14x512xf32>
    %7 = tpu.matmul %6, %1, %cst_9 {dimension_numbers = #tpu.dot_dimension_numbers<[1], [0], [0], [1], [0, 0, 1, 1], [], []>} : vector<14x32xf32>, vector<32x512xf32>, vector<14x512xf32> -> vector<14x512xf32>
    %c1_10 = arith.constant 1 : index
    %c0_11 = arith.constant 0 : index
    %c0_12 = arith.constant 0 : index
    %8 = vector.load %arg2[%c1_10, %c0_11, %c0_12] : memref<5x32x512xf32, #tpu.memory_space<vmem>>, vector<1x32x512xf32>
    %9 = vector.shape_cast %8 : vector<1x32x512xf32> to vector<32x512xf32>
    %c0_13 = arith.constant 0 : index
    %c1_14 = arith.constant 1 : index
    %c0_15 = arith.constant 0 : index
    %c0_16 = arith.constant 0 : index
    %10 = vector.load %arg1[%c0_13, %c1_14, %c0_15, %c0_16] : memref<1x2x16x32xf32, #tpu.memory_space<vmem>>, vector<1x1x14x32xf32>
    %11 = vector.shape_cast %10 : vector<1x1x14x32xf32> to vector<14x32xf32>
    %cst_17 = arith.constant dense<0.000000e+00> : vector<14x512xf32>
    %12 = tpu.matmul %11, %9, %cst_17 {dimension_numbers = #tpu.dot_dimension_numbers<[1], [0], [0], [1], [0, 0, 1, 1], [], []>} : vector<14x32xf32>, vector<32x512xf32>, vector<14x512xf32> -> vector<14x512xf32>
    %13 = arith.addf %4, %12 : vector<14x512xf32>
    %c0_18 = arith.constant 0 : index
    %c0_19 = arith.constant 0 : index
    %c1_20 = arith.constant 1 : index
    %c0_21 = arith.constant 0 : index
    %14 = vector.load %arg1[%c0_18, %c0_19, %c1_20, %c0_21] : memref<1x2x16x32xf32, #tpu.memory_space<vmem>>, vector<1x1x14x32xf32>
    %15 = vector.shape_cast %14 : vector<1x1x14x32xf32> to vector<14x32xf32>
    %cst_22 = arith.constant dense<0.000000e+00> : vector<14x512xf32>
    %16 = tpu.matmul %15, %9, %cst_22 {dimension_numbers = #tpu.dot_dimension_numbers<[1], [0], [0], [1], [0, 0, 1, 1], [], []>} : vector<14x32xf32>, vector<32x512xf32>, vector<14x512xf32> -> vector<14x512xf32>
    %17 = arith.addf %7, %16 : vector<14x512xf32>
    %c2 = arith.constant 2 : index
    %c0_23 = arith.constant 0 : index
    %c0_24 = arith.constant 0 : index
    %18 = vector.load %arg2[%c2, %c0_23, %c0_24] : memref<5x32x512xf32, #tpu.memory_space<vmem>>, vector<1x32x512xf32>
    %19 = vector.shape_cast %18 : vector<1x32x512xf32> to vector<32x512xf32>
    %c0_25 = arith.constant 0 : index
    %c0_26 = arith.constant 0 : index
    %c1_27 = arith.constant 1 : index
    %c0_28 = arith.constant 0 : index
    %20 = vector.load %arg1[%c0_25, %c0_26, %c1_27, %c0_28] : memref<1x2x16x32xf32, #tpu.memory_space<vmem>>, vector<1x1x14x32xf32>
    %21 = vector.shape_cast %20 : vector<1x1x14x32xf32> to vector<14x32xf32>
    %cst_29 = arith.constant dense<0.000000e+00> : vector<14x512xf32>
    %22 = tpu.matmul %21, %19, %cst_29 {dimension_numbers = #tpu.dot_dimension_numbers<[1], [0], [0], [1], [0, 0, 1, 1], [], []>} : vector<14x32xf32>, vector<32x512xf32>, vector<14x512xf32> -> vector<14x512xf32>
    %23 = arith.addf %13, %22 : vector<14x512xf32>
    %c0_30 = arith.constant 0 : index
    %c1_31 = arith.constant 1 : index
    %c1_32 = arith.constant 1 : index
    %c0_33 = arith.constant 0 : index
    %24 = vector.load %arg1[%c0_30, %c1_31, %c1_32, %c0_33] : memref<1x2x16x32xf32, #tpu.memory_space<vmem>>, vector<1x1x14x32xf32>
    %25 = vector.shape_cast %24 : vector<1x1x14x32xf32> to vector<14x32xf32>
    %cst_34 = arith.constant dense<0.000000e+00> : vector<14x512xf32>
    %26 = tpu.matmul %25, %19, %cst_34 {dimension_numbers = #tpu.dot_dimension_numbers<[1], [0], [0], [1], [0, 0, 1, 1], [], []>} : vector<14x32xf32>, vector<32x512xf32>, vector<14x512xf32> -> vector<14x512xf32>
    %27 = arith.addf %17, %26 : vector<14x512xf32>
    %c3 = arith.constant 3 : index
    %c0_35 = arith.constant 0 : index
    %c0_36 = arith.constant 0 : index
    %28 = vector.load %arg2[%c3, %c0_35, %c0_36] : memref<5x32x512xf32, #tpu.memory_space<vmem>>, vector<1x32x512xf32>
    %29 = vector.shape_cast %28 : vector<1x32x512xf32> to vector<32x512xf32>
    %c0_37 = arith.constant 0 : index
    %c1_38 = arith.constant 1 : index
    %c1_39 = arith.constant 1 : index
    %c0_40 = arith.constant 0 : index
    %30 = vector.load %arg1[%c0_37, %c1_38, %c1_39, %c0_40] : memref<1x2x16x32xf32, #tpu.memory_space<vmem>>, vector<1x1x14x32xf32>
    %31 = vector.shape_cast %30 : vector<1x1x14x32xf32> to vector<14x32xf32>
    %cst_41 = arith.constant dense<0.000000e+00> : vector<14x512xf32>
    %32 = tpu.matmul %31, %29, %cst_41 {dimension_numbers = #tpu.dot_dimension_numbers<[1], [0], [0], [1], [0, 0, 1, 1], [], []>} : vector<14x32xf32>, vector<32x512xf32>, vector<14x512xf32> -> vector<14x512xf32>
    %33 = arith.addf %23, %32 : vector<14x512xf32>
    %c0_42 = arith.constant 0 : index
    %c0_43 = arith.constant 0 : index
    %c2_44 = arith.constant 2 : index
    %c0_45 = arith.constant 0 : index
    %34 = vector.load %arg1[%c0_42, %c0_43, %c2_44, %c0_45] : memref<1x2x16x32xf32, #tpu.memory_space<vmem>>, vector<1x1x14x32xf32>
    %35 = vector.shape_cast %34 : vector<1x1x14x32xf32> to vector<14x32xf32>
    %cst_46 = arith.constant dense<0.000000e+00> : vector<14x512xf32>
    %36 = tpu.matmul %35, %29, %cst_46 {dimension_numbers = #tpu.dot_dimension_numbers<[1], [0], [0], [1], [0, 0, 1, 1], [], []>} : vector<14x32xf32>, vector<32x512xf32>, vector<14x512xf32> -> vector<14x512xf32>
    %37 = arith.addf %27, %36 : vector<14x512xf32>
    %c4 = arith.constant 4 : index
    %c0_47 = arith.constant 0 : index
    %c0_48 = arith.constant 0 : index
    %38 = vector.load %arg2[%c4, %c0_47, %c0_48] : memref<5x32x512xf32, #tpu.memory_space<vmem>>, vector<1x32x512xf32>
    %39 = vector.shape_cast %38 : vector<1x32x512xf32> to vector<32x512xf32>
    %c0_49 = arith.constant 0 : index
    %c0_50 = arith.constant 0 : index
    %c2_51 = arith.constant 2 : index
    %c0_52 = arith.constant 0 : index
    %40 = vector.load %arg1[%c0_49, %c0_50, %c2_51, %c0_52] : memref<1x2x16x32xf32, #tpu.memory_space<vmem>>, vector<1x1x14x32xf32>
    %41 = vector.shape_cast %40 : vector<1x1x14x32xf32> to vector<14x32xf32>
    %cst_53 = arith.constant dense<0.000000e+00> : vector<14x512xf32>
    %42 = tpu.matmul %41, %39, %cst_53 {dimension_numbers = #tpu.dot_dimension_numbers<[1], [0], [0], [1], [0, 0, 1, 1], [], []>} : vector<14x32xf32>, vector<32x512xf32>, vector<14x512xf32> -> vector<14x512xf32>
    %43 = arith.addf %33, %42 : vector<14x512xf32>
    %c0_54 = arith.constant 0 : index
    %c1_55 = arith.constant 1 : index
    %c2_56 = arith.constant 2 : index
    %c0_57 = arith.constant 0 : index
    %44 = vector.load %arg1[%c0_54, %c1_55, %c2_56, %c0_57] : memref<1x2x16x32xf32, #tpu.memory_space<vmem>>, vector<1x1x14x32xf32>
    %45 = vector.shape_cast %44 : vector<1x1x14x32xf32> to vector<14x32xf32>
    %cst_58 = arith.constant dense<0.000000e+00> : vector<14x512xf32>
    %46 = tpu.matmul %45, %39, %cst_58 {dimension_numbers = #tpu.dot_dimension_numbers<[1], [0], [0], [1], [0, 0, 1, 1], [], []>} : vector<14x32xf32>, vector<32x512xf32>, vector<14x512xf32> -> vector<14x512xf32>
    %47 = arith.addf %37, %46 : vector<14x512xf32>
    %c0_59 = arith.constant 0 : index
    %c0_60 = arith.constant 0 : index
    %48 = vector.load %arg3[%c0_59, %c0_60] : memref<1x512xf32, #tpu.memory_space<vmem>>, vector<1x512xf32>
    %49 = vector.broadcast %48 : vector<1x512xf32> to vector<14x512xf32>
    %50 = arith.addf %43, %49 : vector<14x512xf32>
    %cst_61 = arith.constant 0.000000e+00 : f32
    %51 = vector.broadcast %cst_61 : f32 to vector<14x512xf32>
    %52 = arith.maximumf %50, %51 : vector<14x512xf32>
    %53 = vector.broadcast %48 : vector<1x512xf32> to vector<14x512xf32>
    %54 = arith.addf %47, %53 : vector<14x512xf32>
    %cst_62 = arith.constant 0.000000e+00 : f32
    %55 = vector.broadcast %cst_62 : f32 to vector<14x512xf32>
    %56 = arith.maximumf %54, %55 : vector<14x512xf32>
    %57 = arith.maximumf %52, %56 : vector<14x512xf32>
    %58 = vector.extract_strided_slice %57 {offsets = [0, 0], sizes = [14, 256], strides = [1, 1]} : vector<14x512xf32> to vector<14x256xf32>
    %59 = vector.extract_strided_slice %57 {offsets = [0, 256], sizes = [14, 256], strides = [1, 1]} : vector<14x512xf32> to vector<14x256xf32>
    %60 = arith.maximumf %58, %59 : vector<14x256xf32>
    %61 = vector.extract_strided_slice %60 {offsets = [0, 0], sizes = [14, 224], strides = [1, 1]} : vector<14x256xf32> to vector<14x224xf32>
    %c0_63 = arith.constant 0 : index
    %c0_64 = arith.constant 0 : index
    %c0_65 = arith.constant 0 : index
    %62 = vector.load %arg4[%c0_63, %c0_64, %c0_65] : memref<1x14x224xf32, #tpu.memory_space<vmem>>, vector<1x14x224xf32>
    %63 = vector.shape_cast %62 : vector<1x14x224xf32> to vector<14x224xf32>
    %64 = vector.shape_cast %61 : vector<14x224xf32> to vector<1x14x224xf32>
    tpu.vector_store %arg4[%c0_63, %c0_64, %c0_65], %64 {strides = array<i32>} : memref<1x14x224xf32, #tpu.memory_space<vmem>>, vector<1x14x224xf32>,
    return
  }
  func.func @transform_0(%arg0: i32) -> (i32, i32, i32, i32) {
    %c0_i32 = arith.constant 0 : i32
    %c0_i32_0 = arith.constant 0 : i32
    %c0_i32_1 = arith.constant 0 : i32
    %c0_i32_2 = arith.constant 0 : i32
    return %arg0, %c0_i32, %c0_i32_0, %c0_i32_1 : i32, i32, i32, i32
  }
  func.func @transform_1(%arg0: i32) -> (i32, i32, i32) {
    %c0_i32 = arith.constant 0 : i32
    %c0_i32_0 = arith.constant 0 : i32
    %c0_i32_1 = arith.constant 0 : i32
    %c0_i32_2 = arith.constant 0 : i32
    return %c0_i32, %c0_i32_0, %c0_i32_1 : i32, i32, i32
  }
  func.func @transform_2(%arg0: i32) -> (i32, i32) {
    %c0_i32 = arith.constant 0 : i32
    %c0_i32_0 = arith.constant 0 : i32
    %c0_i32_1 = arith.constant 0 : i32
    return %c0_i32, %c0_i32_0 : i32, i32
  }
  func.func @transform_3(%arg0: i32) -> (i32, i32, i32) {
    %c0_i32 = arith.constant 0 : i32
    %c0_i32_0 = arith.constant 0 : i32
    %c0_i32_1 = arith.constant 0 : i32
    return %arg0, %c0_i32, %c0_i32_0 : i32, i32, i32
  }
}

module attributes {stable_mosaic.version = 11 : i64} {
  func.func @_conv_relu_pool_kernel(%arg0: i32, %arg1: memref<1x2x9x288xf32, #tpu.memory_space<vmem>>, %arg2: memref<5x288x512xf32, #tpu.memory_space<vmem>>, %arg3: memref<1x512xf32, #tpu.memory_space<vmem>>, %arg4: memref<1x7x224xf32, #tpu.memory_space<vmem>>) attributes {dimension_semantics = [#tpu.dimension_semantics<parallel>], iteration_bounds = array<i64: 2>, scalar_prefetch = 0 : i64, scratch_operands = 0 : i64, tpu.core_type = #tpu.core_type<tc>, window_params = [{transform_indices = @transform_0, window_bounds = array<i64: 1, 2, 9, 288>}, {pipeline_mode = #tpu.pipeline_mode<synchronous>, transform_indices = @transform_1, window_bounds = array<i64: 5, 288, 512>}, {pipeline_mode = #tpu.pipeline_mode<synchronous>, transform_indices = @transform_2, window_bounds = array<i64: 1, 512>}, {transform_indices = @transform_3, window_bounds = array<i64: 1, 7, 224>}]} {
    %c0 = arith.constant 0 : index
    %c0_0 = arith.constant 0 : index
    %c0_1 = arith.constant 0 : index
    %0 = vector.load %arg2[%c0, %c0_0, %c0_1] : memref<5x288x512xf32, #tpu.memory_space<vmem>>, vector<1x288x512xf32>
    %1 = vector.shape_cast %0 : vector<1x288x512xf32> to vector<288x512xf32>
    %c0_2 = arith.constant 0 : index
    %c0_3 = arith.constant 0 : index
    %c0_4 = arith.constant 0 : index
    %c0_5 = arith.constant 0 : index
    %2 = vector.load %arg1[%c0_2, %c0_3, %c0_4, %c0_5] : memref<1x2x9x288xf32, #tpu.memory_space<vmem>>, vector<1x1x7x288xf32>
    %3 = vector.shape_cast %2 : vector<1x1x7x288xf32> to vector<7x288xf32>
    %cst = arith.constant dense<0.000000e+00> : vector<7x512xf32>
    %4 = tpu.matmul %3, %1, %cst {dimension_numbers = #tpu.dot_dimension_numbers<[1], [0], [0], [1], [0, 0, 1, 1], [], []>} : vector<7x288xf32>, vector<288x512xf32>, vector<7x512xf32> -> vector<7x512xf32>
    %c0_6 = arith.constant 0 : index
    %c1 = arith.constant 1 : index
    %c0_7 = arith.constant 0 : index
    %c0_8 = arith.constant 0 : index
    %5 = vector.load %arg1[%c0_6, %c1, %c0_7, %c0_8] : memref<1x2x9x288xf32, #tpu.memory_space<vmem>>, vector<1x1x7x288xf32>
    %6 = vector.shape_cast %5 : vector<1x1x7x288xf32> to vector<7x288xf32>
    %cst_9 = arith.constant dense<0.000000e+00> : vector<7x512xf32>
    %7 = tpu.matmul %6, %1, %cst_9 {dimension_numbers = #tpu.dot_dimension_numbers<[1], [0], [0], [1], [0, 0, 1, 1], [], []>} : vector<7x288xf32>, vector<288x512xf32>, vector<7x512xf32> -> vector<7x512xf32>
    %c1_10 = arith.constant 1 : index
    %c0_11 = arith.constant 0 : index
    %c0_12 = arith.constant 0 : index
    %8 = vector.load %arg2[%c1_10, %c0_11, %c0_12] : memref<5x288x512xf32, #tpu.memory_space<vmem>>, vector<1x288x512xf32>
    %9 = vector.shape_cast %8 : vector<1x288x512xf32> to vector<288x512xf32>
    %c0_13 = arith.constant 0 : index
    %c1_14 = arith.constant 1 : index
    %c0_15 = arith.constant 0 : index
    %c0_16 = arith.constant 0 : index
    %10 = vector.load %arg1[%c0_13, %c1_14, %c0_15, %c0_16] : memref<1x2x9x288xf32, #tpu.memory_space<vmem>>, vector<1x1x7x288xf32>
    %11 = vector.shape_cast %10 : vector<1x1x7x288xf32> to vector<7x288xf32>
    %cst_17 = arith.constant dense<0.000000e+00> : vector<7x512xf32>
    %12 = tpu.matmul %11, %9, %cst_17 {dimension_numbers = #tpu.dot_dimension_numbers<[1], [0], [0], [1], [0, 0, 1, 1], [], []>} : vector<7x288xf32>, vector<288x512xf32>, vector<7x512xf32> -> vector<7x512xf32>
    %13 = arith.addf %4, %12 : vector<7x512xf32>
    %c0_18 = arith.constant 0 : index
    %c0_19 = arith.constant 0 : index
    %c1_20 = arith.constant 1 : index
    %c0_21 = arith.constant 0 : index
    %14 = vector.load %arg1[%c0_18, %c0_19, %c1_20, %c0_21] : memref<1x2x9x288xf32, #tpu.memory_space<vmem>>, vector<1x1x7x288xf32>
    %15 = vector.shape_cast %14 : vector<1x1x7x288xf32> to vector<7x288xf32>
    %cst_22 = arith.constant dense<0.000000e+00> : vector<7x512xf32>
    %16 = tpu.matmul %15, %9, %cst_22 {dimension_numbers = #tpu.dot_dimension_numbers<[1], [0], [0], [1], [0, 0, 1, 1], [], []>} : vector<7x288xf32>, vector<288x512xf32>, vector<7x512xf32> -> vector<7x512xf32>
    %17 = arith.addf %7, %16 : vector<7x512xf32>
    %c2 = arith.constant 2 : index
    %c0_23 = arith.constant 0 : index
    %c0_24 = arith.constant 0 : index
    %18 = vector.load %arg2[%c2, %c0_23, %c0_24] : memref<5x288x512xf32, #tpu.memory_space<vmem>>, vector<1x288x512xf32>
    %19 = vector.shape_cast %18 : vector<1x288x512xf32> to vector<288x512xf32>
    %c0_25 = arith.constant 0 : index
    %c0_26 = arith.constant 0 : index
    %c1_27 = arith.constant 1 : index
    %c0_28 = arith.constant 0 : index
    %20 = vector.load %arg1[%c0_25, %c0_26, %c1_27, %c0_28] : memref<1x2x9x288xf32, #tpu.memory_space<vmem>>, vector<1x1x7x288xf32>
    %21 = vector.shape_cast %20 : vector<1x1x7x288xf32> to vector<7x288xf32>
    %cst_29 = arith.constant dense<0.000000e+00> : vector<7x512xf32>
    %22 = tpu.matmul %21, %19, %cst_29 {dimension_numbers = #tpu.dot_dimension_numbers<[1], [0], [0], [1], [0, 0, 1, 1], [], []>} : vector<7x288xf32>, vector<288x512xf32>, vector<7x512xf32> -> vector<7x512xf32>
    %23 = arith.addf %13, %22 : vector<7x512xf32>
    %c0_30 = arith.constant 0 : index
    %c1_31 = arith.constant 1 : index
    %c1_32 = arith.constant 1 : index
    %c0_33 = arith.constant 0 : index
    %24 = vector.load %arg1[%c0_30, %c1_31, %c1_32, %c0_33] : memref<1x2x9x288xf32, #tpu.memory_space<vmem>>, vector<1x1x7x288xf32>
    %25 = vector.shape_cast %24 : vector<1x1x7x288xf32> to vector<7x288xf32>
    %cst_34 = arith.constant dense<0.000000e+00> : vector<7x512xf32>
    %26 = tpu.matmul %25, %19, %cst_34 {dimension_numbers = #tpu.dot_dimension_numbers<[1], [0], [0], [1], [0, 0, 1, 1], [], []>} : vector<7x288xf32>, vector<288x512xf32>, vector<7x512xf32> -> vector<7x512xf32>
    %27 = arith.addf %17, %26 : vector<7x512xf32>
    %c3 = arith.constant 3 : index
    %c0_35 = arith.constant 0 : index
    %c0_36 = arith.constant 0 : index
    %28 = vector.load %arg2[%c3, %c0_35, %c0_36] : memref<5x288x512xf32, #tpu.memory_space<vmem>>, vector<1x288x512xf32>
    %29 = vector.shape_cast %28 : vector<1x288x512xf32> to vector<288x512xf32>
    %c0_37 = arith.constant 0 : index
    %c1_38 = arith.constant 1 : index
    %c1_39 = arith.constant 1 : index
    %c0_40 = arith.constant 0 : index
    %30 = vector.load %arg1[%c0_37, %c1_38, %c1_39, %c0_40] : memref<1x2x9x288xf32, #tpu.memory_space<vmem>>, vector<1x1x7x288xf32>
    %31 = vector.shape_cast %30 : vector<1x1x7x288xf32> to vector<7x288xf32>
    %cst_41 = arith.constant dense<0.000000e+00> : vector<7x512xf32>
    %32 = tpu.matmul %31, %29, %cst_41 {dimension_numbers = #tpu.dot_dimension_numbers<[1], [0], [0], [1], [0, 0, 1, 1], [], []>} : vector<7x288xf32>, vector<288x512xf32>, vector<7x512xf32> -> vector<7x512xf32>
    %33 = arith.addf %23, %32 : vector<7x512xf32>
    %c0_42 = arith.constant 0 : index
    %c0_43 = arith.constant 0 : index
    %c2_44 = arith.constant 2 : index
    %c0_45 = arith.constant 0 : index
    %34 = vector.load %arg1[%c0_42, %c0_43, %c2_44, %c0_45] : memref<1x2x9x288xf32, #tpu.memory_space<vmem>>, vector<1x1x7x288xf32>
    %35 = vector.shape_cast %34 : vector<1x1x7x288xf32> to vector<7x288xf32>
    %cst_46 = arith.constant dense<0.000000e+00> : vector<7x512xf32>
    %36 = tpu.matmul %35, %29, %cst_46 {dimension_numbers = #tpu.dot_dimension_numbers<[1], [0], [0], [1], [0, 0, 1, 1], [], []>} : vector<7x288xf32>, vector<288x512xf32>, vector<7x512xf32> -> vector<7x512xf32>
    %37 = arith.addf %27, %36 : vector<7x512xf32>
    %c4 = arith.constant 4 : index
    %c0_47 = arith.constant 0 : index
    %c0_48 = arith.constant 0 : index
    %38 = vector.load %arg2[%c4, %c0_47, %c0_48] : memref<5x288x512xf32, #tpu.memory_space<vmem>>, vector<1x288x512xf32>
    %39 = vector.shape_cast %38 : vector<1x288x512xf32> to vector<288x512xf32>
    %c0_49 = arith.constant 0 : index
    %c0_50 = arith.constant 0 : index
    %c2_51 = arith.constant 2 : index
    %c0_52 = arith.constant 0 : index
    %40 = vector.load %arg1[%c0_49, %c0_50, %c2_51, %c0_52] : memref<1x2x9x288xf32, #tpu.memory_space<vmem>>, vector<1x1x7x288xf32>
    %41 = vector.shape_cast %40 : vector<1x1x7x288xf32> to vector<7x288xf32>
    %cst_53 = arith.constant dense<0.000000e+00> : vector<7x512xf32>
    %42 = tpu.matmul %41, %39, %cst_53 {dimension_numbers = #tpu.dot_dimension_numbers<[1], [0], [0], [1], [0, 0, 1, 1], [], []>} : vector<7x288xf32>, vector<288x512xf32>, vector<7x512xf32> -> vector<7x512xf32>
    %43 = arith.addf %33, %42 : vector<7x512xf32>
    %c0_54 = arith.constant 0 : index
    %c1_55 = arith.constant 1 : index
    %c2_56 = arith.constant 2 : index
    %c0_57 = arith.constant 0 : index
    %44 = vector.load %arg1[%c0_54, %c1_55, %c2_56, %c0_57] : memref<1x2x9x288xf32, #tpu.memory_space<vmem>>, vector<1x1x7x288xf32>
    %45 = vector.shape_cast %44 : vector<1x1x7x288xf32> to vector<7x288xf32>
    %cst_58 = arith.constant dense<0.000000e+00> : vector<7x512xf32>
    %46 = tpu.matmul %45, %39, %cst_58 {dimension_numbers = #tpu.dot_dimension_numbers<[1], [0], [0], [1], [0, 0, 1, 1], [], []>} : vector<7x288xf32>, vector<288x512xf32>, vector<7x512xf32> -> vector<7x512xf32>
    %47 = arith.addf %37, %46 : vector<7x512xf32>
    %c0_59 = arith.constant 0 : index
    %c0_60 = arith.constant 0 : index
    %48 = vector.load %arg3[%c0_59, %c0_60] : memref<1x512xf32, #tpu.memory_space<vmem>>, vector<1x512xf32>
    %49 = vector.broadcast %48 : vector<1x512xf32> to vector<7x512xf32>
    %50 = arith.addf %43, %49 : vector<7x512xf32>
    %cst_61 = arith.constant 0.000000e+00 : f32
    %51 = vector.broadcast %cst_61 : f32 to vector<7x512xf32>
    %52 = arith.maximumf %50, %51 : vector<7x512xf32>
    %53 = vector.broadcast %48 : vector<1x512xf32> to vector<7x512xf32>
    %54 = arith.addf %47, %53 : vector<7x512xf32>
    %cst_62 = arith.constant 0.000000e+00 : f32
    %55 = vector.broadcast %cst_62 : f32 to vector<7x512xf32>
    %56 = arith.maximumf %54, %55 : vector<7x512xf32>
    %57 = arith.maximumf %52, %56 : vector<7x512xf32>
    %58 = vector.extract_strided_slice %57 {offsets = [0, 0], sizes = [7, 256], strides = [1, 1]} : vector<7x512xf32> to vector<7x256xf32>
    %59 = vector.extract_strided_slice %57 {offsets = [0, 256], sizes = [7, 256], strides = [1, 1]} : vector<7x512xf32> to vector<7x256xf32>
    %60 = arith.maximumf %58, %59 : vector<7x256xf32>
    %61 = vector.extract_strided_slice %60 {offsets = [0, 0], sizes = [7, 224], strides = [1, 1]} : vector<7x256xf32> to vector<7x224xf32>
    %c0_63 = arith.constant 0 : index
    %c0_64 = arith.constant 0 : index
    %c0_65 = arith.constant 0 : index
    %62 = vector.load %arg4[%c0_63, %c0_64, %c0_65] : memref<1x7x224xf32, #tpu.memory_space<vmem>>, vector<1x7x224xf32>
    %63 = vector.shape_cast %62 : vector<1x7x224xf32> to vector<7x224xf32>
    %64 = vector.shape_cast %61 : vector<7x224xf32> to vector<1x7x224xf32>
    tpu.vector_store %arg4[%c0_63, %c0_64, %c0_65], %64 {strides = array<i32>} : memref<1x7x224xf32, #tpu.memory_space<vmem>>, vector<1x7x224xf32>,
    return
  }
  func.func @transform_0(%arg0: i32) -> (i32, i32, i32, i32) {
    %c0_i32 = arith.constant 0 : i32
    %c0_i32_0 = arith.constant 0 : i32
    %c0_i32_1 = arith.constant 0 : i32
    %c0_i32_2 = arith.constant 0 : i32
    return %arg0, %c0_i32, %c0_i32_0, %c0_i32_1 : i32, i32, i32, i32
  }
  func.func @transform_1(%arg0: i32) -> (i32, i32, i32) {
    %c0_i32 = arith.constant 0 : i32
    %c0_i32_0 = arith.constant 0 : i32
    %c0_i32_1 = arith.constant 0 : i32
    %c0_i32_2 = arith.constant 0 : i32
    return %c0_i32, %c0_i32_0, %c0_i32_1 : i32, i32, i32
  }
  func.func @transform_2(%arg0: i32) -> (i32, i32) {
    %c0_i32 = arith.constant 0 : i32
    %c0_i32_0 = arith.constant 0 : i32
    %c0_i32_1 = arith.constant 0 : i32
    return %c0_i32, %c0_i32_0 : i32, i32
  }
  func.func @transform_3(%arg0: i32) -> (i32, i32, i32) {
    %c0_i32 = arith.constant 0 : i32
    %c0_i32_0 = arith.constant 0 : i32
    %c0_i32_1 = arith.constant 0 : i32
    return %arg0, %c0_i32, %c0_i32_0 : i32, i32, i32
  }
}

module attributes {stable_mosaic.version = 11 : i64} {
  func.func @_matmul_bias_kernel(%arg0: i32, %arg1: memref<2x1568xf32, #tpu.memory_space<vmem>>, %arg2: memref<1568x128xf32, #tpu.memory_space<vmem>>, %arg3: memref<1x128xf32, #tpu.memory_space<vmem>>, %arg4: memref<2x128xf32, #tpu.memory_space<vmem>>) attributes {dimension_semantics = [#tpu.dimension_semantics<parallel>], iteration_bounds = array<i64: 1>, scalar_prefetch = 0 : i64, scratch_operands = 0 : i64, tpu.core_type = #tpu.core_type<tc>, window_params = [{transform_indices = @transform_0, window_bounds = array<i64: 2, 1568>}, {pipeline_mode = #tpu.pipeline_mode<synchronous>, transform_indices = @transform_1, window_bounds = array<i64: 1568, 128>}, {pipeline_mode = #tpu.pipeline_mode<synchronous>, transform_indices = @transform_2, window_bounds = array<i64: 1, 128>}, {transform_indices = @transform_3, window_bounds = array<i64: 2, 128>}]} {
    %c0 = arith.constant 0 : index
    %c0_0 = arith.constant 0 : index
    %0 = vector.load %arg1[%c0, %c0_0] : memref<2x1568xf32, #tpu.memory_space<vmem>>, vector<2x1568xf32>
    %c0_1 = arith.constant 0 : index
    %c0_2 = arith.constant 0 : index
    %1 = vector.load %arg2[%c0_1, %c0_2] : memref<1568x128xf32, #tpu.memory_space<vmem>>, vector<1568x128xf32>
    %cst = arith.constant dense<0.000000e+00> : vector<2x128xf32>
    %2 = tpu.matmul %0, %1, %cst {dimension_numbers = #tpu.dot_dimension_numbers<[1], [0], [0], [1], [0, 0, 1, 1], [], []>} : vector<2x1568xf32>, vector<1568x128xf32>, vector<2x128xf32> -> vector<2x128xf32>
    %c0_3 = arith.constant 0 : index
    %c0_4 = arith.constant 0 : index
    %3 = vector.load %arg3[%c0_3, %c0_4] : memref<1x128xf32, #tpu.memory_space<vmem>>, vector<1x128xf32>
    %4 = vector.broadcast %3 : vector<1x128xf32> to vector<2x128xf32>
    %5 = arith.addf %2, %4 : vector<2x128xf32>
    %c0_5 = arith.constant 0 : index
    %c0_6 = arith.constant 0 : index
    %6 = vector.load %arg4[%c0_5, %c0_6] : memref<2x128xf32, #tpu.memory_space<vmem>>, vector<2x128xf32>
    tpu.vector_store %arg4[%c0_5, %c0_6], %5 {strides = array<i32>} : memref<2x128xf32, #tpu.memory_space<vmem>>, vector<2x128xf32>,
    return
  }
  func.func @transform_0(%arg0: i32) -> (i32, i32) {
    %c0_i32 = arith.constant 0 : i32
    %c0_i32_0 = arith.constant 0 : i32
    return %arg0, %c0_i32 : i32, i32
  }
  func.func @transform_1(%arg0: i32) -> (i32, i32) {
    %c0_i32 = arith.constant 0 : i32
    %c0_i32_0 = arith.constant 0 : i32
    %c0_i32_1 = arith.constant 0 : i32
    return %c0_i32, %c0_i32_0 : i32, i32
  }
  func.func @transform_2(%arg0: i32) -> (i32, i32) {
    %c0_i32 = arith.constant 0 : i32
    %c0_i32_0 = arith.constant 0 : i32
    %c0_i32_1 = arith.constant 0 : i32
    return %c0_i32, %c0_i32_0 : i32, i32
  }
  func.func @transform_3(%arg0: i32) -> (i32, i32) {
    %c0_i32 = arith.constant 0 : i32
    %c0_i32_0 = arith.constant 0 : i32
    return %arg0, %c0_i32 : i32, i32
  }
}

</mosaic_0001>

<llo_original>
// kernel: cnn_forward.5
$region0: #{cnn_forward.5}
  #allocation0 [shape = 'u32[]', space=smem, size = 0x4, offset = 0x4, fixed_abs, tag = 'smem constant byte address 0x4 - core index']
  #allocation1 [shape = 'u32[72,128]{1,0:T(1,128)}', space=vmem, size = 0x9000, scoped, tag = 'internal scratch']
  %s0 = inlined_call_operand.vmem [shape: f32[2,1568], index: 0, kind: input, shape index: {}]
  %s1 = inlined_call_operand.hbm [shape: f32[1568,128], index: 1, kind: input, shape index: {}]
  %s2 = inlined_call_operand.hbm [shape: f32[1,128], index: 2, kind: input, shape index: {}]
  %s3 = inlined_call_operand.hbm [shape: f32[2,128], index: 3, kind: output, shape index: {}]
  %s4 = sld [smem:[#allocation0]]
  $region30: #{cnn_forward.5} parent=0
    _
  %s6 = ssub.s32 1, %s4
  %s7 = scalar_select 0, %s6, %s4
  $region1: #{cnn_forward.5} parent=0
    #allocation2 [shape = 'u8[802816]{0}', space=vmem, size = 0xc4000, scoped, tag = 'input window, operand 1, single buffered']
    #allocation3 [shape = 's32[1]{0}', space=sflag, size = 0x4, scoped, tag = 'scoped memory for cnn_forward.5']
    #allocation4 [shape = 's32[1]{0}', space=sflag, size = 0x4, scoped, tag = 'scoped memory for cnn_forward.5']
    #allocation5 [shape = 'u8[512]{0}', space=vmem, size = 0x400, scoped, tag = 'input window, operand 2, single buffered']
    #allocation6 [shape = 's32[1]{0}', space=sflag, size = 0x4, scoped, tag = 'scoped memory for cnn_forward.5']
    #allocation7 [shape = 'u8[1024]{0}', space=vmem, size = 0x400, scoped, tag = 'output window, operand 0, single buffered']
    %8 = vsyncpa [#allocation3], 0
    %9 = vsyncpa [#allocation6], 0
    %10 = vsyncpa [#allocation4], 0
    // Predicated region
    $region2: #{cnn_forward.5} parent=1 // pred_check
      _
    $region3: #{cnn_forward.5} parent=1 // pred_check_branch
      %12 = sbr.rel (0) target = $region5
    $region4: #{cnn_forward.5} parent=1 // pred_region
      _
    $region5: #{cnn_forward.5} parent=1 // pred_fallthru
      _
    // Predicated region
    $region6: #{cnn_forward.5} parent=1 // pred_check
      _
    $region7: #{cnn_forward.5} parent=1 // pred_check_branch
      %14 = sbr.rel (0) target = $region9
    $region8: #{cnn_forward.5} parent=1 // pred_region
      %16 = vsyncadd [#allocation3], 0
      %s17 = sshll.u32 %s1, 4
      %s18 = int_to_ptr.hbm [resolvable:$true] %s17
      %s19 = sshll.u32 [#allocation2], 4
      %s20 = int_to_ptr.vmem [resolvable:$true] %s19
      %25 = dma.hbm_to_vmem [thread:$0]  %s18, 25088, %s20, [#allocation3], 128, 128, 8
    $region9: #{cnn_forward.5} parent=1 // pred_fallthru
      _
    // Predicated region
    $region10: #{cnn_forward.5} parent=1 // pred_check
      _
    $region11: #{cnn_forward.5} parent=1 // pred_check_branch
      %27 = sbr.rel (0) target = $region13
    $region12: #{cnn_forward.5} parent=1 // pred_region
      %29 = vsyncadd [#allocation6], 0
      %s31 = sshll.u32 %s2, 4
      %s32 = int_to_ptr.hbm [resolvable:$true] %s31
      %s33 = sshll.u32 [#allocation5], 4
      %s34 = int_to_ptr.vmem [resolvable:$true] %s33
      %36 = dma.hbm_to_vmem [thread:$0]  %s32, 16, %s34, [#allocation6]
    $region13: #{cnn_forward.5} parent=1 // pred_fallthru
      _
    // Predicated region
    $region14: #{cnn_forward.5} parent=1 // pred_check
      _
    $region15: #{cnn_forward.5} parent=1 // pred_check_branch
      %38 = sbr.rel (0) target = $region17
    $region16: #{cnn_forward.5} parent=1 // pred_region
      %40 = dma.done [#allocation3], 25088
    $region17: #{cnn_forward.5} parent=1 // pred_fallthru
      _
    // Predicated region
    $region18: #{cnn_forward.5} parent=1 // pred_check
      _
    $region19: #{cnn_forward.5} parent=1 // pred_check_branch
      %42 = sbr.rel (0) target = $region21
    $region20: #{cnn_forward.5} parent=1 // pred_region
      %44 = dma.done [#allocation6], 16
    $region21: #{cnn_forward.5} parent=1 // pred_fallthru
      _
    %v45 = vld [vmem:[%s0] sm:$0xff]
    %v46 = vld [vmem:[%s0 + $0x8] sm:$0xff]
    %v47 = vld [vmem:[%s0 + $0x10] sm:$0xff]
    %v48 = vld [vmem:[%s0 + $0x18] sm:$0x3]
    %v49 = vld [vmem:[#allocation2] sm:$0xff]
    %v50 = vld [vmem:[#allocation2 + $0x8] sm:$0xff]
    %v51 = vld [vmem:[#allocation2 + $0x10] sm:$0xff]
    %v52 = vld [vmem:[#allocation2 + $0x18] sm:$0xff]
    %v53 = vld [vmem:[#allocation2 + $0x20] sm:$0xff]
    %v54 = vld [vmem:[#allocation2 + $0x28] sm:$0xff]
    %v55 = vld [vmem:[#allocation2 + $0x30] sm:$0xff]
    %v56 = vld [vmem:[#allocation2 + $0x38] sm:$0xff]
    %v57 = vld [vmem:[#allocation2 + $0x40] sm:$0xff]
    %v58 = vld [vmem:[#allocation2 + $0x48] sm:$0xff]
    %v59 = vld [vmem:[#allocation2 + $0x50] sm:$0xff]
    %v60 = vld [vmem:[#allocation2 + $0x58] sm:$0xff]
    %v61 = vld [vmem:[#allocation2 + $0x60] sm:$0xff]
    %v62 = vld [vmem:[#allocation2 + $0x68] sm:$0xff]
    %v63 = vld [vmem:[#allocation2 + $0x70] sm:$0xff]
    %v64 = vld [vmem:[#allocation2 + $0x78] sm:$0xff]
    %v65 = vld [vmem:[#allocation2 + $0x80] sm:$0xff]
    %v66 = vld [vmem:[#allocation2 + $0x88] sm:$0xff]
    %v67 = vld [vmem:[#allocation2 + $0x90] sm:$0xff]
    %v68 = vld [vmem:[#allocation2 + $0x98] sm:$0xff]
    %v69 = vld [vmem:[#allocation2 + $0xa0] sm:$0xff]
    %v70 = vld [vmem:[#allocation2 + $0xa8] sm:$0xff]
    %v71 = vld [vmem:[#allocation2 + $0xb0] sm:$0xff]
    %v72 = vld [vmem:[#allocation2 + $0xb8] sm:$0xff]
    %v73 = vld [vmem:[#allocation2 + $0xc0] sm:$0xff]
    %v74 = vld [vmem:[#allocation2 + $0xc8] sm:$0xff]
    %v75 = vld [vmem:[#allocation2 + $0xd0] sm:$0xff]
    %v76 = vld [vmem:[#allocation2 + $0xd8] sm:$0xff]
    %v77 = vld [vmem:[#allocation2 + $0xe0] sm:$0xff]
    %v78 = vld [vmem:[#allocation2 + $0xe8] sm:$0xff]
    %v79 = vld [vmem:[#allocation2 + $0xf0] sm:$0xff]
    %v80 = vld [vmem:[#allocation2 + $0xf8] sm:$0xff]
    %v81 = vld [vmem:[#allocation2 + $0x100] sm:$0xff]
    %v82 = vld [vmem:[#allocation2 + $0x108] sm:$0xff]
    %v83 = vld [vmem:[#allocation2 + $0x110] sm:$0xff]
    %v84 = vld [vmem:[#allocation2 + $0x118] sm:$0xff]
    %v85 = vld [vmem:[#allocation2 + $0x120] sm:$0xff]
    %v86 = vld [vmem:[#allocation2 + $0x128] sm:$0xff]
    %v87 = vld [vmem:[#allocation2 + $0x130] sm:$0xff]
    %v88 = vld [vmem:[#allocation2 + $0x138] sm:$0xff]
    %v89 = vld [vmem:[#allocation2 + $0x140] sm:$0xff]
    %v90 = vld [vmem:[#allocation2 + $0x148] sm:$0xff]
    %v91 = vld [vmem:[#allocation2 + $0x150] sm:$0xff]
    %v92 = vld [vmem:[#allocation2 + $0x158] sm:$0xff]
    %v93 = vld [vmem:[#allocation2 + $0x160] sm:$0xff]
    %v94 = vld [vmem:[#allocation2 + $0x168] sm:$0xff]
    %v95 = vld [vmem:[#allocation2 + $0x170] sm:$0xff]
    %v96 = vld [vmem:[#allocation2 + $0x178] sm:$0xff]
    %v97 = vld [vmem:[#allocation2 + $0x180] sm:$0xff]
    %v98 = vld [vmem:[#allocation2 + $0x188] sm:$0xff]
    %v99 = vld [vmem:[#allocation2 + $0x190] sm:$0xff]
    %v100 = vld [vmem:[#allocation2 + $0x198] sm:$0xff]
    %v101 = vld [vmem:[#allocation2 + $0x1a0] sm:$0xff]
    %v102 = vld [vmem:[#allocation2 + $0x1a8] sm:$0xff]
    %v103 = vld [vmem:[#allocation2 + $0x1b0] sm:$0xff]
    %v104 = vld [vmem:[#allocation2 + $0x1b8] sm:$0xff]
    %v105 = vld [vmem:[#allocation2 + $0x1c0] sm:$0xff]
    %v106 = vld [vmem:[#allocation2 + $0x1c8] sm:$0xff]
    %v107 = vld [vmem:[#allocation2 + $0x1d0] sm:$0xff]
    %v108 = vld [vmem:[#allocation2 + $0x1d8] sm:$0xff]
    %v109 = vld [vmem:[#allocation2 + $0x1e0] sm:$0xff]
    %v110 = vld [vmem:[#allocation2 + $0x1e8] sm:$0xff]
    %v111 = vld [vmem:[#allocation2 + $0x1f0] sm:$0xff]
    %v112 = vld [vmem:[#allocation2 + $0x1f8] sm:$0xff]
    %v113 = vld [vmem:[#allocation2 + $0x200] sm:$0xff]
    %v114 = vld [vmem:[#allocation2 + $0x208] sm:$0xff]
    %v115 = vld [vmem:[#allocation2 + $0x210] sm:$0xff]
    %v116 = vld [vmem:[#allocation2 + $0x218] sm:$0xff]
    %v117 = vld [vmem:[#allocation2 + $0x220] sm:$0xff]
    %v118 = vld [vmem:[#allocation2 + $0x228] sm:$0xff]
    %v119 = vld [vmem:[#allocation2 + $0x230] sm:$0xff]
    %v120 = vld [vmem:[#allocation2 + $0x238] sm:$0xff]
    %v121 = vld [vmem:[#allocation2 + $0x240] sm:$0xff]
    %v122 = vld [vmem:[#allocation2 + $0x248] sm:$0xff]
    %v123 = vld [vmem:[#allocation2 + $0x250] sm:$0xff]
    %v124 = vld [vmem:[#allocation2 + $0x258] sm:$0xff]
    %v125 = vld [vmem:[#allocation2 + $0x260] sm:$0xff]
    %v126 = vld [vmem:[#allocation2 + $0x268] sm:$0xff]
    %v127 = vld [vmem:[#allocation2 + $0x270] sm:$0xff]
    %v128 = vld [vmem:[#allocation2 + $0x278] sm:$0xff]
    %v129 = vld [vmem:[#allocation2 + $0x280] sm:$0xff]
    %v130 = vld [vmem:[#allocation2 + $0x288] sm:$0xff]
    %v131 = vld [vmem:[#allocation2 + $0x290] sm:$0xff]
    %v132 = vld [vmem:[#allocation2 + $0x298] sm:$0xff]
    %v133 = vld [vmem:[#allocation2 + $0x2a0] sm:$0xff]
    %v134 = vld [vmem:[#allocation2 + $0x2a8] sm:$0xff]
    %v135 = vld [vmem:[#allocation2 + $0x2b0] sm:$0xff]
    %v136 = vld [vmem:[#allocation2 + $0x2b8] sm:$0xff]
    %v137 = vld [vmem:[#allocation2 + $0x2c0] sm:$0xff]
    %v138 = vld [vmem:[#allocation2 + $0x2c8] sm:$0xff]
    %v139 = vld [vmem:[#allocation2 + $0x2d0] sm:$0xff]
    %v140 = vld [vmem:[#allocation2 + $0x2d8] sm:$0xff]
    %v141 = vld [vmem:[#allocation2 + $0x2e0] sm:$0xff]
    %v142 = vld [vmem:[#allocation2 + $0x2e8] sm:$0xff]
    %v143 = vld [vmem:[#allocation2 + $0x2f0] sm:$0xff]
    %v144 = vld [vmem:[#allocation2 + $0x2f8] sm:$0xff]
    %v145 = vld [vmem:[#allocation2 + $0x300] sm:$0xff]
    %v146 = vld [vmem:[#allocation2 + $0x308] sm:$0xff]
    %v147 = vld [vmem:[#allocation2 + $0x310] sm:$0xff]
    %v148 = vld [vmem:[#allocation2 + $0x318] sm:$0xff]
    %v149 = vld [vmem:[#allocation2 + $0x320] sm:$0xff]
    %v150 = vld [vmem:[#allocation2 + $0x328] sm:$0xff]
    %v151 = vld [vmem:[#allocation2 + $0x330] sm:$0xff]
    %v152 = vld [vmem:[#allocation2 + $0x338] sm:$0xff]
    %v153 = vld [vmem:[#allocation2 + $0x340] sm:$0xff]
    %v154 = vld [vmem:[#allocation2 + $0x348] sm:$0xff]
    %v155 = vld [vmem:[#allocation2 + $0x350] sm:$0xff]
    %v156 = vld [vmem:[#allocation2 + $0x358] sm:$0xff]
    %v157 = vld [vmem:[#allocation2 + $0x360] sm:$0xff]
    %v158 = vld [vmem:[#allocation2 + $0x368] sm:$0xff]
    %v159 = vld [vmem:[#allocation2 + $0x370] sm:$0xff]
    %v160 = vld [vmem:[#allocation2 + $0x378] sm:$0xff]
    %v161 = vld [vmem:[#allocation2 + $0x380] sm:$0xff]
    %v162 = vld [vmem:[#allocation2 + $0x388] sm:$0xff]
    %v163 = vld [vmem:[#allocation2 + $0x390] sm:$0xff]
    %v164 = vld [vmem:[#allocation2 + $0x398] sm:$0xff]
    %v165 = vld [vmem:[#allocation2 + $0x3a0] sm:$0xff]
    %v166 = vld [vmem:[#allocation2 + $0x3a8] sm:$0xff]
    %v167 = vld [vmem:[#allocation2 + $0x3b0] sm:$0xff]
    %v168 = vld [vmem:[#allocation2 + $0x3b8] sm:$0xff]
    %v169 = vld [vmem:[#allocation2 + $0x3c0] sm:$0xff]
    %v170 = vld [vmem:[#allocation2 + $0x3c8] sm:$0xff]
    %v171 = vld [vmem:[#allocation2 + $0x3d0] sm:$0xff]
    %v172 = vld [vmem:[#allocation2 + $0x3d8] sm:$0xff]
    %v173 = vld [vmem:[#allocation2 + $0x3e0] sm:$0xff]
    %v174 = vld [vmem:[#allocation2 + $0x3e8] sm:$0xff]
    %v175 = vld [vmem:[#allocation2 + $0x3f0] sm:$0xff]
    %v176 = vld [vmem:[#allocation2 + $0x3f8] sm:$0xff]
    %v177 = vld [vmem:[#allocation2 + $0x400] sm:$0xff]
    %v178 = vld [vmem:[#allocation2 + $0x408] sm:$0xff]
    %v179 = vld [vmem:[#allocation2 + $0x410] sm:$0xff]
    %v180 = vld [vmem:[#allocation2 + $0x418] sm:$0xff]
    %v181 = vld [vmem:[#allocation2 + $0x420] sm:$0xff]
    %v182 = vld [vmem:[#allocation2 + $0x428] sm:$0xff]
    %v183 = vld [vmem:[#allocation2 + $0x430] sm:$0xff]
    %v184 = vld [vmem:[#allocation2 + $0x438] sm:$0xff]
    %v185 = vld [vmem:[#allocation2 + $0x440] sm:$0xff]
    %v186 = vld [vmem:[#allocation2 + $0x448] sm:$0xff]
    %v187 = vld [vmem:[#allocation2 + $0x450] sm:$0xff]
    %v188 = vld [vmem:[#allocation2 + $0x458] sm:$0xff]
    %v189 = vld [vmem:[#allocation2 + $0x460] sm:$0xff]
    %v190 = vld [vmem:[#allocation2 + $0x468] sm:$0xff]
    %v191 = vld [vmem:[#allocation2 + $0x470] sm:$0xff]
    %v192 = vld [vmem:[#allocation2 + $0x478] sm:$0xff]
    %v193 = vld [vmem:[#allocation2 + $0x480] sm:$0xff]
    %v194 = vld [vmem:[#allocation2 + $0x488] sm:$0xff]
    %v195 = vld [vmem:[#allocation2 + $0x490] sm:$0xff]
    %v196 = vld [vmem:[#allocation2 + $0x498] sm:$0xff]
    %v197 = vld [vmem:[#allocation2 + $0x4a0] sm:$0xff]
    %v198 = vld [vmem:[#allocation2 + $0x4a8] sm:$0xff]
    %v199 = vld [vmem:[#allocation2 + $0x4b0] sm:$0xff]
    %v200 = vld [vmem:[#allocation2 + $0x4b8] sm:$0xff]
    %v201 = vld [vmem:[#allocation2 + $0x4c0] sm:$0xff]
    %v202 = vld [vmem:[#allocation2 + $0x4c8] sm:$0xff]
    %v203 = vld [vmem:[#allocation2 + $0x4d0] sm:$0xff]
    %v204 = vld [vmem:[#allocation2 + $0x4d8] sm:$0xff]
    %v205 = vld [vmem:[#allocation2 + $0x4e0] sm:$0xff]
    %v206 = vld [vmem:[#allocation2 + $0x4e8] sm:$0xff]
    %v207 = vld [vmem:[#allocation2 + $0x4f0] sm:$0xff]
    %v208 = vld [vmem:[#allocation2 + $0x4f8] sm:$0xff]
    %v209 = vld [vmem:[#allocation2 + $0x500] sm:$0xff]
    %v210 = vld [vmem:[#allocation2 + $0x508] sm:$0xff]
    %v211 = vld [vmem:[#allocation2 + $0x510] sm:$0xff]
    %v212 = vld [vmem:[#allocation2 + $0x518] sm:$0xff]
    %v213 = vld [vmem:[#allocation2 + $0x520] sm:$0xff]
    %v214 = vld [vmem:[#allocation2 + $0x528] sm:$0xff]
    %v215 = vld [vmem:[#allocation2 + $0x530] sm:$0xff]
    %v216 = vld [vmem:[#allocation2 + $0x538] sm:$0xff]
    %v217 = vld [vmem:[#allocation2 + $0x540] sm:$0xff]
    %v218 = vld [vmem:[#allocation2 + $0x548] sm:$0xff]
    %v219 = vld [vmem:[#allocation2 + $0x550] sm:$0xff]
    %v220 = vld [vmem:[#allocation2 + $0x558] sm:$0xff]
    %v221 = vld [vmem:[#allocation2 + $0x560] sm:$0xff]
    %v222 = vld [vmem:[#allocation2 + $0x568] sm:$0xff]
    %v223 = vld [vmem:[#allocation2 + $0x570] sm:$0xff]
    %v224 = vld [vmem:[#allocation2 + $0x578] sm:$0xff]
    %v225 = vld [vmem:[#allocation2 + $0x580] sm:$0xff]
    %v226 = vld [vmem:[#allocation2 + $0x588] sm:$0xff]
    %v227 = vld [vmem:[#allocation2 + $0x590] sm:$0xff]
    %v228 = vld [vmem:[#allocation2 + $0x598] sm:$0xff]
    %v229 = vld [vmem:[#allocation2 + $0x5a0] sm:$0xff]
    %v230 = vld [vmem:[#allocation2 + $0x5a8] sm:$0xff]
    %v231 = vld [vmem:[#allocation2 + $0x5b0] sm:$0xff]
    %v232 = vld [vmem:[#allocation2 + $0x5b8] sm:$0xff]
    %v233 = vld [vmem:[#allocation2 + $0x5c0] sm:$0xff]
    %v234 = vld [vmem:[#allocation2 + $0x5c8] sm:$0xff]
    %v235 = vld [vmem:[#allocation2 + $0x5d0] sm:$0xff]
    %v236 = vld [vmem:[#allocation2 + $0x5d8] sm:$0xff]
    %v237 = vld [vmem:[#allocation2 + $0x5e0] sm:$0xff]
    %v238 = vld [vmem:[#allocation2 + $0x5e8] sm:$0xff]
    %v239 = vld [vmem:[#allocation2 + $0x5f0] sm:$0xff]
    %v240 = vld [vmem:[#allocation2 + $0x5f8] sm:$0xff]
    %v241 = vld [vmem:[#allocation2 + $0x600] sm:$0xff]
    %v242 = vld [vmem:[#allocation2 + $0x608] sm:$0xff]
    %v243 = vld [vmem:[#allocation2 + $0x610] sm:$0xff]
    %v244 = vld [vmem:[#allocation2 + $0x618] sm:$0xff]
    %v245 = vld [vmem:[#allocation5] sm:$0x1]
    %v247 = vperm.slane %v245, 0
    %253 = vst [vmem:[#allocation1] ss:$4 sm:$0xff] %v45
    %s254 = scalar_lea.vmem [#allocation1], 32
    %255 = vst [vmem:[%s254] ss:$4 sm:$0xff] %v46
    %v256 = vld.sshfl [vmem:[#allocation1] sm:$0xff pattern:$0x73625140]
    %v257 = vld.sshfl [vmem:[#allocation1 + $0x8] sm:$0xff pattern:$0x73625140]
    %v258 = vld.sshfl [vmem:[#allocation1 + $0x10] sm:$0xff pattern:$0x73625140]
    %v259 = vld.sshfl [vmem:[#allocation1 + $0x18] sm:$0xff pattern:$0x73625140]
    %v260 = vld.sshfl [vmem:[#allocation1 + $0x20] sm:$0xff pattern:$0x73625140]
    %v261 = vld.sshfl [vmem:[#allocation1 + $0x28] sm:$0xff pattern:$0x73625140]
    %v262 = vld.sshfl [vmem:[#allocation1 + $0x30] sm:$0xff pattern:$0x73625140]
    %v263 = vld.sshfl [vmem:[#allocation1 + $0x38] sm:$0xff pattern:$0x73625140]
    %264 = vst [vmem:[#allocation1] ss:$4 sm:$0xff] %v47
    %265 = vst [vmem:[%s254] ss:$4 sm:$0xff] %v48
    %v266 = vld.sshfl [vmem:[#allocation1] sm:$0xff pattern:$0x73625140]
    %v267 = vld.sshfl [vmem:[#allocation1 + $0x8] sm:$0xff pattern:$0x73625140]
    %v268 = vld.sshfl [vmem:[#allocation1 + $0x10] sm:$0xff pattern:$0x73625140]
    %v269 = vld.sshfl [vmem:[#allocation1 + $0x18] sm:$0xff pattern:$0x73625140]
    %v270 = vld.sshfl [vmem:[#allocation1 + $0x20] sm:$0xff pattern:$0x73625140]
    %vm283 = vcmask 261120
    %v284 = vsel %vm283, %v270, 0
    %286 = vmatpush.msra.mxu0 %v64
    %287 = vmatpush.msra.mxu0 %v63
    %288 = vmatpush.msra.mxu0 %v62
    %289 = vmatpush.msra.mxu0 %v61
    %290 = vmatpush.msra.mxu0 %v60
    %291 = vmatpush.msra.mxu0 %v59
    %292 = vmatpush.msra.mxu0 %v58
    %293 = vmatpush.msra.mxu0 %v57
    %294 = vmatpush.msra.mxu0 %v56
    %295 = vmatpush.msra.mxu0 %v55
    %296 = vmatpush.msra.mxu0 %v54
    %297 = vmatpush.msra.mxu0 %v53
    %298 = vmatpush.msra.mxu0 %v52
    %299 = vmatpush.msra.mxu0 %v51
    %300 = vmatpush.msra.mxu0 %v50
    %301 = vmatpush.msra.mxu0 %v49
    %302 = vmatmul.f32.gmra.mxu0 %v256
    %v303 = vpop.f32.mrf.mxu0
    %v304 = vadd.f32 %v247, %v303
    %305 = vdwg.mxu0
    %306 = vmatpush.msra.mxu0 %v80
    %307 = vmatpush.msra.mxu0 %v79
    %308 = vmatpush.msra.mxu0 %v78
    %309 = vmatpush.msra.mxu0 %v77
    %310 = vmatpush.msra.mxu0 %v76
    %311 = vmatpush.msra.mxu0 %v75
    %312 = vmatpush.msra.mxu0 %v74
    %313 = vmatpush.msra.mxu0 %v73
    %314 = vmatpush.msra.mxu0 %v72
    %315 = vmatpush.msra.mxu0 %v71
    %316 = vmatpush.msra.mxu0 %v70
    %317 = vmatpush.msra.mxu0 %v69
    %318 = vmatpush.msra.mxu0 %v68
    %319 = vmatpush.msra.mxu0 %v67
    %320 = vmatpush.msra.mxu0 %v66
    %321 = vmatpush.msra.mxu0 %v65
    %322 = vmatmul.f32.gmra.mxu0 %v257
    %v323 = vpop.f32.mrf.mxu0
    %v324 = vadd.f32 %v304, %v323
    %325 = vdwg.mxu0
    %326 = vmatpush.msra.mxu0 %v96
    %327 = vmatpush.msra.mxu0 %v95
    %328 = vmatpush.msra.mxu0 %v94
    %329 = vmatpush.msra.mxu0 %v93
    %330 = vmatpush.msra.mxu0 %v92
    %331 = vmatpush.msra.mxu0 %v91
    %332 = vmatpush.msra.mxu0 %v90
    %333 = vmatpush.msra.mxu0 %v89
    %334 = vmatpush.msra.mxu0 %v88
    %335 = vmatpush.msra.mxu0 %v87
    %336 = vmatpush.msra.mxu0 %v86
    %337 = vmatpush.msra.mxu0 %v85
    %338 = vmatpush.msra.mxu0 %v84
    %339 = vmatpush.msra.mxu0 %v83
    %340 = vmatpush.msra.mxu0 %v82
    %341 = vmatpush.msra.mxu0 %v81
    %342 = vmatmul.f32.gmra.mxu0 %v258
    %v343 = vpop.f32.mrf.mxu0
    %v344 = vadd.f32 %v324, %v343
    %345 = vdwg.mxu0
    %346 = vmatpush.msra.mxu0 %v112
    %347 = vmatpush.msra.mxu0 %v111
    %348 = vmatpush.msra.mxu0 %v110
    %349 = vmatpush.msra.mxu0 %v109
    %350 = vmatpush.msra.mxu0 %v108
    %351 = vmatpush.msra.mxu0 %v107
    %352 = vmatpush.msra.mxu0 %v106
    %353 = vmatpush.msra.mxu0 %v105
    %354 = vmatpush.msra.mxu0 %v104
    %355 = vmatpush.msra.mxu0 %v103
    %356 = vmatpush.msra.mxu0 %v102
    %357 = vmatpush.msra.mxu0 %v101
    %358 = vmatpush.msra.mxu0 %v100
    %359 = vmatpush.msra.mxu0 %v99
    %360 = vmatpush.msra.mxu0 %v98
    %361 = vmatpush.msra.mxu0 %v97
    %362 = vmatmul.f32.gmra.mxu0 %v259
    %v363 = vpop.f32.mrf.mxu0
    %v364 = vadd.f32 %v344, %v363
    %365 = vdwg.mxu0
    %366 = vmatpush.msra.mxu0 %v128
    %367 = vmatpush.msra.mxu0 %v127
    %368 = vmatpush.msra.mxu0 %v126
    %369 = vmatpush.msra.mxu0 %v125
    %370 = vmatpush.msra.mxu0 %v124
    %371 = vmatpush.msra.mxu0 %v123
    %372 = vmatpush.msra.mxu0 %v122
    %373 = vmatpush.msra.mxu0 %v121
    %374 = vmatpush.msra.mxu0 %v120
    %375 = vmatpush.msra.mxu0 %v119
    %376 = vmatpush.msra.mxu0 %v118
    %377 = vmatpush.msra.mxu0 %v117
    %378 = vmatpush.msra.mxu0 %v116
    %379 = vmatpush.msra.mxu0 %v115
    %380 = vmatpush.msra.mxu0 %v114
    %381 = vmatpush.msra.mxu0 %v113
    %382 = vmatmul.f32.gmra.mxu0 %v260
    %v383 = vpop.f32.mrf.mxu0
    %v384 = vadd.f32 %v364, %v383
    %385 = vdwg.mxu0
    %386 = vmatpush.msra.mxu0 %v144
    %387 = vmatpush.msra.mxu0 %v143
    %388 = vmatpush.msra.mxu0 %v142
    %389 = vmatpush.msra.mxu0 %v141
    %390 = vmatpush.msra.mxu0 %v140
    %391 = vmatpush.msra.mxu0 %v139
    %392 = vmatpush.msra.mxu0 %v138
    %393 = vmatpush.msra.mxu0 %v137
    %394 = vmatpush.msra.mxu0 %v136
    %395 = vmatpush.msra.mxu0 %v135
    %396 = vmatpush.msra.mxu0 %v134
    %397 = vmatpush.msra.mxu0 %v133
    %398 = vmatpush.msra.mxu0 %v132
    %399 = vmatpush.msra.mxu0 %v131
    %400 = vmatpush.msra.mxu0 %v130
    %401 = vmatpush.msra.mxu0 %v129
    %402 = vmatmul.f32.gmra.mxu0 %v261
    %v403 = vpop.f32.mrf.mxu0
    %v404 = vadd.f32 %v384, %v403
    %405 = vdwg.mxu0
    %406 = vmatpush.msra.mxu0 %v160
    %407 = vmatpush.msra.mxu0 %v159
    %408 = vmatpush.msra.mxu0 %v158
    %409 = vmatpush.msra.mxu0 %v157
    %410 = vmatpush.msra.mxu0 %v156
    %411 = vmatpush.msra.mxu0 %v155
    %412 = vmatpush.msra.mxu0 %v154
    %413 = vmatpush.msra.mxu0 %v153
    %414 = vmatpush.msra.mxu0 %v152
    %415 = vmatpush.msra.mxu0 %v151
    %416 = vmatpush.msra.mxu0 %v150
    %417 = vmatpush.msra.mxu0 %v149
    %418 = vmatpush.msra.mxu0 %v148
    %419 = vmatpush.msra.mxu0 %v147
    %420 = vmatpush.msra.mxu0 %v146
    %421 = vmatpush.msra.mxu0 %v145
    %422 = vmatmul.f32.gmra.mxu0 %v262
    %v423 = vpop.f32.mrf.mxu0
    %v424 = vadd.f32 %v404, %v423
    %425 = vdwg.mxu0
    %426 = vmatpush.msra.mxu0 %v176
    %427 = vmatpush.msra.mxu0 %v175
    %428 = vmatpush.msra.mxu0 %v174
    %429 = vmatpush.msra.mxu0 %v173
    %430 = vmatpush.msra.mxu0 %v172
    %431 = vmatpush.msra.mxu0 %v171
    %432 = vmatpush.msra.mxu0 %v170
    %433 = vmatpush.msra.mxu0 %v169
    %434 = vmatpush.msra.mxu0 %v168
    %435 = vmatpush.msra.mxu0 %v167
    %436 = vmatpush.msra.mxu0 %v166
    %437 = vmatpush.msra.mxu0 %v165
    %438 = vmatpush.msra.mxu0 %v164
    %439 = vmatpush.msra.mxu0 %v163
    %440 = vmatpush.msra.mxu0 %v162
    %441 = vmatpush.msra.mxu0 %v161
    %442 = vmatmul.f32.gmra.mxu0 %v263
    %v443 = vpop.f32.mrf.mxu0
    %v444 = vadd.f32 %v424, %v443
    %445 = vdwg.mxu0
    %446 = vmatpush.msra.mxu0 %v192
    %447 = vmatpush.msra.mxu0 %v191
    %448 = vmatpush.msra.mxu0 %v190
    %449 = vmatpush.msra.mxu0 %v189
    %450 = vmatpush.msra.mxu0 %v188
    %451 = vmatpush.msra.mxu0 %v187
    %452 = vmatpush.msra.mxu0 %v186
    %453 = vmatpush.msra.mxu0 %v185
    %454 = vmatpush.msra.mxu0 %v184
    %455 = vmatpush.msra.mxu0 %v183
    %456 = vmatpush.msra.mxu0 %v182
    %457 = vmatpush.msra.mxu0 %v181
    %458 = vmatpush.msra.mxu0 %v180
    %459 = vmatpush.msra.mxu0 %v179
    %460 = vmatpush.msra.mxu0 %v178
    %461 = vmatpush.msra.mxu0 %v177
    %462 = vmatmul.f32.gmra.mxu0 %v266
    %v463 = vpop.f32.mrf.mxu0
    %v464 = vadd.f32 %v444, %v463
    %465 = vdwg.mxu0
    %466 = vmatpush.msra.mxu0 %v208
    %467 = vmatpush.msra.mxu0 %v207
    %468 = vmatpush.msra.mxu0 %v206
    %469 = vmatpush.msra.mxu0 %v205
    %470 = vmatpush.msra.mxu0 %v204
    %471 = vmatpush.msra.mxu0 %v203
    %472 = vmatpush.msra.mxu0 %v202
    %473 = vmatpush.msra.mxu0 %v201
    %474 = vmatpush.msra.mxu0 %v200
    %475 = vmatpush.msra.mxu0 %v199
    %476 = vmatpush.msra.mxu0 %v198
    %477 = vmatpush.msra.mxu0 %v197
    %478 = vmatpush.msra.mxu0 %v196
    %479 = vmatpush.msra.mxu0 %v195
    %480 = vmatpush.msra.mxu0 %v194
    %481 = vmatpush.msra.mxu0 %v193
    %482 = vmatmul.f32.gmra.mxu0 %v267
    %v483 = vpop.f32.mrf.mxu0
    %v484 = vadd.f32 %v464, %v483
    %485 = vdwg.mxu0
    %486 = vmatpush.msra.mxu0 %v224
    %487 = vmatpush.msra.mxu0 %v223
    %488 = vmatpush.msra.mxu0 %v222
    %489 = vmatpush.msra.mxu0 %v221
    %490 = vmatpush.msra.mxu0 %v220
    %491 = vmatpush.msra.mxu0 %v219
    %492 = vmatpush.msra.mxu0 %v218
    %493 = vmatpush.msra.mxu0 %v217
    %494 = vmatpush.msra.mxu0 %v216
    %495 = vmatpush.msra.mxu0 %v215
    %496 = vmatpush.msra.mxu0 %v214
    %497 = vmatpush.msra.mxu0 %v213
    %498 = vmatpush.msra.mxu0 %v212
    %499 = vmatpush.msra.mxu0 %v211
    %500 = vmatpush.msra.mxu0 %v210
    %501 = vmatpush.msra.mxu0 %v209
    %502 = vmatmul.f32.gmra.mxu0 %v268
    %v503 = vpop.f32.mrf.mxu0
    %v504 = vadd.f32 %v484, %v503
    %505 = vdwg.mxu0
    %506 = vmatpush.msra.mxu0 %v240
    %507 = vmatpush.msra.mxu0 %v239
    %508 = vmatpush.msra.mxu0 %v238
    %509 = vmatpush.msra.mxu0 %v237
    %510 = vmatpush.msra.mxu0 %v236
    %511 = vmatpush.msra.mxu0 %v235
    %512 = vmatpush.msra.mxu0 %v234
    %513 = vmatpush.msra.mxu0 %v233
    %514 = vmatpush.msra.mxu0 %v232
    %515 = vmatpush.msra.mxu0 %v231
    %516 = vmatpush.msra.mxu0 %v230
    %517 = vmatpush.msra.mxu0 %v229
    %518 = vmatpush.msra.mxu0 %v228
    %519 = vmatpush.msra.mxu0 %v227
    %520 = vmatpush.msra.mxu0 %v226
    %521 = vmatpush.msra.mxu0 %v225
    %522 = vmatmul.f32.gmra.mxu0 %v269
    %v523 = vpop.f32.mrf.mxu0
    %v524 = vadd.f32 %v504, %v523
    %525 = vdwg.mxu0
    %526 = vmatpush.msra.mxu0 0.0
    %527 = vmatpush.msra.mxu0 0.0
    %528 = vmatpush.msra.mxu0 0.0
    %529 = vmatpush.msra.mxu0 0.0
    %530 = vmatpush.msra.mxu0 0.0
    %531 = vmatpush.msra.mxu0 0.0
    %532 = vmatpush.msra.mxu0 0.0
    %533 = vmatpush.msra.mxu0 0.0
    %534 = vmatpush.msra.mxu0 0.0
    %535 = vmatpush.msra.mxu0 0.0
    %536 = vmatpush.msra.mxu0 0.0
    %537 = vmatpush.msra.mxu0 0.0
    %538 = vmatpush.msra.mxu0 %v244
    %539 = vmatpush.msra.mxu0 %v243
    %540 = vmatpush.msra.mxu0 %v242
    %541 = vmatpush.msra.mxu0 %v241
    %542 = vmatmul.f32.gmra.mxu0 %v284
    %v543 = vpop.f32.mrf.mxu0
    %v544 = vadd.f32 %v524, %v543
    %545 = vdwg.mxu0
    %546 = vst [vmem:[#allocation7] sm:$0x3] %v544
    // Predicated region
    $region22: #{cnn_forward.5} parent=1 // pred_check
      _
    $region23: #{cnn_forward.5} parent=1 // pred_check_branch
      %548 = sbr.rel (0) target = $region25
    $region24: #{cnn_forward.5} parent=1 // pred_region
      %550 = vsyncadd [#allocation4], 0
      %s552 = sshll.u32 [#allocation7], 4
      %s553 = int_to_ptr.vmem [resolvable:$true] %s552
      %s554 = sshll.u32 %s3, 4
      %s555 = int_to_ptr.hbm [resolvable:$true] %s554
      %557 = dma.vmem_to_hbm [thread:$0]  %s553, 32, %s555, [#allocation4]
    $region25: #{cnn_forward.5} parent=1 // pred_fallthru
      _
    // Predicated region
    $region26: #{cnn_forward.5} parent=1 // pred_check
      _
    $region27: #{cnn_forward.5} parent=1 // pred_check_branch
      %559 = sbr.rel (0) target = $region29
    $region28: #{cnn_forward.5} parent=1 // pred_region
      %561 = dma.done [#allocation4], 32
    $region29: #{cnn_forward.5} parent=1 // pred_fallthru
      _
    %562 = vsyncpa [#allocation3], 1
    %563 = vsyncpa [#allocation6], 1
    %564 = vsyncpa [#allocation4], 1

// kernel: cnn_forward.3
$region0: #{cnn_forward.3}
  #allocation0 [shape = 'u32[]', space=smem, size = 0x4, offset = 0x4, fixed_abs, tag = 'smem constant byte address 0x4 - core index']
  #allocation1 [shape = 'u32[72,128]{1,0:T(1,128)}', space=vmem, size = 0x9000, scoped, tag = 'internal scratch']
  %s0 = inlined_call_operand.vmem [shape: f32[2,2,16,32], index: 0, kind: input, shape index: {}]
  %s1 = inlined_call_operand.hbm [shape: f32[5,32,512], index: 1, kind: input, shape index: {}]
  %s2 = inlined_call_operand.hbm [shape: f32[1,512], index: 2, kind: input, shape index: {}]
  %s3 = inlined_call_operand.vmem [shape: f32[2,14,224], index: 3, kind: output, shape index: {}]
  %s4 = sld [smem:[#allocation0]]
  $region53: #{cnn_forward.3} parent=0
    _
  %s6 = ssub.s32 1, %s4
  %s7 = scalar_select 0, %s6, %s4
  $region1: #{cnn_forward.3} parent=0
    #allocation2 [shape = 'u8[327680]{0}', space=vmem, size = 0x50000, scoped, tag = 'input window, operand 1, single buffered']
    #allocation3 [shape = 's32[2]{0}', space=sflag, size = 0x8, scoped, tag = 'scoped memory for cnn_forward.3']
    #allocation4 [shape = 'u8[2048]{0}', space=vmem, size = 0x800, scoped, tag = 'input window, operand 2, single buffered']
    #allocation5 [shape = 's32[1]{0}', space=sflag, size = 0x4, scoped, tag = 'scoped memory for cnn_forward.3']
    %8 = vsyncpa [#allocation3], 0
    %9 = vsyncpa [#allocation5], 0
    loop: start=0, step=1, limit=4
    $region2: #{cnn_forward.3} parent=1 // loop_pre_header
      _
    $region3: #{cnn_forward.3} parent=1 // loop_header
      %s11 = sphi 0, %s15
      %p12 = scmp.ge.s32.totalorder %s11, 4
      %s21 = sphi 0, %s23
      %s24 = sphi 0, %s21
      %s25 = sphi 0, %s24
      %s41 = sphi 0, %s25
      %s45 = sphi 0, %s45
      %s47 = sphi 0, %s45
      %s48 = sphi 0, %s47
      %s62 = sphi 0, %s48
      %s66 = sphi 0, %s66
      %s68 = sphi 0, %s66
      %s69 = sphi 0, %s68
      %s83 = sphi 0, %s69
      %s89 = sphi 0, %s91
      %s92 = sphi 0, %s89
      %s93 = sphi 0, %s92
      %s109 = sphi 0, %s93
    $region4: #{cnn_forward.3} parent=1 // loop_header_branch
      %14 = sbr.rel (%p12) target = $region8
    $region5: #{cnn_forward.3} parent=1 // loop_body
      %s16 = ssub.s32 %s11, 1
      %s17 = ssub.s32 %s11, 2
      %s18 = sadd.s32 %s11, 1
      %s19 = ssub.s32 %s11, %s18
      %p20 = scmp.eq.s32.totalorder %s19, 0
      %s22 = sadd.s32 %s21, 1
      %s23 = scalar_select %p20, %s21, %s22
      %p26 = pneg %p20
      %p27 = scmp.eq.s32.totalorder %s11, 1
      %p28 = por %p26, %p27
      %p29 = scmp.ne.s32.totalorder %s21, %s24
      %p30 = scmp.eq.s32.totalorder %s11, 0
      %p31 = por %p29, %p30
      %p32 = scmp.ne.s32.totalorder %s21, %s24
      %p33 = scmp.eq.s32.totalorder %s16, 1
      %p34 = por %p32, %p33
      %p35 = scmp.ne.s32.totalorder %s24, %s25
      %p36 = scmp.eq.s32.totalorder %s16, 0
      %p37 = por %p35, %p36
      %p38 = scmp.ne.s32.totalorder %s24, %s25
      %p39 = scmp.eq.s32.totalorder %s17, 1
      %p40 = por %p38, %p39
      %p42 = scmp.ne.s32.totalorder %s25, %s41
      %p43 = scmp.eq.s32.totalorder %s17, 0
      %p44 = por %p42, %p43
      %s46 = sadd.s32 %s45, 1
      %p49 = scmp.eq.s32.totalorder %s11, 1
      %p50 = scmp.ne.s32.totalorder %s45, %s47
      %p51 = scmp.eq.s32.totalorder %s11, 0
      %p52 = por %p50, %p51
      %p53 = scmp.ne.s32.totalorder %s45, %s47
      %p54 = scmp.eq.s32.totalorder %s16, 1
      %p55 = por %p53, %p54
      %p56 = scmp.ne.s32.totalorder %s47, %s48
      %p57 = scmp.eq.s32.totalorder %s16, 0
      %p58 = por %p56, %p57
      %p59 = scmp.ne.s32.totalorder %s47, %s48
      %p60 = scmp.eq.s32.totalorder %s17, 1
      %p61 = por %p59, %p60
      %p63 = scmp.ne.s32.totalorder %s48, %s62
      %p64 = scmp.eq.s32.totalorder %s17, 0
      %p65 = por %p63, %p64
      %s67 = sadd.s32 %s66, 1
      %p70 = scmp.eq.s32.totalorder %s11, 1
      %p71 = scmp.ne.s32.totalorder %s66, %s68
      %p72 = scmp.eq.s32.totalorder %s11, 0
      %p73 = por %p71, %p72
      %p74 = scmp.ne.s32.totalorder %s66, %s68
      %p75 = scmp.eq.s32.totalorder %s16, 1
      %p76 = por %p74, %p75
      %p77 = scmp.ne.s32.totalorder %s68, %s69
      %p78 = scmp.eq.s32.totalorder %s16, 0
      %p79 = por %p77, %p78
      %p80 = scmp.ne.s32.totalorder %s68, %s69
      %p81 = scmp.eq.s32.totalorder %s17, 1
      %p82 = por %p80, %p81
      %p84 = scmp.ne.s32.totalorder %s69, %s83
      %p85 = scmp.eq.s32.totalorder %s17, 0
      %p86 = por %p84, %p85
      %s87 = ssub.s32 %s11, %s18
      %p88 = scmp.eq.s32.totalorder %s87, 0
      %s90 = sadd.s32 %s89, 1
      %s91 = scalar_select %p88, %s89, %s90
      %p94 = pneg %p88
      %p95 = scmp.eq.s32.totalorder %s11, 1
      %p96 = por %p94, %p95
      %p97 = scmp.ne.s32.totalorder %s89, %s92
      %p98 = scmp.eq.s32.totalorder %s11, 0
      %p99 = por %p97, %p98
      %p100 = scmp.ne.s32.totalorder %s89, %s92
      %p101 = scmp.eq.s32.totalorder %s16, 1
      %p102 = por %p100, %p101
      %p103 = scmp.ne.s32.totalorder %s92, %s93
      %p104 = scmp.eq.s32.totalorder %s16, 0
      %p105 = por %p103, %p104
      %p106 = scmp.ne.s32.totalorder %s92, %s93
      %p107 = scmp.eq.s32.totalorder %s17, 1
      %p108 = por %p106, %p107
      %p110 = scmp.ne.s32.totalorder %s93, %s109
      %p111 = scmp.eq.s32.totalorder %s17, 0
      %p112 = por %p110, %p111
      %p113 = scmp.le.s32.totalorder 1, %s11
      %p114 = scmp.lt.s32.totalorder %s11, 3
      %p115 = pnand %p113, %p114
      %p116 = pneg %p115
      // Predicated region
      $region9: #{cnn_forward.3} parent=5 // pred_check
        _
      $region10: #{cnn_forward.3} parent=5 // pred_check_branch
        %118 = sbr.rel (%p115) target = $region12
      $region11: #{cnn_forward.3} parent=5 // pred_region
        %s119 = ssub.s32 %s11, 1
        // Predicated region
        $region13: #{cnn_forward.3} parent=11 // pred_check
          %p120 = pneg %p58
        $region14: #{cnn_forward.3} parent=11 // pred_check_branch
          %122 = sbr.rel (%p120) target = $region16
        $region15: #{cnn_forward.3} parent=11 // pred_region
          %124 = vsyncadd [#allocation3], 0
          %s125 = sshll.u32 %s1, 4
          %s126 = int_to_ptr.hbm [resolvable:$true] %s125
          %s127 = sshll.u32 [#allocation2], 4
          %s128 = int_to_ptr.vmem [resolvable:$true] %s127
          %133 = dma.hbm_to_vmem [thread:$0]  %s126, 10240, %s128, [#allocation3], 512, 512, 32
        $region16: #{cnn_forward.3} parent=11 // pred_fallthru
          _
        // Predicated region
        $region17: #{cnn_forward.3} parent=11 // pred_check
          %p134 = pneg %p79
        $region18: #{cnn_forward.3} parent=11 // pred_check_branch
          %136 = sbr.rel (%p134) target = $region20
        $region19: #{cnn_forward.3} parent=11 // pred_region
          %138 = vsyncadd [#allocation5], 0
          %s140 = sshll.u32 %s2, 4
          %s141 = int_to_ptr.hbm [resolvable:$true] %s140
          %s142 = sshll.u32 [#allocation4], 4
          %s143 = int_to_ptr.vmem [resolvable:$true] %s142
          %145 = dma.hbm_to_vmem [thread:$0]  %s141, 64, %s143, [#allocation5]
        $region20: #{cnn_forward.3} parent=11 // pred_fallthru
          _
      $region12: #{cnn_forward.3} parent=5 // pred_fallthru
        _
      %p146 = scmp.lt.s32.totalorder %s11, 2
      // Predicated region
      $region21: #{cnn_forward.3} parent=5 // pred_check
        %p147 = pneg %p146
      $region22: #{cnn_forward.3} parent=5 // pred_check_branch
        %149 = sbr.rel (%p147) target = $region24
      $region23: #{cnn_forward.3} parent=5 // pred_region
        // Predicated region
        $region25: #{cnn_forward.3} parent=23 // pred_check
          %p150 = pneg %p31
        $region26: #{cnn_forward.3} parent=23 // pred_check_branch
          %152 = sbr.rel (%p150) target = $region28
        $region27: #{cnn_forward.3} parent=23 // pred_region
          %p153 = scmp.lt.s32.totalorder %s11, 1
          %s154 = scalar_select %p153, %s11, 1
          %s155 = smul.addr %s154, 4
          %s156 = smul.addr %s155, 8
          %s157 = scalar_lea.vmem %s0, %s156
        $region28: #{cnn_forward.3} parent=23 // pred_fallthru
          _
      $region24: #{cnn_forward.3} parent=5 // pred_fallthru
        _
      %p158 = scmp.le.s32.totalorder 1, %s11
      %p159 = scmp.lt.s32.totalorder %s11, 3
      %p160 = pnand %p158, %p159
      %p161 = pneg %p160
      // Predicated region
      $region29: #{cnn_forward.3} parent=5 // pred_check
        _
      $region30: #{cnn_forward.3} parent=5 // pred_check_branch
        %163 = sbr.rel (%p160) target = $region32
      $region31: #{cnn_forward.3} parent=5 // pred_region
        %s164 = ssub.s32 %s11, 1
        // Predicated region
        $region33: #{cnn_forward.3} parent=31 // pred_check
          %p165 = pneg %p58
        $region34: #{cnn_forward.3} parent=31 // pred_check_branch
          %167 = sbr.rel (%p165) target = $region36
        $region35: #{cnn_forward.3} parent=31 // pred_region
          %169 = dma.done [#allocation3], 10240
        $region36: #{cnn_forward.3} parent=31 // pred_fallthru
          _
        // Predicated region
        $region37: #{cnn_forward.3} parent=31 // pred_check
          %p170 = pneg %p79
        $region38: #{cnn_forward.3} parent=31 // pred_check_branch
          %172 = sbr.rel (%p170) target = $region40
        $region39: #{cnn_forward.3} parent=31 // pred_region
          %174 = dma.done [#allocation5], 64
        $region40: #{cnn_forward.3} parent=31 // pred_fallthru
          _
        %p175 = scmp.lt.s32.totalorder %s16, 1
        %s176 = scalar_select %p175, %s16, 1
        %s177 = smul.addr %s176, 4
        %s178 = smul.addr %s177, 8
        %s179 = scalar_lea.vmem %s0, %s178
        %p180 = pneg %p37
        %p181 = pneg %p34
        %p182 = pneg %p58
        %p183 = pneg %p55
        %p184 = pneg %p79
        %p185 = pneg %p76
        %p186 = pneg %p105
        %p187 = pneg %p102
        %p188 = scmp.lt.s32.totalorder %s16, 1
        %s189 = scalar_select %p188, %s16, 1
        %s190 = smul.addr %s189, 4
        %s191 = smul.addr %s190, 8
        %s192 = scalar_lea.vmem %s3, %s191
        %p193 = scmp.lt.s32.totalorder %s16, 1
        %s194 = scalar_select %p193, %s16, 1
        %s195 = smul.addr %s194, 4
        %s196 = smul.addr %s195, 8
        %s197 = scalar_lea.vmem %s0, %s196
        %p198 = scmp.lt.s32.totalorder %s16, 1
        %s199 = scalar_select %p198, %s16, 1
        %s200 = smul.addr %s199, 4
        %s201 = smul.addr %s200, 8
        %s202 = scalar_lea.vmem %s3, %s201
        %v203 = vld [vmem:[#allocation2] sm:$0xff]
        %v204 = vld [vmem:[#allocation2 + $0x8] sm:$0xff]
        %v205 = vld [vmem:[#allocation2 + $0x10] sm:$0xff]
        %v206 = vld [vmem:[#allocation2 + $0x18] sm:$0xff]
        %v207 = vld [vmem:[#allocation2 + $0x20] sm:$0xff]
        %v208 = vld [vmem:[#allocation2 + $0x28] sm:$0xff]
        %v209 = vld [vmem:[#allocation2 + $0x30] sm:$0xff]
        %v210 = vld [vmem:[#allocation2 + $0x38] sm:$0xff]
        %v211 = vld [vmem:[#allocation2 + $0x40] sm:$0xff]
        %v212 = vld [vmem:[#allocation2 + $0x48] sm:$0xff]
        %v213 = vld [vmem:[#allocation2 + $0x50] sm:$0xff]
        %v214 = vld [vmem:[#allocation2 + $0x58] sm:$0xff]
        %v215 = vld [vmem:[#allocation2 + $0x60] sm:$0xff]
        %v216 = vld [vmem:[#allocation2 + $0x68] sm:$0xff]
        %v217 = vld [vmem:[#allocation2 + $0x70] sm:$0xff]
        %v218 = vld [vmem:[#allocation2 + $0x78] sm:$0xff]
        %v219 = vld [vmem:[%s197] sm:$0xff]
        %v220 = vld [vmem:[%s197 + $0x8] sm:$0x3f]
        %s221 = scalar_lea.vmem %s197, 16
        %v222 = vld [vmem:[%s221] sm:$0xff]
        %v223 = vld [vmem:[%s221 + $0x8] sm:$0x3f]
        %s224 = scalar_lea.vmem [#allocation2], 128
        %v225 = vld [vmem:[%s224] sm:$0xff]
        %v226 = vld [vmem:[%s224 + $0x8] sm:$0xff]
        %v227 = vld [vmem:[%s224 + $0x10] sm:$0xff]
        %v228 = vld [vmem:[%s224 + $0x18] sm:$0xff]
        %v229 = vld [vmem:[%s224 + $0x20] sm:$0xff]
        %v230 = vld [vmem:[%s224 + $0x28] sm:$0xff]
        %v231 = vld [vmem:[%s224 + $0x30] sm:$0xff]
        %v232 = vld [vmem:[%s224 + $0x38] sm:$0xff]
        %v233 = vld [vmem:[%s224 + $0x40] sm:$0xff]
        %v234 = vld [vmem:[%s224 + $0x48] sm:$0xff]
        %v235 = vld [vmem:[%s224 + $0x50] sm:$0xff]
        %v236 = vld [vmem:[%s224 + $0x58] sm:$0xff]
        %v237 = vld [vmem:[%s224 + $0x60] sm:$0xff]
        %v238 = vld [vmem:[%s224 + $0x68] sm:$0xff]
        %v239 = vld [vmem:[%s224 + $0x70] sm:$0xff]
        %v240 = vld [vmem:[%s224 + $0x78] sm:$0xff]
        %vm241 = vcmask 261120
        %v243 = vsel %vm241, %v222, 0
        %v246 = vsel %vm241, %v223, 0
        %248 = vmatpush.msra.mxu0 0.0
        %249 = vmatpush.msra.mxu0 0.0
        %250 = vmatpush.msra.mxu0 0.0
        %251 = vmatpush.msra.mxu0 0.0
        %252 = vmatpush.msra.mxu0 0.0
        %253 = vmatpush.msra.mxu0 0.0
        %254 = vmatpush.msra.mxu0 0.0
        %255 = vmatpush.msra.mxu0 0.0
        %256 = vmatpush.msra.mxu0 0.0
        %257 = vmatpush.msra.mxu0 0.0
        %258 = vmatpush.msra.mxu0 0.0
        %259 = vmatpush.msra.mxu0 0.0
        %260 = vmatpush.msra.mxu0 %v237
        %261 = vmatpush.msra.mxu0 %v233
        %262 = vmatpush.msra.mxu0 %v229
        %263 = vmatpush.msra.mxu0 %v225
        %264 = vmatmul.f32.gmra.mxu0 %v243
        %v265 = vpop.f32.mrf.mxu0
        %v266 = vadd.f32 0.0, %v265
        %267 = vmatmul.f32.gmra.mxu0 %v246
        %v268 = vpop.f32.mrf.mxu0
        %v269 = vadd.f32 0.0, %v268
        %270 = vdwg.mxu0
        %271 = vmatpush.msra.mxu0 0.0
        %272 = vmatpush.msra.mxu0 0.0
        %273 = vmatpush.msra.mxu0 0.0
        %274 = vmatpush.msra.mxu0 0.0
        %275 = vmatpush.msra.mxu0 0.0
        %276 = vmatpush.msra.mxu0 0.0
        %277 = vmatpush.msra.mxu0 0.0
        %278 = vmatpush.msra.mxu0 0.0
        %279 = vmatpush.msra.mxu0 0.0
        %280 = vmatpush.msra.mxu0 0.0
        %281 = vmatpush.msra.mxu0 0.0
        %282 = vmatpush.msra.mxu0 0.0
        %283 = vmatpush.msra.mxu0 %v238
        %284 = vmatpush.msra.mxu0 %v234
        %285 = vmatpush.msra.mxu0 %v230
        %286 = vmatpush.msra.mxu0 %v226
        %287 = vmatmul.f32.gmra.mxu0 %v243
        %v288 = vpop.f32.mrf.mxu0
        %v289 = vadd.f32 0.0, %v288
        %290 = vmatmul.f32.gmra.mxu0 %v246
        %v291 = vpop.f32.mrf.mxu0
        %v292 = vadd.f32 0.0, %v291
        %293 = vdwg.mxu0
        %294 = vmatpush.msra.mxu0 0.0
        %295 = vmatpush.msra.mxu0 0.0
        %296 = vmatpush.msra.mxu0 0.0
        %297 = vmatpush.msra.mxu0 0.0
        %298 = vmatpush.msra.mxu0 0.0
        %299 = vmatpush.msra.mxu0 0.0
        %300 = vmatpush.msra.mxu0 0.0
        %301 = vmatpush.msra.mxu0 0.0
        %302 = vmatpush.msra.mxu0 0.0
        %303 = vmatpush.msra.mxu0 0.0
        %304 = vmatpush.msra.mxu0 0.0
        %305 = vmatpush.msra.mxu0 0.0
        %306 = vmatpush.msra.mxu0 %v239
        %307 = vmatpush.msra.mxu0 %v235
        %308 = vmatpush.msra.mxu0 %v231
        %309 = vmatpush.msra.mxu0 %v227
        %310 = vmatmul.f32.gmra.mxu0 %v243
        %v311 = vpop.f32.mrf.mxu0
        %v312 = vadd.f32 0.0, %v311
        %313 = vmatmul.f32.gmra.mxu0 %v246
        %v314 = vpop.f32.mrf.mxu0
        %v315 = vadd.f32 0.0, %v314
        %316 = vdwg.mxu0
        %317 = vmatpush.msra.mxu0 0.0
        %318 = vmatpush.msra.mxu0 0.0
        %319 = vmatpush.msra.mxu0 0.0
        %320 = vmatpush.msra.mxu0 0.0
        %321 = vmatpush.msra.mxu0 0.0
        %322 = vmatpush.msra.mxu0 0.0
        %323 = vmatpush.msra.mxu0 0.0
        %324 = vmatpush.msra.mxu0 0.0
        %325 = vmatpush.msra.mxu0 0.0
        %326 = vmatpush.msra.mxu0 0.0
        %327 = vmatpush.msra.mxu0 0.0
        %328 = vmatpush.msra.mxu0 0.0
        %329 = vmatpush.msra.mxu0 %v240
        %330 = vmatpush.msra.mxu0 %v236
        %331 = vmatpush.msra.mxu0 %v232
        %332 = vmatpush.msra.mxu0 %v228
        %333 = vmatmul.f32.gmra.mxu0 %v243
        %v334 = vpop.f32.mrf.mxu0
        %v335 = vadd.f32 0.0, %v334
        %336 = vmatmul.f32.gmra.mxu0 %v246
        %v337 = vpop.f32.mrf.mxu0
        %v338 = vadd.f32 0.0, %v337
        %339 = vdwg.mxu0
        %v341 = vsel %vm241, %v219, 0
        %v344 = vsel %vm241, %v220, 0
        %346 = vmatpush.msra.mxu0 0.0
        %347 = vmatpush.msra.mxu0 0.0
        %348 = vmatpush.msra.mxu0 0.0
        %349 = vmatpush.msra.mxu0 0.0
        %350 = vmatpush.msra.mxu0 0.0
        %351 = vmatpush.msra.mxu0 0.0
        %352 = vmatpush.msra.mxu0 0.0
        %353 = vmatpush.msra.mxu0 0.0
        %354 = vmatpush.msra.mxu0 0.0
        %355 = vmatpush.msra.mxu0 0.0
        %356 = vmatpush.msra.mxu0 0.0
        %357 = vmatpush.msra.mxu0 0.0
        %358 = vmatpush.msra.mxu0 %v215
        %359 = vmatpush.msra.mxu0 %v211
        %360 = vmatpush.msra.mxu0 %v207
        %361 = vmatpush.msra.mxu0 %v203
        %362 = vmatmul.f32.gmra.mxu0 %v341
        %v363 = vpop.f32.mrf.mxu0
        %v364 = vadd.f32 %v266, %v363
        %365 = vmatmul.f32.gmra.mxu0 %v344
        %v366 = vpop.f32.mrf.mxu0
        %v367 = vadd.f32 %v269, %v366
        %368 = vdwg.mxu0
        %369 = vmatpush.msra.mxu0 0.0
        %370 = vmatpush.msra.mxu0 0.0
        %371 = vmatpush.msra.mxu0 0.0
        %372 = vmatpush.msra.mxu0 0.0
        %373 = vmatpush.msra.mxu0 0.0
        %374 = vmatpush.msra.mxu0 0.0
        %375 = vmatpush.msra.mxu0 0.0
        %376 = vmatpush.msra.mxu0 0.0
        %377 = vmatpush.msra.mxu0 0.0
        %378 = vmatpush.msra.mxu0 0.0
        %379 = vmatpush.msra.mxu0 0.0
        %380 = vmatpush.msra.mxu0 0.0
        %381 = vmatpush.msra.mxu0 %v216
        %382 = vmatpush.msra.mxu0 %v212
        %383 = vmatpush.msra.mxu0 %v208
        %384 = vmatpush.msra.mxu0 %v204
        %385 = vmatmul.f32.gmra.mxu0 %v341
        %v386 = vpop.f32.mrf.mxu0
        %v387 = vadd.f32 %v289, %v386
        %388 = vmatmul.f32.gmra.mxu0 %v344
        %v389 = vpop.f32.mrf.mxu0
        %v390 = vadd.f32 %v292, %v389
        %391 = vdwg.mxu0
        %392 = vmatpush.msra.mxu0 0.0
        %393 = vmatpush.msra.mxu0 0.0
        %394 = vmatpush.msra.mxu0 0.0
        %395 = vmatpush.msra.mxu0 0.0
        %396 = vmatpush.msra.mxu0 0.0
        %397 = vmatpush.msra.mxu0 0.0
        %398 = vmatpush.msra.mxu0 0.0
        %399 = vmatpush.msra.mxu0 0.0
        %400 = vmatpush.msra.mxu0 0.0
        %401 = vmatpush.msra.mxu0 0.0
        %402 = vmatpush.msra.mxu0 0.0
        %403 = vmatpush.msra.mxu0 0.0
        %404 = vmatpush.msra.mxu0 %v217
        %405 = vmatpush.msra.mxu0 %v213
        %406 = vmatpush.msra.mxu0 %v209
        %407 = vmatpush.msra.mxu0 %v205
        %408 = vmatmul.f32.gmra.mxu0 %v341
        %v409 = vpop.f32.mrf.mxu0
        %v410 = vadd.f32 %v312, %v409
        %411 = vmatmul.f32.gmra.mxu0 %v344
        %v412 = vpop.f32.mrf.mxu0
        %v413 = vadd.f32 %v315, %v412
        %414 = vdwg.mxu0
        %415 = vmatpush.msra.mxu0 0.0
        %416 = vmatpush.msra.mxu0 0.0
        %417 = vmatpush.msra.mxu0 0.0
        %418 = vmatpush.msra.mxu0 0.0
        %419 = vmatpush.msra.mxu0 0.0
        %420 = vmatpush.msra.mxu0 0.0
        %421 = vmatpush.msra.mxu0 0.0
        %422 = vmatpush.msra.mxu0 0.0
        %423 = vmatpush.msra.mxu0 0.0
        %424 = vmatpush.msra.mxu0 0.0
        %425 = vmatpush.msra.mxu0 0.0
        %426 = vmatpush.msra.mxu0 0.0
        %427 = vmatpush.msra.mxu0 %v218
        %428 = vmatpush.msra.mxu0 %v214
        %429 = vmatpush.msra.mxu0 %v210
        %430 = vmatpush.msra.mxu0 %v206
        %431 = vmatmul.f32.gmra.mxu0 %v341
        %v432 = vpop.f32.mrf.mxu0
        %v433 = vadd.f32 %v335, %v432
        %434 = vmatmul.f32.gmra.mxu0 %v344
        %v435 = vpop.f32.mrf.mxu0
        %v436 = vadd.f32 %v338, %v435
        %437 = vdwg.mxu0
        %v438 = vld [vmem:[%s197 + $0x1] sm:$0xff]
        %v439 = vld [vmem:[%s197 + $0x9] sm:$0x3f]
        %v441 = vsel %vm241, %v438, 0
        %v444 = vsel %vm241, %v439, 0
        %446 = vmatpush.msra.mxu0 0.0
        %447 = vmatpush.msra.mxu0 0.0
        %448 = vmatpush.msra.mxu0 0.0
        %449 = vmatpush.msra.mxu0 0.0
        %450 = vmatpush.msra.mxu0 0.0
        %451 = vmatpush.msra.mxu0 0.0
        %452 = vmatpush.msra.mxu0 0.0
        %453 = vmatpush.msra.mxu0 0.0
        %454 = vmatpush.msra.mxu0 0.0
        %455 = vmatpush.msra.mxu0 0.0
        %456 = vmatpush.msra.mxu0 0.0
        %457 = vmatpush.msra.mxu0 0.0
        %458 = vmatpush.msra.mxu0 %v237
        %459 = vmatpush.msra.mxu0 %v233
        %460 = vmatpush.msra.mxu0 %v229
        %461 = vmatpush.msra.mxu0 %v225
        %462 = vmatmul.f32.gmra.mxu0 %v441
        %v463 = vpop.f32.mrf.mxu0
        %v464 = vadd.f32 0.0, %v463
        %465 = vmatmul.f32.gmra.mxu0 %v444
        %v466 = vpop.f32.mrf.mxu0
        %v467 = vadd.f32 0.0, %v466
        %468 = vdwg.mxu0
        %469 = vmatpush.msra.mxu0 0.0
        %470 = vmatpush.msra.mxu0 0.0
        %471 = vmatpush.msra.mxu0 0.0
        %472 = vmatpush.msra.mxu0 0.0
        %473 = vmatpush.msra.mxu0 0.0
        %474 = vmatpush.msra.mxu0 0.0
        %475 = vmatpush.msra.mxu0 0.0
        %476 = vmatpush.msra.mxu0 0.0
        %477 = vmatpush.msra.mxu0 0.0
        %478 = vmatpush.msra.mxu0 0.0
        %479 = vmatpush.msra.mxu0 0.0
        %480 = vmatpush.msra.mxu0 0.0
        %481 = vmatpush.msra.mxu0 %v238
        %482 = vmatpush.msra.mxu0 %v234
        %483 = vmatpush.msra.mxu0 %v230
        %484 = vmatpush.msra.mxu0 %v226
        %485 = vmatmul.f32.gmra.mxu0 %v441
        %v486 = vpop.f32.mrf.mxu0
        %v487 = vadd.f32 0.0, %v486
        %488 = vmatmul.f32.gmra.mxu0 %v444
        %v489 = vpop.f32.mrf.mxu0
        %v490 = vadd.f32 0.0, %v489
        %491 = vdwg.mxu0
        %492 = vmatpush.msra.mxu0 0.0
        %493 = vmatpush.msra.mxu0 0.0
        %494 = vmatpush.msra.mxu0 0.0
        %495 = vmatpush.msra.mxu0 0.0
        %496 = vmatpush.msra.mxu0 0.0
        %497 = vmatpush.msra.mxu0 0.0
        %498 = vmatpush.msra.mxu0 0.0
        %499 = vmatpush.msra.mxu0 0.0
        %500 = vmatpush.msra.mxu0 0.0
        %501 = vmatpush.msra.mxu0 0.0
        %502 = vmatpush.msra.mxu0 0.0
        %503 = vmatpush.msra.mxu0 0.0
        %504 = vmatpush.msra.mxu0 %v239
        %505 = vmatpush.msra.mxu0 %v235
        %506 = vmatpush.msra.mxu0 %v231
        %507 = vmatpush.msra.mxu0 %v227
        %508 = vmatmul.f32.gmra.mxu0 %v441
        %v509 = vpop.f32.mrf.mxu0
        %v510 = vadd.f32 0.0, %v509
        %511 = vmatmul.f32.gmra.mxu0 %v444
        %v512 = vpop.f32.mrf.mxu0
        %v513 = vadd.f32 0.0, %v512
        %514 = vdwg.mxu0
        %515 = vmatpush.msra.mxu0 0.0
        %516 = vmatpush.msra.mxu0 0.0
        %517 = vmatpush.msra.mxu0 0.0
        %518 = vmatpush.msra.mxu0 0.0
        %519 = vmatpush.msra.mxu0 0.0
        %520 = vmatpush.msra.mxu0 0.0
        %521 = vmatpush.msra.mxu0 0.0
        %522 = vmatpush.msra.mxu0 0.0
        %523 = vmatpush.msra.mxu0 0.0
        %524 = vmatpush.msra.mxu0 0.0
        %525 = vmatpush.msra.mxu0 0.0
        %526 = vmatpush.msra.mxu0 0.0
        %527 = vmatpush.msra.mxu0 %v240
        %528 = vmatpush.msra.mxu0 %v236
        %529 = vmatpush.msra.mxu0 %v232
        %530 = vmatpush.msra.mxu0 %v228
        %531 = vmatmul.f32.gmra.mxu0 %v441
        %v532 = vpop.f32.mrf.mxu0
        %v533 = vadd.f32 0.0, %v532
        %534 = vmatmul.f32.gmra.mxu0 %v444
        %v535 = vpop.f32.mrf.mxu0
        %v536 = vadd.f32 0.0, %v535
        %537 = vdwg.mxu0
        %538 = vmatpush.msra.mxu0 0.0
        %539 = vmatpush.msra.mxu0 0.0
        %540 = vmatpush.msra.mxu0 0.0
        %541 = vmatpush.msra.mxu0 0.0
        %542 = vmatpush.msra.mxu0 0.0
        %543 = vmatpush.msra.mxu0 0.0
        %544 = vmatpush.msra.mxu0 0.0
        %545 = vmatpush.msra.mxu0 0.0
        %546 = vmatpush.msra.mxu0 0.0
        %547 = vmatpush.msra.mxu0 0.0
        %548 = vmatpush.msra.mxu0 0.0
        %549 = vmatpush.msra.mxu0 0.0
        %550 = vmatpush.msra.mxu0 %v215
        %551 = vmatpush.msra.mxu0 %v211
        %552 = vmatpush.msra.mxu0 %v207
        %553 = vmatpush.msra.mxu0 %v203
        %554 = vmatmul.f32.gmra.mxu0 %v243
        %v555 = vpop.f32.mrf.mxu0
        %v556 = vadd.f32 %v464, %v555
        %557 = vmatmul.f32.gmra.mxu0 %v246
        %v558 = vpop.f32.mrf.mxu0
        %v559 = vadd.f32 %v467, %v558
        %560 = vdwg.mxu0
        %561 = vmatpush.msra.mxu0 0.0
        %562 = vmatpush.msra.mxu0 0.0
        %563 = vmatpush.msra.mxu0 0.0
        %564 = vmatpush.msra.mxu0 0.0
        %565 = vmatpush.msra.mxu0 0.0
        %566 = vmatpush.msra.mxu0 0.0
        %567 = vmatpush.msra.mxu0 0.0
        %568 = vmatpush.msra.mxu0 0.0
        %569 = vmatpush.msra.mxu0 0.0
        %570 = vmatpush.msra.mxu0 0.0
        %571 = vmatpush.msra.mxu0 0.0
        %572 = vmatpush.msra.mxu0 0.0
        %573 = vmatpush.msra.mxu0 %v216
        %574 = vmatpush.msra.mxu0 %v212
        %575 = vmatpush.msra.mxu0 %v208
        %576 = vmatpush.msra.mxu0 %v204
        %577 = vmatmul.f32.gmra.mxu0 %v243
        %v578 = vpop.f32.mrf.mxu0
        %v579 = vadd.f32 %v487, %v578
        %580 = vmatmul.f32.gmra.mxu0 %v246
        %v581 = vpop.f32.mrf.mxu0
        %v582 = vadd.f32 %v490, %v581
        %583 = vdwg.mxu0
        %584 = vmatpush.msra.mxu0 0.0
        %585 = vmatpush.msra.mxu0 0.0
        %586 = vmatpush.msra.mxu0 0.0
        %587 = vmatpush.msra.mxu0 0.0
        %588 = vmatpush.msra.mxu0 0.0
        %589 = vmatpush.msra.mxu0 0.0
        %590 = vmatpush.msra.mxu0 0.0
        %591 = vmatpush.msra.mxu0 0.0
        %592 = vmatpush.msra.mxu0 0.0
        %593 = vmatpush.msra.mxu0 0.0
        %594 = vmatpush.msra.mxu0 0.0
        %595 = vmatpush.msra.mxu0 0.0
        %596 = vmatpush.msra.mxu0 %v217
        %597 = vmatpush.msra.mxu0 %v213
        %598 = vmatpush.msra.mxu0 %v209
        %599 = vmatpush.msra.mxu0 %v205
        %600 = vmatmul.f32.gmra.mxu0 %v243
        %v601 = vpop.f32.mrf.mxu0
        %v602 = vadd.f32 %v510, %v601
        %603 = vmatmul.f32.gmra.mxu0 %v246
        %v604 = vpop.f32.mrf.mxu0
        %v605 = vadd.f32 %v513, %v604
        %606 = vdwg.mxu0
        %607 = vmatpush.msra.mxu0 0.0
        %608 = vmatpush.msra.mxu0 0.0
        %609 = vmatpush.msra.mxu0 0.0
        %610 = vmatpush.msra.mxu0 0.0
        %611 = vmatpush.msra.mxu0 0.0
        %612 = vmatpush.msra.mxu0 0.0
        %613 = vmatpush.msra.mxu0 0.0
        %614 = vmatpush.msra.mxu0 0.0
        %615 = vmatpush.msra.mxu0 0.0
        %616 = vmatpush.msra.mxu0 0.0
        %617 = vmatpush.msra.mxu0 0.0
        %618 = vmatpush.msra.mxu0 0.0
        %619 = vmatpush.msra.mxu0 %v218
        %620 = vmatpush.msra.mxu0 %v214
        %621 = vmatpush.msra.mxu0 %v210
        %622 = vmatpush.msra.mxu0 %v206
        %623 = vmatmul.f32.gmra.mxu0 %v243
        %v624 = vpop.f32.mrf.mxu0
        %v625 = vadd.f32 %v533, %v624
        %626 = vmatmul.f32.gmra.mxu0 %v246
        %v627 = vpop.f32.mrf.mxu0
        %v628 = vadd.f32 %v536, %v627
        %629 = vdwg.mxu0
        %s630 = scalar_lea.vmem [#allocation2], 256
        %v631 = vld [vmem:[%s630] sm:$0xff]
        %v632 = vld [vmem:[%s630 + $0x8] sm:$0xff]
        %v633 = vld [vmem:[%s630 + $0x10] sm:$0xff]
        %v634 = vld [vmem:[%s630 + $0x18] sm:$0xff]
        %v635 = vld [vmem:[%s630 + $0x20] sm:$0xff]
        %v636 = vld [vmem:[%s630 + $0x28] sm:$0xff]
        %v637 = vld [vmem:[%s630 + $0x30] sm:$0xff]
        %v638 = vld [vmem:[%s630 + $0x38] sm:$0xff]
        %v639 = vld [vmem:[%s630 + $0x40] sm:$0xff]
        %v640 = vld [vmem:[%s630 + $0x48] sm:$0xff]
        %v641 = vld [vmem:[%s630 + $0x50] sm:$0xff]
        %v642 = vld [vmem:[%s630 + $0x58] sm:$0xff]
        %v643 = vld [vmem:[%s630 + $0x60] sm:$0xff]
        %v644 = vld [vmem:[%s630 + $0x68] sm:$0xff]
        %v645 = vld [vmem:[%s630 + $0x70] sm:$0xff]
        %v646 = vld [vmem:[%s630 + $0x78] sm:$0xff]
        %647 = vmatpush.msra.mxu0 0.0
        %648 = vmatpush.msra.mxu0 0.0
        %649 = vmatpush.msra.mxu0 0.0
        %650 = vmatpush.msra.mxu0 0.0
        %651 = vmatpush.msra.mxu0 0.0
        %652 = vmatpush.msra.mxu0 0.0
        %653 = vmatpush.msra.mxu0 0.0
        %654 = vmatpush.msra.mxu0 0.0
        %655 = vmatpush.msra.mxu0 0.0
        %656 = vmatpush.msra.mxu0 0.0
        %657 = vmatpush.msra.mxu0 0.0
        %658 = vmatpush.msra.mxu0 0.0
        %659 = vmatpush.msra.mxu0 %v643
        %660 = vmatpush.msra.mxu0 %v639
        %661 = vmatpush.msra.mxu0 %v635
        %662 = vmatpush.msra.mxu0 %v631
        %663 = vmatmul.f32.gmra.mxu0 %v441
        %v664 = vpop.f32.mrf.mxu0
        %v665 = vadd.f32 0.0, %v664
        %666 = vmatmul.f32.gmra.mxu0 %v444
        %v667 = vpop.f32.mrf.mxu0
        %v668 = vadd.f32 0.0, %v667
        %669 = vdwg.mxu0
        %670 = vmatpush.msra.mxu0 0.0
        %671 = vmatpush.msra.mxu0 0.0
        %672 = vmatpush.msra.mxu0 0.0
        %673 = vmatpush.msra.mxu0 0.0
        %674 = vmatpush.msra.mxu0 0.0
        %675 = vmatpush.msra.mxu0 0.0
        %676 = vmatpush.msra.mxu0 0.0
        %677 = vmatpush.msra.mxu0 0.0
        %678 = vmatpush.msra.mxu0 0.0
        %679 = vmatpush.msra.mxu0 0.0
        %680 = vmatpush.msra.mxu0 0.0
        %681 = vmatpush.msra.mxu0 0.0
        %682 = vmatpush.msra.mxu0 %v644
        %683 = vmatpush.msra.mxu0 %v640
        %684 = vmatpush.msra.mxu0 %v636
        %685 = vmatpush.msra.mxu0 %v632
        %686 = vmatmul.f32.gmra.mxu0 %v441
        %v687 = vpop.f32.mrf.mxu0
        %v688 = vadd.f32 0.0, %v687
        %689 = vmatmul.f32.gmra.mxu0 %v444
        %v690 = vpop.f32.mrf.mxu0
        %v691 = vadd.f32 0.0, %v690
        %692 = vdwg.mxu0
        %693 = vmatpush.msra.mxu0 0.0
        %694 = vmatpush.msra.mxu0 0.0
        %695 = vmatpush.msra.mxu0 0.0
        %696 = vmatpush.msra.mxu0 0.0
        %697 = vmatpush.msra.mxu0 0.0
        %698 = vmatpush.msra.mxu0 0.0
        %699 = vmatpush.msra.mxu0 0.0
        %700 = vmatpush.msra.mxu0 0.0
        %701 = vmatpush.msra.mxu0 0.0
        %702 = vmatpush.msra.mxu0 0.0
        %703 = vmatpush.msra.mxu0 0.0
        %704 = vmatpush.msra.mxu0 0.0
        %705 = vmatpush.msra.mxu0 %v645
        %706 = vmatpush.msra.mxu0 %v641
        %707 = vmatpush.msra.mxu0 %v637
        %708 = vmatpush.msra.mxu0 %v633
        %709 = vmatmul.f32.gmra.mxu0 %v441
        %v710 = vpop.f32.mrf.mxu0
        %v711 = vadd.f32 0.0, %v710
        %712 = vmatmul.f32.gmra.mxu0 %v444
        %v713 = vpop.f32.mrf.mxu0
        %v714 = vadd.f32 0.0, %v713
        %715 = vdwg.mxu0
        %716 = vmatpush.msra.mxu0 0.0
        %717 = vmatpush.msra.mxu0 0.0
        %718 = vmatpush.msra.mxu0 0.0
        %719 = vmatpush.msra.mxu0 0.0
        %720 = vmatpush.msra.mxu0 0.0
        %721 = vmatpush.msra.mxu0 0.0
        %722 = vmatpush.msra.mxu0 0.0
        %723 = vmatpush.msra.mxu0 0.0
        %724 = vmatpush.msra.mxu0 0.0
        %725 = vmatpush.msra.mxu0 0.0
        %726 = vmatpush.msra.mxu0 0.0
        %727 = vmatpush.msra.mxu0 0.0
        %728 = vmatpush.msra.mxu0 %v646
        %729 = vmatpush.msra.mxu0 %v642
        %730 = vmatpush.msra.mxu0 %v638
        %731 = vmatpush.msra.mxu0 %v634
        %732 = vmatmul.f32.gmra.mxu0 %v441
        %v733 = vpop.f32.mrf.mxu0
        %v734 = vadd.f32 0.0, %v733
        %735 = vmatmul.f32.gmra.mxu0 %v444
        %v736 = vpop.f32.mrf.mxu0
        %v737 = vadd.f32 0.0, %v736
        %738 = vdwg.mxu0
        %v739 = vadd.f32 %v364, %v665
        %v740 = vadd.f32 %v387, %v688
        %v741 = vadd.f32 %v410, %v711
        %v742 = vadd.f32 %v433, %v734
        %v743 = vadd.f32 %v367, %v668
        %v744 = vadd.f32 %v390, %v691
        %v745 = vadd.f32 %v413, %v714
        %v746 = vadd.f32 %v436, %v737
        %v747 = vld [vmem:[%s221 + $0x1] sm:$0xff]
        %v748 = vld [vmem:[%s221 + $0x9] sm:$0x3f]
        %v750 = vsel %vm241, %v747, 0
        %v753 = vsel %vm241, %v748, 0
        %755 = vmatpush.msra.mxu0 0.0
        %756 = vmatpush.msra.mxu0 0.0
        %757 = vmatpush.msra.mxu0 0.0
        %758 = vmatpush.msra.mxu0 0.0
        %759 = vmatpush.msra.mxu0 0.0
        %760 = vmatpush.msra.mxu0 0.0
        %761 = vmatpush.msra.mxu0 0.0
        %762 = vmatpush.msra.mxu0 0.0
        %763 = vmatpush.msra.mxu0 0.0
        %764 = vmatpush.msra.mxu0 0.0
        %765 = vmatpush.msra.mxu0 0.0
        %766 = vmatpush.msra.mxu0 0.0
        %767 = vmatpush.msra.mxu0 %v643
        %768 = vmatpush.msra.mxu0 %v639
        %769 = vmatpush.msra.mxu0 %v635
        %770 = vmatpush.msra.mxu0 %v631
        %771 = vmatmul.f32.gmra.mxu0 %v750
        %v772 = vpop.f32.mrf.mxu0
        %v773 = vadd.f32 0.0, %v772
        %774 = vmatmul.f32.gmra.mxu0 %v753
        %v775 = vpop.f32.mrf.mxu0
        %v776 = vadd.f32 0.0, %v775
        %777 = vdwg.mxu0
        %778 = vmatpush.msra.mxu0 0.0
        %779 = vmatpush.msra.mxu0 0.0
        %780 = vmatpush.msra.mxu0 0.0
        %781 = vmatpush.msra.mxu0 0.0
        %782 = vmatpush.msra.mxu0 0.0
        %783 = vmatpush.msra.mxu0 0.0
        %784 = vmatpush.msra.mxu0 0.0
        %785 = vmatpush.msra.mxu0 0.0
        %786 = vmatpush.msra.mxu0 0.0
        %787 = vmatpush.msra.mxu0 0.0
        %788 = vmatpush.msra.mxu0 0.0
        %789 = vmatpush.msra.mxu0 0.0
        %790 = vmatpush.msra.mxu0 %v644
        %791 = vmatpush.msra.mxu0 %v640
        %792 = vmatpush.msra.mxu0 %v636
        %793 = vmatpush.msra.mxu0 %v632
        %794 = vmatmul.f32.gmra.mxu0 %v750
        %v795 = vpop.f32.mrf.mxu0
        %v796 = vadd.f32 0.0, %v795
        %797 = vmatmul.f32.gmra.mxu0 %v753
        %v798 = vpop.f32.mrf.mxu0
        %v799 = vadd.f32 0.0, %v798
        %800 = vdwg.mxu0
        %801 = vmatpush.msra.mxu0 0.0
        %802 = vmatpush.msra.mxu0 0.0
        %803 = vmatpush.msra.mxu0 0.0
        %804 = vmatpush.msra.mxu0 0.0
        %805 = vmatpush.msra.mxu0 0.0
        %806 = vmatpush.msra.mxu0 0.0
        %807 = vmatpush.msra.mxu0 0.0
        %808 = vmatpush.msra.mxu0 0.0
        %809 = vmatpush.msra.mxu0 0.0
        %810 = vmatpush.msra.mxu0 0.0
        %811 = vmatpush.msra.mxu0 0.0
        %812 = vmatpush.msra.mxu0 0.0
        %813 = vmatpush.msra.mxu0 %v645
        %814 = vmatpush.msra.mxu0 %v641
        %815 = vmatpush.msra.mxu0 %v637
        %816 = vmatpush.msra.mxu0 %v633
        %817 = vmatmul.f32.gmra.mxu0 %v750
        %v818 = vpop.f32.mrf.mxu0
        %v819 = vadd.f32 0.0, %v818
        %820 = vmatmul.f32.gmra.mxu0 %v753
        %v821 = vpop.f32.mrf.mxu0
        %v822 = vadd.f32 0.0, %v821
        %823 = vdwg.mxu0
        %824 = vmatpush.msra.mxu0 0.0
        %825 = vmatpush.msra.mxu0 0.0
        %826 = vmatpush.msra.mxu0 0.0
        %827 = vmatpush.msra.mxu0 0.0
        %828 = vmatpush.msra.mxu0 0.0
        %829 = vmatpush.msra.mxu0 0.0
        %830 = vmatpush.msra.mxu0 0.0
        %831 = vmatpush.msra.mxu0 0.0
        %832 = vmatpush.msra.mxu0 0.0
        %833 = vmatpush.msra.mxu0 0.0
        %834 = vmatpush.msra.mxu0 0.0
        %835 = vmatpush.msra.mxu0 0.0
        %836 = vmatpush.msra.mxu0 %v646
        %837 = vmatpush.msra.mxu0 %v642
        %838 = vmatpush.msra.mxu0 %v638
        %839 = vmatpush.msra.mxu0 %v634
        %840 = vmatmul.f32.gmra.mxu0 %v750
        %v841 = vpop.f32.mrf.mxu0
        %v842 = vadd.f32 0.0, %v841
        %843 = vmatmul.f32.gmra.mxu0 %v753
        %v844 = vpop.f32.mrf.mxu0
        %v845 = vadd.f32 0.0, %v844
        %846 = vdwg.mxu0
        %v847 = vadd.f32 %v556, %v773
        %v848 = vadd.f32 %v579, %v796
        %v849 = vadd.f32 %v602, %v819
        %v850 = vadd.f32 %v625, %v842
        %v851 = vadd.f32 %v559, %v776
        %v852 = vadd.f32 %v582, %v799
        %v853 = vadd.f32 %v605, %v822
        %v854 = vadd.f32 %v628, %v845
        %s855 = scalar_lea.vmem [#allocation2], 384
        %v856 = vld [vmem:[%s855] sm:$0xff]
        %v857 = vld [vmem:[%s855 + $0x8] sm:$0xff]
        %v858 = vld [vmem:[%s855 + $0x10] sm:$0xff]
        %v859 = vld [vmem:[%s855 + $0x18] sm:$0xff]
        %v860 = vld [vmem:[%s855 + $0x20] sm:$0xff]
        %v861 = vld [vmem:[%s855 + $0x28] sm:$0xff]
        %v862 = vld [vmem:[%s855 + $0x30] sm:$0xff]
        %v863 = vld [vmem:[%s855 + $0x38] sm:$0xff]
        %v864 = vld [vmem:[%s855 + $0x40] sm:$0xff]
        %v865 = vld [vmem:[%s855 + $0x48] sm:$0xff]
        %v866 = vld [vmem:[%s855 + $0x50] sm:$0xff]
        %v867 = vld [vmem:[%s855 + $0x58] sm:$0xff]
        %v868 = vld [vmem:[%s855 + $0x60] sm:$0xff]
        %v869 = vld [vmem:[%s855 + $0x68] sm:$0xff]
        %v870 = vld [vmem:[%s855 + $0x70] sm:$0xff]
        %v871 = vld [vmem:[%s855 + $0x78] sm:$0xff]
        %872 = vmatpush.msra.mxu0 0.0
        %873 = vmatpush.msra.mxu0 0.0
        %874 = vmatpush.msra.mxu0 0.0
        %875 = vmatpush.msra.mxu0 0.0
        %876 = vmatpush.msra.mxu0 0.0
        %877 = vmatpush.msra.mxu0 0.0
        %878 = vmatpush.msra.mxu0 0.0
        %879 = vmatpush.msra.mxu0 0.0
        %880 = vmatpush.msra.mxu0 0.0
        %881 = vmatpush.msra.mxu0 0.0
        %882 = vmatpush.msra.mxu0 0.0
        %883 = vmatpush.msra.mxu0 0.0
        %884 = vmatpush.msra.mxu0 %v868
        %885 = vmatpush.msra.mxu0 %v864
        %886 = vmatpush.msra.mxu0 %v860
        %887 = vmatpush.msra.mxu0 %v856
        %888 = vmatmul.f32.gmra.mxu0 %v750
        %v889 = vpop.f32.mrf.mxu0
        %v890 = vadd.f32 0.0, %v889
        %891 = vmatmul.f32.gmra.mxu0 %v753
        %v892 = vpop.f32.mrf.mxu0
        %v893 = vadd.f32 0.0, %v892
        %894 = vdwg.mxu0
        %895 = vmatpush.msra.mxu0 0.0
        %896 = vmatpush.msra.mxu0 0.0
        %897 = vmatpush.msra.mxu0 0.0
        %898 = vmatpush.msra.mxu0 0.0
        %899 = vmatpush.msra.mxu0 0.0
        %900 = vmatpush.msra.mxu0 0.0
        %901 = vmatpush.msra.mxu0 0.0
        %902 = vmatpush.msra.mxu0 0.0
        %903 = vmatpush.msra.mxu0 0.0
        %904 = vmatpush.msra.mxu0 0.0
        %905 = vmatpush.msra.mxu0 0.0
        %906 = vmatpush.msra.mxu0 0.0
        %907 = vmatpush.msra.mxu0 %v869
        %908 = vmatpush.msra.mxu0 %v865
        %909 = vmatpush.msra.mxu0 %v861
        %910 = vmatpush.msra.mxu0 %v857
        %911 = vmatmul.f32.gmra.mxu0 %v750
        %v912 = vpop.f32.mrf.mxu0
        %v913 = vadd.f32 0.0, %v912
        %914 = vmatmul.f32.gmra.mxu0 %v753
        %v915 = vpop.f32.mrf.mxu0
        %v916 = vadd.f32 0.0, %v915
        %917 = vdwg.mxu0
        %918 = vmatpush.msra.mxu0 0.0
        %919 = vmatpush.msra.mxu0 0.0
        %920 = vmatpush.msra.mxu0 0.0
        %921 = vmatpush.msra.mxu0 0.0
        %922 = vmatpush.msra.mxu0 0.0
        %923 = vmatpush.msra.mxu0 0.0
        %924 = vmatpush.msra.mxu0 0.0
        %925 = vmatpush.msra.mxu0 0.0
        %926 = vmatpush.msra.mxu0 0.0
        %927 = vmatpush.msra.mxu0 0.0
        %928 = vmatpush.msra.mxu0 0.0
        %929 = vmatpush.msra.mxu0 0.0
        %930 = vmatpush.msra.mxu0 %v870
        %931 = vmatpush.msra.mxu0 %v866
        %932 = vmatpush.msra.mxu0 %v862
        %933 = vmatpush.msra.mxu0 %v858
        %934 = vmatmul.f32.gmra.mxu0 %v750
        %v935 = vpop.f32.mrf.mxu0
        %v936 = vadd.f32 0.0, %v935
        %937 = vmatmul.f32.gmra.mxu0 %v753
        %v938 = vpop.f32.mrf.mxu0
        %v939 = vadd.f32 0.0, %v938
        %940 = vdwg.mxu0
        %941 = vmatpush.msra.mxu0 0.0
        %942 = vmatpush.msra.mxu0 0.0
        %943 = vmatpush.msra.mxu0 0.0
        %944 = vmatpush.msra.mxu0 0.0
        %945 = vmatpush.msra.mxu0 0.0
        %946 = vmatpush.msra.mxu0 0.0
        %947 = vmatpush.msra.mxu0 0.0
        %948 = vmatpush.msra.mxu0 0.0
        %949 = vmatpush.msra.mxu0 0.0
        %950 = vmatpush.msra.mxu0 0.0
        %951 = vmatpush.msra.mxu0 0.0
        %952 = vmatpush.msra.mxu0 0.0
        %953 = vmatpush.msra.mxu0 %v871
        %954 = vmatpush.msra.mxu0 %v867
        %955 = vmatpush.msra.mxu0 %v863
        %956 = vmatpush.msra.mxu0 %v859
        %957 = vmatmul.f32.gmra.mxu0 %v750
        %v958 = vpop.f32.mrf.mxu0
        %v959 = vadd.f32 0.0, %v958
        %960 = vmatmul.f32.gmra.mxu0 %v753
        %v961 = vpop.f32.mrf.mxu0
        %v962 = vadd.f32 0.0, %v961
        %963 = vdwg.mxu0
        %v964 = vadd.f32 %v739, %v890
        %v965 = vadd.f32 %v740, %v913
        %v966 = vadd.f32 %v741, %v936
        %v967 = vadd.f32 %v742, %v959
        %v968 = vadd.f32 %v743, %v893
        %v969 = vadd.f32 %v744, %v916
        %v970 = vadd.f32 %v745, %v939
        %v971 = vadd.f32 %v746, %v962
        %v972 = vld [vmem:[%s197 + $0x2] sm:$0xff]
        %v973 = vld [vmem:[%s197 + $0xa] sm:$0x3f]
        %v975 = vsel %vm241, %v972, 0
        %v978 = vsel %vm241, %v973, 0
        %980 = vmatpush.msra.mxu0 0.0
        %981 = vmatpush.msra.mxu0 0.0
        %982 = vmatpush.msra.mxu0 0.0
        %983 = vmatpush.msra.mxu0 0.0
        %984 = vmatpush.msra.mxu0 0.0
        %985 = vmatpush.msra.mxu0 0.0
        %986 = vmatpush.msra.mxu0 0.0
        %987 = vmatpush.msra.mxu0 0.0
        %988 = vmatpush.msra.mxu0 0.0
        %989 = vmatpush.msra.mxu0 0.0
        %990 = vmatpush.msra.mxu0 0.0
        %991 = vmatpush.msra.mxu0 0.0
        %992 = vmatpush.msra.mxu0 %v868
        %993 = vmatpush.msra.mxu0 %v864
        %994 = vmatpush.msra.mxu0 %v860
        %995 = vmatpush.msra.mxu0 %v856
        %996 = vmatmul.f32.gmra.mxu0 %v975
        %v997 = vpop.f32.mrf.mxu0
        %v998 = vadd.f32 0.0, %v997
        %999 = vmatmul.f32.gmra.mxu0 %v978
        %v1000 = vpop.f32.mrf.mxu0
        %v1001 = vadd.f32 0.0, %v1000
        %1002 = vdwg.mxu0
        %1003 = vmatpush.msra.mxu0 0.0
        %1004 = vmatpush.msra.mxu0 0.0
        %1005 = vmatpush.msra.mxu0 0.0
        %1006 = vmatpush.msra.mxu0 0.0
        %1007 = vmatpush.msra.mxu0 0.0
        %1008 = vmatpush.msra.mxu0 0.0
        %1009 = vmatpush.msra.mxu0 0.0
        %1010 = vmatpush.msra.mxu0 0.0
        %1011 = vmatpush.msra.mxu0 0.0
        %1012 = vmatpush.msra.mxu0 0.0
        %1013 = vmatpush.msra.mxu0 0.0
        %1014 = vmatpush.msra.mxu0 0.0
        %1015 = vmatpush.msra.mxu0 %v869
        %1016 = vmatpush.msra.mxu0 %v865
        %1017 = vmatpush.msra.mxu0 %v861
        %1018 = vmatpush.msra.mxu0 %v857
        %1019 = vmatmul.f32.gmra.mxu0 %v975
        %v1020 = vpop.f32.mrf.mxu0
        %v1021 = vadd.f32 0.0, %v1020
        %1022 = vmatmul.f32.gmra.mxu0 %v978
        %v1023 = vpop.f32.mrf.mxu0
        %v1024 = vadd.f32 0.0, %v1023
        %1025 = vdwg.mxu0
        %1026 = vmatpush.msra.mxu0 0.0
        %1027 = vmatpush.msra.mxu0 0.0
        %1028 = vmatpush.msra.mxu0 0.0
        %1029 = vmatpush.msra.mxu0 0.0
        %1030 = vmatpush.msra.mxu0 0.0
        %1031 = vmatpush.msra.mxu0 0.0
        %1032 = vmatpush.msra.mxu0 0.0
        %1033 = vmatpush.msra.mxu0 0.0
        %1034 = vmatpush.msra.mxu0 0.0
        %1035 = vmatpush.msra.mxu0 0.0
        %1036 = vmatpush.msra.mxu0 0.0
        %1037 = vmatpush.msra.mxu0 0.0
        %1038 = vmatpush.msra.mxu0 %v870
        %1039 = vmatpush.msra.mxu0 %v866
        %1040 = vmatpush.msra.mxu0 %v862
        %1041 = vmatpush.msra.mxu0 %v858
        %1042 = vmatmul.f32.gmra.mxu0 %v975
        %v1043 = vpop.f32.mrf.mxu0
        %v1044 = vadd.f32 0.0, %v1043
        %1045 = vmatmul.f32.gmra.mxu0 %v978
        %v1046 = vpop.f32.mrf.mxu0
        %v1047 = vadd.f32 0.0, %v1046
        %1048 = vdwg.mxu0
        %1049 = vmatpush.msra.mxu0 0.0
        %1050 = vmatpush.msra.mxu0 0.0
        %1051 = vmatpush.msra.mxu0 0.0
        %1052 = vmatpush.msra.mxu0 0.0
        %1053 = vmatpush.msra.mxu0 0.0
        %1054 = vmatpush.msra.mxu0 0.0
        %1055 = vmatpush.msra.mxu0 0.0
        %1056 = vmatpush.msra.mxu0 0.0
        %1057 = vmatpush.msra.mxu0 0.0
        %1058 = vmatpush.msra.mxu0 0.0
        %1059 = vmatpush.msra.mxu0 0.0
        %1060 = vmatpush.msra.mxu0 0.0
        %1061 = vmatpush.msra.mxu0 %v871
        %1062 = vmatpush.msra.mxu0 %v867
        %1063 = vmatpush.msra.mxu0 %v863
        %1064 = vmatpush.msra.mxu0 %v859
        %1065 = vmatmul.f32.gmra.mxu0 %v975
        %v1066 = vpop.f32.mrf.mxu0
        %v1067 = vadd.f32 0.0, %v1066
        %1068 = vmatmul.f32.gmra.mxu0 %v978
        %v1069 = vpop.f32.mrf.mxu0
        %v1070 = vadd.f32 0.0, %v1069
        %1071 = vdwg.mxu0
        %v1072 = vadd.f32 %v847, %v998
        %v1073 = vadd.f32 %v848, %v1021
        %v1074 = vadd.f32 %v849, %v1044
        %v1075 = vadd.f32 %v850, %v1067
        %v1076 = vadd.f32 %v851, %v1001
        %v1077 = vadd.f32 %v852, %v1024
        %v1078 = vadd.f32 %v853, %v1047
        %v1079 = vadd.f32 %v854, %v1070
        %s1080 = scalar_lea.vmem [#allocation2], 512
        %v1081 = vld [vmem:[%s1080] sm:$0xff]
        %v1082 = vld [vmem:[%s1080 + $0x8] sm:$0xff]
        %v1083 = vld [vmem:[%s1080 + $0x10] sm:$0xff]
        %v1084 = vld [vmem:[%s1080 + $0x18] sm:$0xff]
        %v1085 = vld [vmem:[%s1080 + $0x20] sm:$0xff]
        %v1086 = vld [vmem:[%s1080 + $0x28] sm:$0xff]
        %v1087 = vld [vmem:[%s1080 + $0x30] sm:$0xff]
        %v1088 = vld [vmem:[%s1080 + $0x38] sm:$0xff]
        %v1089 = vld [vmem:[%s1080 + $0x40] sm:$0xff]
        %v1090 = vld [vmem:[%s1080 + $0x48] sm:$0xff]
        %v1091 = vld [vmem:[%s1080 + $0x50] sm:$0xff]
        %v1092 = vld [vmem:[%s1080 + $0x58] sm:$0xff]
        %v1093 = vld [vmem:[%s1080 + $0x60] sm:$0xff]
        %v1094 = vld [vmem:[%s1080 + $0x68] sm:$0xff]
        %v1095 = vld [vmem:[%s1080 + $0x70] sm:$0xff]
        %v1096 = vld [vmem:[%s1080 + $0x78] sm:$0xff]
        %1097 = vmatpush.msra.mxu0 0.0
        %1098 = vmatpush.msra.mxu0 0.0
        %1099 = vmatpush.msra.mxu0 0.0
        %1100 = vmatpush.msra.mxu0 0.0
        %1101 = vmatpush.msra.mxu0 0.0
        %1102 = vmatpush.msra.mxu0 0.0
        %1103 = vmatpush.msra.mxu0 0.0
        %1104 = vmatpush.msra.mxu0 0.0
        %1105 = vmatpush.msra.mxu0 0.0
        %1106 = vmatpush.msra.mxu0 0.0
        %1107 = vmatpush.msra.mxu0 0.0
        %1108 = vmatpush.msra.mxu0 0.0
        %1109 = vmatpush.msra.mxu0 %v1093
        %1110 = vmatpush.msra.mxu0 %v1089
        %1111 = vmatpush.msra.mxu0 %v1085
        %1112 = vmatpush.msra.mxu0 %v1081
        %1113 = vmatmul.f32.gmra.mxu0 %v975
        %v1114 = vpop.f32.mrf.mxu0
        %v1115 = vadd.f32 0.0, %v1114
        %1116 = vmatmul.f32.gmra.mxu0 %v978
        %v1117 = vpop.f32.mrf.mxu0
        %v1118 = vadd.f32 0.0, %v1117
        %1119 = vdwg.mxu0
        %1120 = vmatpush.msra.mxu0 0.0
        %1121 = vmatpush.msra.mxu0 0.0
        %1122 = vmatpush.msra.mxu0 0.0
        %1123 = vmatpush.msra.mxu0 0.0
        %1124 = vmatpush.msra.mxu0 0.0
        %1125 = vmatpush.msra.mxu0 0.0
        %1126 = vmatpush.msra.mxu0 0.0
        %1127 = vmatpush.msra.mxu0 0.0
        %1128 = vmatpush.msra.mxu0 0.0
        %1129 = vmatpush.msra.mxu0 0.0
        %1130 = vmatpush.msra.mxu0 0.0
        %1131 = vmatpush.msra.mxu0 0.0
        %1132 = vmatpush.msra.mxu0 %v1094
        %1133 = vmatpush.msra.mxu0 %v1090
        %1134 = vmatpush.msra.mxu0 %v1086
        %1135 = vmatpush.msra.mxu0 %v1082
        %1136 = vmatmul.f32.gmra.mxu0 %v975
        %v1137 = vpop.f32.mrf.mxu0
        %v1138 = vadd.f32 0.0, %v1137
        %1139 = vmatmul.f32.gmra.mxu0 %v978
        %v1140 = vpop.f32.mrf.mxu0
        %v1141 = vadd.f32 0.0, %v1140
        %1142 = vdwg.mxu0
        %1143 = vmatpush.msra.mxu0 0.0
        %1144 = vmatpush.msra.mxu0 0.0
        %1145 = vmatpush.msra.mxu0 0.0
        %1146 = vmatpush.msra.mxu0 0.0
        %1147 = vmatpush.msra.mxu0 0.0
        %1148 = vmatpush.msra.mxu0 0.0
        %1149 = vmatpush.msra.mxu0 0.0
        %1150 = vmatpush.msra.mxu0 0.0
        %1151 = vmatpush.msra.mxu0 0.0
        %1152 = vmatpush.msra.mxu0 0.0
        %1153 = vmatpush.msra.mxu0 0.0
        %1154 = vmatpush.msra.mxu0 0.0
        %1155 = vmatpush.msra.mxu0 %v1095
        %1156 = vmatpush.msra.mxu0 %v1091
        %1157 = vmatpush.msra.mxu0 %v1087
        %1158 = vmatpush.msra.mxu0 %v1083
        %1159 = vmatmul.f32.gmra.mxu0 %v975
        %v1160 = vpop.f32.mrf.mxu0
        %v1161 = vadd.f32 0.0, %v1160
        %1162 = vmatmul.f32.gmra.mxu0 %v978
        %v1163 = vpop.f32.mrf.mxu0
        %v1164 = vadd.f32 0.0, %v1163
        %1165 = vdwg.mxu0
        %1166 = vmatpush.msra.mxu0 0.0
        %1167 = vmatpush.msra.mxu0 0.0
        %1168 = vmatpush.msra.mxu0 0.0
        %1169 = vmatpush.msra.mxu0 0.0
        %1170 = vmatpush.msra.mxu0 0.0
        %1171 = vmatpush.msra.mxu0 0.0
        %1172 = vmatpush.msra.mxu0 0.0
        %1173 = vmatpush.msra.mxu0 0.0
        %1174 = vmatpush.msra.mxu0 0.0
        %1175 = vmatpush.msra.mxu0 0.0
        %1176 = vmatpush.msra.mxu0 0.0
        %1177 = vmatpush.msra.mxu0 0.0
        %1178 = vmatpush.msra.mxu0 %v1096
        %1179 = vmatpush.msra.mxu0 %v1092
        %1180 = vmatpush.msra.mxu0 %v1088
        %1181 = vmatpush.msra.mxu0 %v1084
        %1182 = vmatmul.f32.gmra.mxu0 %v975
        %v1183 = vpop.f32.mrf.mxu0
        %v1184 = vadd.f32 0.0, %v1183
        %1185 = vmatmul.f32.gmra.mxu0 %v978
        %v1186 = vpop.f32.mrf.mxu0
        %v1187 = vadd.f32 0.0, %v1186
        %1188 = vdwg.mxu0
        %v1189 = vadd.f32 %v964, %v1115
        %v1190 = vadd.f32 %v965, %v1138
        %v1191 = vadd.f32 %v966, %v1161
        %v1192 = vadd.f32 %v967, %v1184
        %v1193 = vadd.f32 %v968, %v1118
        %v1194 = vadd.f32 %v969, %v1141
        %v1195 = vadd.f32 %v970, %v1164
        %v1196 = vadd.f32 %v971, %v1187
        %v1197 = vld [vmem:[%s221 + $0x2] sm:$0xff]
        %v1198 = vld [vmem:[%s221 + $0xa] sm:$0x3f]
        %v1200 = vsel %vm241, %v1197, 0
        %v1203 = vsel %vm241, %v1198, 0
        %1205 = vmatpush.msra.mxu0 0.0
        %1206 = vmatpush.msra.mxu0 0.0
        %1207 = vmatpush.msra.mxu0 0.0
        %1208 = vmatpush.msra.mxu0 0.0
        %1209 = vmatpush.msra.mxu0 0.0
        %1210 = vmatpush.msra.mxu0 0.0
        %1211 = vmatpush.msra.mxu0 0.0
        %1212 = vmatpush.msra.mxu0 0.0
        %1213 = vmatpush.msra.mxu0 0.0
        %1214 = vmatpush.msra.mxu0 0.0
        %1215 = vmatpush.msra.mxu0 0.0
        %1216 = vmatpush.msra.mxu0 0.0
        %1217 = vmatpush.msra.mxu0 %v1093
        %1218 = vmatpush.msra.mxu0 %v1089
        %1219 = vmatpush.msra.mxu0 %v1085
        %1220 = vmatpush.msra.mxu0 %v1081
        %1221 = vmatmul.f32.gmra.mxu0 %v1200
        %v1222 = vpop.f32.mrf.mxu0
        %v1223 = vadd.f32 0.0, %v1222
        %1224 = vmatmul.f32.gmra.mxu0 %v1203
        %v1225 = vpop.f32.mrf.mxu0
        %v1226 = vadd.f32 0.0, %v1225
        %1227 = vdwg.mxu0
        %1228 = vmatpush.msra.mxu0 0.0
        %1229 = vmatpush.msra.mxu0 0.0
        %1230 = vmatpush.msra.mxu0 0.0
        %1231 = vmatpush.msra.mxu0 0.0
        %1232 = vmatpush.msra.mxu0 0.0
        %1233 = vmatpush.msra.mxu0 0.0
        %1234 = vmatpush.msra.mxu0 0.0
        %1235 = vmatpush.msra.mxu0 0.0
        %1236 = vmatpush.msra.mxu0 0.0
        %1237 = vmatpush.msra.mxu0 0.0
        %1238 = vmatpush.msra.mxu0 0.0
        %1239 = vmatpush.msra.mxu0 0.0
        %1240 = vmatpush.msra.mxu0 %v1094
        %1241 = vmatpush.msra.mxu0 %v1090
        %1242 = vmatpush.msra.mxu0 %v1086
        %1243 = vmatpush.msra.mxu0 %v1082
        %1244 = vmatmul.f32.gmra.mxu0 %v1200
        %v1245 = vpop.f32.mrf.mxu0
        %v1246 = vadd.f32 0.0, %v1245
        %1247 = vmatmul.f32.gmra.mxu0 %v1203
        %v1248 = vpop.f32.mrf.mxu0
        %v1249 = vadd.f32 0.0, %v1248
        %1250 = vdwg.mxu0
        %1251 = vmatpush.msra.mxu0 0.0
        %1252 = vmatpush.msra.mxu0 0.0
        %1253 = vmatpush.msra.mxu0 0.0
        %1254 = vmatpush.msra.mxu0 0.0
        %1255 = vmatpush.msra.mxu0 0.0
        %1256 = vmatpush.msra.mxu0 0.0
        %1257 = vmatpush.msra.mxu0 0.0
        %1258 = vmatpush.msra.mxu0 0.0
        %1259 = vmatpush.msra.mxu0 0.0
        %1260 = vmatpush.msra.mxu0 0.0
        %1261 = vmatpush.msra.mxu0 0.0
        %1262 = vmatpush.msra.mxu0 0.0
        %1263 = vmatpush.msra.mxu0 %v1095
        %1264 = vmatpush.msra.mxu0 %v1091
        %1265 = vmatpush.msra.mxu0 %v1087
        %1266 = vmatpush.msra.mxu0 %v1083
        %1267 = vmatmul.f32.gmra.mxu0 %v1200
        %v1268 = vpop.f32.mrf.mxu0
        %v1269 = vadd.f32 0.0, %v1268
        %1270 = vmatmul.f32.gmra.mxu0 %v1203
        %v1271 = vpop.f32.mrf.mxu0
        %v1272 = vadd.f32 0.0, %v1271
        %1273 = vdwg.mxu0
        %1274 = vmatpush.msra.mxu0 0.0
        %1275 = vmatpush.msra.mxu0 0.0
        %1276 = vmatpush.msra.mxu0 0.0
        %1277 = vmatpush.msra.mxu0 0.0
        %1278 = vmatpush.msra.mxu0 0.0
        %1279 = vmatpush.msra.mxu0 0.0
        %1280 = vmatpush.msra.mxu0 0.0
        %1281 = vmatpush.msra.mxu0 0.0
        %1282 = vmatpush.msra.mxu0 0.0
        %1283 = vmatpush.msra.mxu0 0.0
        %1284 = vmatpush.msra.mxu0 0.0
        %1285 = vmatpush.msra.mxu0 0.0
        %1286 = vmatpush.msra.mxu0 %v1096
        %1287 = vmatpush.msra.mxu0 %v1092
        %1288 = vmatpush.msra.mxu0 %v1088
        %1289 = vmatpush.msra.mxu0 %v1084
        %1290 = vmatmul.f32.gmra.mxu0 %v1200
        %v1291 = vpop.f32.mrf.mxu0
        %v1292 = vadd.f32 0.0, %v1291
        %1293 = vmatmul.f32.gmra.mxu0 %v1203
        %v1294 = vpop.f32.mrf.mxu0
        %v1295 = vadd.f32 0.0, %v1294
        %1296 = vdwg.mxu0
        %v1297 = vadd.f32 %v1072, %v1223
        %v1298 = vadd.f32 %v1073, %v1246
        %v1299 = vadd.f32 %v1074, %v1269
        %v1300 = vadd.f32 %v1075, %v1292
        %v1301 = vadd.f32 %v1076, %v1226
        %v1302 = vadd.f32 %v1077, %v1249
        %v1303 = vadd.f32 %v1078, %v1272
        %v1304 = vadd.f32 %v1079, %v1295
        %v1305 = vld [vmem:[#allocation4] sm:$0xf]
        %v1307 = vperm.slane %v1305, 0
        %v1308 = vperm.slane %v1305, 1
        %v1309 = vperm.slane %v1305, 2
        %v1310 = vperm.slane %v1305, 3
        %v1315 = vadd.f32 %v1189, %v1307
        %v1316 = vadd.f32 %v1190, %v1308
        %v1317 = vadd.f32 %v1191, %v1309
        %v1318 = vadd.f32 %v1192, %v1310
        %v1319 = vadd.f32 %v1193, %v1307
        %v1320 = vadd.f32 %v1194, %v1308
        %v1321 = vadd.f32 %v1195, %v1309
        %v1322 = vadd.f32 %v1196, %v1310
        %v1323 = vmax.f32 %v1315, 0.0
        %v1324 = vmax.f32 %v1316, 0.0
        %v1325 = vmax.f32 %v1317, 0.0
        %v1326 = vmax.f32 %v1318, 0.0
        %v1327 = vmax.f32 %v1319, 0.0
        %v1328 = vmax.f32 %v1320, 0.0
        %v1329 = vmax.f32 %v1321, 0.0
        %v1330 = vmax.f32 %v1322, 0.0
        %v1331 = vadd.f32 %v1297, %v1307
        %v1332 = vadd.f32 %v1298, %v1308
        %v1333 = vadd.f32 %v1299, %v1309
        %v1334 = vadd.f32 %v1300, %v1310
        %v1335 = vadd.f32 %v1301, %v1307
        %v1336 = vadd.f32 %v1302, %v1308
        %v1337 = vadd.f32 %v1303, %v1309
        %v1338 = vadd.f32 %v1304, %v1310
        %v1339 = vmax.f32 %v1331, 0.0
        %v1340 = vmax.f32 %v1332, 0.0
        %v1341 = vmax.f32 %v1333, 0.0
        %v1342 = vmax.f32 %v1334, 0.0
        %v1343 = vmax.f32 %v1335, 0.0
        %v1344 = vmax.f32 %v1336, 0.0
        %v1345 = vmax.f32 %v1337, 0.0
        %v1346 = vmax.f32 %v1338, 0.0
        %v1347 = vmax.f32 %v1323, %v1339
        %v1348 = vmax.f32 %v1324, %v1340
        %v1349 = vmax.f32 %v1325, %v1341
        %v1350 = vmax.f32 %v1326, %v1342
        %v1351 = vmax.f32 %v1327, %v1343
        %v1352 = vmax.f32 %v1328, %v1344
        %v1353 = vmax.f32 %v1329, %v1345
        %v1354 = vmax.f32 %v1330, %v1346
        %v1355 = vmax.f32 %v1347, %v1349
        %v1356 = vmax.f32 %v1348, %v1350
        %v1357 = vmax.f32 %v1351, %v1353
        %v1358 = vmax.f32 %v1352, %v1354
        %1359 = vst [vmem:[%s202] sm:$0xff] %v1355
        %vm1360 = vcmask 785408
        %1361 = vst.msk [vmem:[%s202 + $0x8] sm:$0xff] %vm1360, %v1356
        %1362 = vst [vmem:[%s202 + $0x10] sm:$0x3f] %v1357
        %vm1363 = vcmask 783360
        %1364 = vst.msk [vmem:[%s202 + $0x18] sm:$0x3f] %vm1363, %v1358
        %p1365 = scmp.lt.s32.totalorder %s16, 1
        %s1366 = scalar_select %p1365, %s16, 1
        %s1367 = smul.addr %s1366, 4
        %s1368 = smul.addr %s1367, 8
        %s1369 = scalar_lea.vmem %s3, %s1368
        // Predicated region
        $region41: #{cnn_forward.3} parent=31 // pred_check
          %p1370 = pneg %p102
        $region42: #{cnn_forward.3} parent=31 // pred_check_branch
          %1372 = sbr.rel (%p1370) target = $region44
        $region43: #{cnn_forward.3} parent=31 // pred_region
          _
        $region44: #{cnn_forward.3} parent=31 // pred_fallthru
          _
      $region32: #{cnn_forward.3} parent=5 // pred_fallthru
        _
      %p1373 = scmp.le.s32.totalorder 2, %s11
      // Predicated region
      $region45: #{cnn_forward.3} parent=5 // pred_check
        %p1374 = pneg %p1373
      $region46: #{cnn_forward.3} parent=5 // pred_check_branch
        %1376 = sbr.rel (%p1374) target = $region48
      $region47: #{cnn_forward.3} parent=5 // pred_region
        %s1377 = ssub.s32 %s11, 2
        // Predicated region
        $region49: #{cnn_forward.3} parent=47 // pred_check
          %p1378 = pneg %p108
        $region50: #{cnn_forward.3} parent=47 // pred_check_branch
          %1380 = sbr.rel (%p1378) target = $region52
        $region51: #{cnn_forward.3} parent=47 // pred_region
          %p1381 = scmp.lt.s32.totalorder %s17, 1
          %s1382 = scalar_select %p1381, %s17, 1
          %s1383 = smul.addr %s1382, 4
          %s1384 = smul.addr %s1383, 8
          %s1385 = scalar_lea.vmem %s3, %s1384
        $region52: #{cnn_forward.3} parent=47 // pred_fallthru
          _
      $region48: #{cnn_forward.3} parent=5 // pred_fallthru
        _
    $region6: #{cnn_forward.3} parent=1 // loop_footer
      %s15 = sadd.s32 1, %s11
    $region7: #{cnn_forward.3} parent=1 // loop_footer_branch
      %10 = sbr.rel target = $region3
    $region8: #{cnn_forward.3} parent=1 // loop_exit
      _
    %1386 = vsyncpa [#allocation3], 1
    %s1387 = scalar_lea.sflag [#allocation3], 1
    %1388 = vsyncpa %s1387, 1
    %1389 = vsyncpa [#allocation5], 1

// kernel: cnn_forward.4
$region0: #{cnn_forward.4}
  #allocation0 [shape = 'u32[]', space=smem, size = 0x4, offset = 0x4, fixed_abs, tag = 'smem constant byte address 0x4 - core index']
  #allocation1 [shape = 'u32[72,128]{1,0:T(1,128)}', space=vmem, size = 0x9000, scoped, tag = 'internal scratch']
  %s0 = inlined_call_operand.vmem [shape: f32[2,2,9,288], index: 0, kind: input, shape index: {}]
  %s1 = inlined_call_operand.hbm [shape: f32[5,288,512], index: 1, kind: input, shape index: {}]
  %s2 = inlined_call_operand.hbm [shape: f32[1,512], index: 2, kind: input, shape index: {}]
  %s3 = inlined_call_operand.vmem [shape: f32[2,7,224], index: 3, kind: output, shape index: {}]
  %s4 = sld [smem:[#allocation0]]
  $region53: #{cnn_forward.4} parent=0
    _
  %s6 = ssub.s32 1, %s4
  %s7 = scalar_select 0, %s6, %s4
  $region1: #{cnn_forward.4} parent=0
    #allocation2 [shape = 'u8[2949120]{0}', space=vmem, size = 0x2d0000, scoped, tag = 'input window, operand 1, single buffered']
    #allocation3 [shape = 's32[2]{0}', space=sflag, size = 0x8, scoped, tag = 'scoped memory for cnn_forward.4']
    #allocation4 [shape = 'u8[2048]{0}', space=vmem, size = 0x800, scoped, tag = 'input window, operand 2, single buffered']
    #allocation5 [shape = 's32[1]{0}', space=sflag, size = 0x4, scoped, tag = 'scoped memory for cnn_forward.4']
    %8 = vsyncpa [#allocation3], 0
    %9 = vsyncpa [#allocation5], 0
    loop: start=0, step=1, limit=4
    $region2: #{cnn_forward.4} parent=1 // loop_pre_header
      _
    $region3: #{cnn_forward.4} parent=1 // loop_header
      %s11 = sphi 0, %s15
      %p12 = scmp.ge.s32.totalorder %s11, 4
      %s21 = sphi 0, %s23
      %s24 = sphi 0, %s21
      %s25 = sphi 0, %s24
      %s41 = sphi 0, %s25
      %s45 = sphi 0, %s45
      %s47 = sphi 0, %s45
      %s48 = sphi 0, %s47
      %s62 = sphi 0, %s48
      %s66 = sphi 0, %s66
      %s68 = sphi 0, %s66
      %s69 = sphi 0, %s68
      %s83 = sphi 0, %s69
      %s89 = sphi 0, %s91
      %s92 = sphi 0, %s89
      %s93 = sphi 0, %s92
      %s109 = sphi 0, %s93
    $region4: #{cnn_forward.4} parent=1 // loop_header_branch
      %14 = sbr.rel (%p12) target = $region8
    $region5: #{cnn_forward.4} parent=1 // loop_body
      %s16 = ssub.s32 %s11, 1
      %s17 = ssub.s32 %s11, 2
      %s18 = sadd.s32 %s11, 1
      %s19 = ssub.s32 %s11, %s18
      %p20 = scmp.eq.s32.totalorder %s19, 0
      %s22 = sadd.s32 %s21, 1
      %s23 = scalar_select %p20, %s21, %s22
      %p26 = pneg %p20
      %p27 = scmp.eq.s32.totalorder %s11, 1
      %p28 = por %p26, %p27
      %p29 = scmp.ne.s32.totalorder %s21, %s24
      %p30 = scmp.eq.s32.totalorder %s11, 0
      %p31 = por %p29, %p30
      %p32 = scmp.ne.s32.totalorder %s21, %s24
      %p33 = scmp.eq.s32.totalorder %s16, 1
      %p34 = por %p32, %p33
      %p35 = scmp.ne.s32.totalorder %s24, %s25
      %p36 = scmp.eq.s32.totalorder %s16, 0
      %p37 = por %p35, %p36
      %p38 = scmp.ne.s32.totalorder %s24, %s25
      %p39 = scmp.eq.s32.totalorder %s17, 1
      %p40 = por %p38, %p39
      %p42 = scmp.ne.s32.totalorder %s25, %s41
      %p43 = scmp.eq.s32.totalorder %s17, 0
      %p44 = por %p42, %p43
      %s46 = sadd.s32 %s45, 1
      %p49 = scmp.eq.s32.totalorder %s11, 1
      %p50 = scmp.ne.s32.totalorder %s45, %s47
      %p51 = scmp.eq.s32.totalorder %s11, 0
      %p52 = por %p50, %p51
      %p53 = scmp.ne.s32.totalorder %s45, %s47
      %p54 = scmp.eq.s32.totalorder %s16, 1
      %p55 = por %p53, %p54
      %p56 = scmp.ne.s32.totalorder %s47, %s48
      %p57 = scmp.eq.s32.totalorder %s16, 0
      %p58 = por %p56, %p57
      %p59 = scmp.ne.s32.totalorder %s47, %s48
      %p60 = scmp.eq.s32.totalorder %s17, 1
      %p61 = por %p59, %p60
      %p63 = scmp.ne.s32.totalorder %s48, %s62
      %p64 = scmp.eq.s32.totalorder %s17, 0
      %p65 = por %p63, %p64
      %s67 = sadd.s32 %s66, 1
      %p70 = scmp.eq.s32.totalorder %s11, 1
      %p71 = scmp.ne.s32.totalorder %s66, %s68
      %p72 = scmp.eq.s32.totalorder %s11, 0
      %p73 = por %p71, %p72
      %p74 = scmp.ne.s32.totalorder %s66, %s68
      %p75 = scmp.eq.s32.totalorder %s16, 1
      %p76 = por %p74, %p75
      %p77 = scmp.ne.s32.totalorder %s68, %s69
      %p78 = scmp.eq.s32.totalorder %s16, 0
      %p79 = por %p77, %p78
      %p80 = scmp.ne.s32.totalorder %s68, %s69
      %p81 = scmp.eq.s32.totalorder %s17, 1
      %p82 = por %p80, %p81
      %p84 = scmp.ne.s32.totalorder %s69, %s83
      %p85 = scmp.eq.s32.totalorder %s17, 0
      %p86 = por %p84, %p85
      %s87 = ssub.s32 %s11, %s18
      %p88 = scmp.eq.s32.totalorder %s87, 0
      %s90 = sadd.s32 %s89, 1
      %s91 = scalar_select %p88, %s89, %s90
      %p94 = pneg %p88
      %p95 = scmp.eq.s32.totalorder %s11, 1
      %p96 = por %p94, %p95
      %p97 = scmp.ne.s32.totalorder %s89, %s92
      %p98 = scmp.eq.s32.totalorder %s11, 0
      %p99 = por %p97, %p98
      %p100 = scmp.ne.s32.totalorder %s89, %s92
      %p101 = scmp.eq.s32.totalorder %s16, 1
      %p102 = por %p100, %p101
      %p103 = scmp.ne.s32.totalorder %s92, %s93
      %p104 = scmp.eq.s32.totalorder %s16, 0
      %p105 = por %p103, %p104
      %p106 = scmp.ne.s32.totalorder %s92, %s93
      %p107 = scmp.eq.s32.totalorder %s17, 1
      %p108 = por %p106, %p107
      %p110 = scmp.ne.s32.totalorder %s93, %s109
      %p111 = scmp.eq.s32.totalorder %s17, 0
      %p112 = por %p110, %p111
      %p113 = scmp.le.s32.totalorder 1, %s11
      %p114 = scmp.lt.s32.totalorder %s11, 3
      %p115 = pnand %p113, %p114
      %p116 = pneg %p115
      // Predicated region
      $region9: #{cnn_forward.4} parent=5 // pred_check
        _
      $region10: #{cnn_forward.4} parent=5 // pred_check_branch
        %118 = sbr.rel (%p115) target = $region12
      $region11: #{cnn_forward.4} parent=5 // pred_region
        %s119 = ssub.s32 %s11, 1
        // Predicated region
        $region13: #{cnn_forward.4} parent=11 // pred_check
          %p120 = pneg %p58
        $region14: #{cnn_forward.4} parent=11 // pred_check_branch
          %122 = sbr.rel (%p120) target = $region16
        $region15: #{cnn_forward.4} parent=11 // pred_region
          %124 = vsyncadd [#allocation3], 0
          %s125 = sshll.u32 %s1, 4
          %s126 = int_to_ptr.hbm [resolvable:$true] %s125
          %s127 = sshll.u32 [#allocation2], 4
          %s128 = int_to_ptr.vmem [resolvable:$true] %s127
          %133 = dma.hbm_to_vmem [thread:$0]  %s126, 92160, %s128, [#allocation3], 512, 512, 32
        $region16: #{cnn_forward.4} parent=11 // pred_fallthru
          _
        // Predicated region
        $region17: #{cnn_forward.4} parent=11 // pred_check
          %p134 = pneg %p79
        $region18: #{cnn_forward.4} parent=11 // pred_check_branch
          %136 = sbr.rel (%p134) target = $region20
        $region19: #{cnn_forward.4} parent=11 // pred_region
          %138 = vsyncadd [#allocation5], 0
          %s140 = sshll.u32 %s2, 4
          %s141 = int_to_ptr.hbm [resolvable:$true] %s140
          %s142 = sshll.u32 [#allocation4], 4
          %s143 = int_to_ptr.vmem [resolvable:$true] %s142
          %145 = dma.hbm_to_vmem [thread:$0]  %s141, 64, %s143, [#allocation5]
        $region20: #{cnn_forward.4} parent=11 // pred_fallthru
          _
      $region12: #{cnn_forward.4} parent=5 // pred_fallthru
        _
      %p146 = scmp.lt.s32.totalorder %s11, 2
      // Predicated region
      $region21: #{cnn_forward.4} parent=5 // pred_check
        %p147 = pneg %p146
      $region22: #{cnn_forward.4} parent=5 // pred_check_branch
        %149 = sbr.rel (%p147) target = $region24
      $region23: #{cnn_forward.4} parent=5 // pred_region
        // Predicated region
        $region25: #{cnn_forward.4} parent=23 // pred_check
          %p150 = pneg %p31
        $region26: #{cnn_forward.4} parent=23 // pred_check_branch
          %152 = sbr.rel (%p150) target = $region28
        $region27: #{cnn_forward.4} parent=23 // pred_region
          %p153 = scmp.lt.s32.totalorder %s11, 1
          %s154 = scalar_select %p153, %s11, 1
          %s155 = smul.addr %s154, 12
          %s156 = smul.addr %s155, 8
          %s157 = scalar_lea.vmem %s0, %s156
        $region28: #{cnn_forward.4} parent=23 // pred_fallthru
          _
      $region24: #{cnn_forward.4} parent=5 // pred_fallthru
        _
      %p158 = scmp.le.s32.totalorder 1, %s11
      %p159 = scmp.lt.s32.totalorder %s11, 3
      %p160 = pnand %p158, %p159
      %p161 = pneg %p160
      // Predicated region
      $region29: #{cnn_forward.4} parent=5 // pred_check
        _
      $region30: #{cnn_forward.4} parent=5 // pred_check_branch
        %163 = sbr.rel (%p160) target = $region32
      $region31: #{cnn_forward.4} parent=5 // pred_region
        %s164 = ssub.s32 %s11, 1
        // Predicated region
        $region33: #{cnn_forward.4} parent=31 // pred_check
          %p165 = pneg %p58
        $region34: #{cnn_forward.4} parent=31 // pred_check_branch
          %167 = sbr.rel (%p165) target = $region36
        $region35: #{cnn_forward.4} parent=31 // pred_region
          %169 = dma.done [#allocation3], 92160
        $region36: #{cnn_forward.4} parent=31 // pred_fallthru
          _
        // Predicated region
        $region37: #{cnn_forward.4} parent=31 // pred_check
          %p170 = pneg %p79
        $region38: #{cnn_forward.4} parent=31 // pred_check_branch
          %172 = sbr.rel (%p170) target = $region40
        $region39: #{cnn_forward.4} parent=31 // pred_region
          %174 = dma.done [#allocation5], 64
        $region40: #{cnn_forward.4} parent=31 // pred_fallthru
          _
        %p175 = scmp.lt.s32.totalorder %s16, 1
        %s176 = scalar_select %p175, %s16, 1
        %s177 = smul.addr %s176, 12
        %s178 = smul.addr %s177, 8
        %s179 = scalar_lea.vmem %s0, %s178
        %p180 = pneg %p37
        %p181 = pneg %p34
        %p182 = pneg %p58
        %p183 = pneg %p55
        %p184 = pneg %p79
        %p185 = pneg %p76
        %p186 = pneg %p105
        %p187 = pneg %p102
        %p188 = scmp.lt.s32.totalorder %s16, 1
        %s189 = scalar_select %p188, %s16, 1
        %s190 = smul.addr %s189, 2
        %s191 = smul.addr %s190, 8
        %s192 = scalar_lea.vmem %s3, %s191
        %p193 = scmp.lt.s32.totalorder %s16, 1
        %s194 = scalar_select %p193, %s16, 1
        %s195 = smul.addr %s194, 12
        %s196 = smul.addr %s195, 8
        %s197 = scalar_lea.vmem %s0, %s196
        %p198 = scmp.lt.s32.totalorder %s16, 1
        %s199 = scalar_select %p198, %s16, 1
        %s200 = smul.addr %s199, 2
        %s201 = smul.addr %s200, 8
        %s202 = scalar_lea.vmem %s3, %s201
        %v203 = vld [vmem:[#allocation2] sm:$0xff]
        %v204 = vld [vmem:[#allocation2 + $0x8] sm:$0xff]
        %v205 = vld [vmem:[#allocation2 + $0x10] sm:$0xff]
        %v206 = vld [vmem:[#allocation2 + $0x18] sm:$0xff]
        %v207 = vld [vmem:[#allocation2 + $0x20] sm:$0xff]
        %v208 = vld [vmem:[#allocation2 + $0x28] sm:$0xff]
        %v209 = vld [vmem:[#allocation2 + $0x30] sm:$0xff]
        %v210 = vld [vmem:[#allocation2 + $0x38] sm:$0xff]
        %v211 = vld [vmem:[#allocation2 + $0x40] sm:$0xff]
        %v212 = vld [vmem:[#allocation2 + $0x48] sm:$0xff]
        %v213 = vld [vmem:[#allocation2 + $0x50] sm:$0xff]
        %v214 = vld [vmem:[#allocation2 + $0x58] sm:$0xff]
        %v215 = vld [vmem:[#allocation2 + $0x60] sm:$0xff]
        %v216 = vld [vmem:[#allocation2 + $0x68] sm:$0xff]
        %v217 = vld [vmem:[#allocation2 + $0x70] sm:$0xff]
        %v218 = vld [vmem:[#allocation2 + $0x78] sm:$0xff]
        %v219 = vld [vmem:[#allocation2 + $0x80] sm:$0xff]
        %v220 = vld [vmem:[#allocation2 + $0x88] sm:$0xff]
        %v221 = vld [vmem:[#allocation2 + $0x90] sm:$0xff]
        %v222 = vld [vmem:[#allocation2 + $0x98] sm:$0xff]
        %v223 = vld [vmem:[#allocation2 + $0xa0] sm:$0xff]
        %v224 = vld [vmem:[#allocation2 + $0xa8] sm:$0xff]
        %v225 = vld [vmem:[#allocation2 + $0xb0] sm:$0xff]
        %v226 = vld [vmem:[#allocation2 + $0xb8] sm:$0xff]
        %v227 = vld [vmem:[#allocation2 + $0xc0] sm:$0xff]
        %v228 = vld [vmem:[#allocation2 + $0xc8] sm:$0xff]
        %v229 = vld [vmem:[#allocation2 + $0xd0] sm:$0xff]
        %v230 = vld [vmem:[#allocation2 + $0xd8] sm:$0xff]
        %v231 = vld [vmem:[#allocation2 + $0xe0] sm:$0xff]
        %v232 = vld [vmem:[#allocation2 + $0xe8] sm:$0xff]
        %v233 = vld [vmem:[#allocation2 + $0xf0] sm:$0xff]
        %v234 = vld [vmem:[#allocation2 + $0xf8] sm:$0xff]
        %v235 = vld [vmem:[#allocation2 + $0x100] sm:$0xff]
        %v236 = vld [vmem:[#allocation2 + $0x108] sm:$0xff]
        %v237 = vld [vmem:[#allocation2 + $0x110] sm:$0xff]
        %v238 = vld [vmem:[#allocation2 + $0x118] sm:$0xff]
        %v239 = vld [vmem:[#allocation2 + $0x120] sm:$0xff]
        %v240 = vld [vmem:[#allocation2 + $0x128] sm:$0xff]
        %v241 = vld [vmem:[#allocation2 + $0x130] sm:$0xff]
        %v242 = vld [vmem:[#allocation2 + $0x138] sm:$0xff]
        %v243 = vld [vmem:[#allocation2 + $0x140] sm:$0xff]
        %v244 = vld [vmem:[#allocation2 + $0x148] sm:$0xff]
        %v245 = vld [vmem:[#allocation2 + $0x150] sm:$0xff]
        %v246 = vld [vmem:[#allocation2 + $0x158] sm:$0xff]
        %v247 = vld [vmem:[#allocation2 + $0x160] sm:$0xff]
        %v248 = vld [vmem:[#allocation2 + $0x168] sm:$0xff]
        %v249 = vld [vmem:[#allocation2 + $0x170] sm:$0xff]
        %v250 = vld [vmem:[#allocation2 + $0x178] sm:$0xff]
        %v251 = vld [vmem:[#allocation2 + $0x180] sm:$0xff]
        %v252 = vld [vmem:[#allocation2 + $0x188] sm:$0xff]
        %v253 = vld [vmem:[#allocation2 + $0x190] sm:$0xff]
        %v254 = vld [vmem:[#allocation2 + $0x198] sm:$0xff]
        %v255 = vld [vmem:[#allocation2 + $0x1a0] sm:$0xff]
        %v256 = vld [vmem:[#allocation2 + $0x1a8] sm:$0xff]
        %v257 = vld [vmem:[#allocation2 + $0x1b0] sm:$0xff]
        %v258 = vld [vmem:[#allocation2 + $0x1b8] sm:$0xff]
        %v259 = vld [vmem:[#allocation2 + $0x1c0] sm:$0xff]
        %v260 = vld [vmem:[#allocation2 + $0x1c8] sm:$0xff]
        %v261 = vld [vmem:[#allocation2 + $0x1d0] sm:$0xff]
        %v262 = vld [vmem:[#allocation2 + $0x1d8] sm:$0xff]
        %v263 = vld [vmem:[#allocation2 + $0x1e0] sm:$0xff]
        %v264 = vld [vmem:[#allocation2 + $0x1e8] sm:$0xff]
        %v265 = vld [vmem:[#allocation2 + $0x1f0] sm:$0xff]
        %v266 = vld [vmem:[#allocation2 + $0x1f8] sm:$0xff]
        %v267 = vld [vmem:[#allocation2 + $0x200] sm:$0xff]
        %v268 = vld [vmem:[#allocation2 + $0x208] sm:$0xff]
        %v269 = vld [vmem:[#allocation2 + $0x210] sm:$0xff]
        %v270 = vld [vmem:[#allocation2 + $0x218] sm:$0xff]
        %v271 = vld [vmem:[#allocation2 + $0x220] sm:$0xff]
        %v272 = vld [vmem:[#allocation2 + $0x228] sm:$0xff]
        %v273 = vld [vmem:[#allocation2 + $0x230] sm:$0xff]
        %v274 = vld [vmem:[#allocation2 + $0x238] sm:$0xff]
        %v275 = vld [vmem:[#allocation2 + $0x240] sm:$0xff]
        %v276 = vld [vmem:[#allocation2 + $0x248] sm:$0xff]
        %v277 = vld [vmem:[#allocation2 + $0x250] sm:$0xff]
        %v278 = vld [vmem:[#allocation2 + $0x258] sm:$0xff]
        %v279 = vld [vmem:[#allocation2 + $0x260] sm:$0xff]
        %v280 = vld [vmem:[#allocation2 + $0x268] sm:$0xff]
        %v281 = vld [vmem:[#allocation2 + $0x270] sm:$0xff]
        %v282 = vld [vmem:[#allocation2 + $0x278] sm:$0xff]
        %v283 = vld [vmem:[#allocation2 + $0x280] sm:$0xff]
        %v284 = vld [vmem:[#allocation2 + $0x288] sm:$0xff]
        %v285 = vld [vmem:[#allocation2 + $0x290] sm:$0xff]
        %v286 = vld [vmem:[#allocation2 + $0x298] sm:$0xff]
        %v287 = vld [vmem:[#allocation2 + $0x2a0] sm:$0xff]
        %v288 = vld [vmem:[#allocation2 + $0x2a8] sm:$0xff]
        %v289 = vld [vmem:[#allocation2 + $0x2b0] sm:$0xff]
        %v290 = vld [vmem:[#allocation2 + $0x2b8] sm:$0xff]
        %v291 = vld [vmem:[#allocation2 + $0x2c0] sm:$0xff]
        %v292 = vld [vmem:[#allocation2 + $0x2c8] sm:$0xff]
        %v293 = vld [vmem:[#allocation2 + $0x2d0] sm:$0xff]
        %v294 = vld [vmem:[#allocation2 + $0x2d8] sm:$0xff]
        %v295 = vld [vmem:[#allocation2 + $0x2e0] sm:$0xff]
        %v296 = vld [vmem:[#allocation2 + $0x2e8] sm:$0xff]
        %v297 = vld [vmem:[#allocation2 + $0x2f0] sm:$0xff]
        %v298 = vld [vmem:[#allocation2 + $0x2f8] sm:$0xff]
        %v299 = vld [vmem:[#allocation2 + $0x300] sm:$0xff]
        %v300 = vld [vmem:[#allocation2 + $0x308] sm:$0xff]
        %v301 = vld [vmem:[#allocation2 + $0x310] sm:$0xff]
        %v302 = vld [vmem:[#allocation2 + $0x318] sm:$0xff]
        %v303 = vld [vmem:[#allocation2 + $0x320] sm:$0xff]
        %v304 = vld [vmem:[#allocation2 + $0x328] sm:$0xff]
        %v305 = vld [vmem:[#allocation2 + $0x330] sm:$0xff]
        %v306 = vld [vmem:[#allocation2 + $0x338] sm:$0xff]
        %v307 = vld [vmem:[#allocation2 + $0x340] sm:$0xff]
        %v308 = vld [vmem:[#allocation2 + $0x348] sm:$0xff]
        %v309 = vld [vmem:[#allocation2 + $0x350] sm:$0xff]
        %v310 = vld [vmem:[#allocation2 + $0x358] sm:$0xff]
        %v311 = vld [vmem:[#allocation2 + $0x360] sm:$0xff]
        %v312 = vld [vmem:[#allocation2 + $0x368] sm:$0xff]
        %v313 = vld [vmem:[#allocation2 + $0x370] sm:$0xff]
        %v314 = vld [vmem:[#allocation2 + $0x378] sm:$0xff]
        %v315 = vld [vmem:[#allocation2 + $0x380] sm:$0xff]
        %v316 = vld [vmem:[#allocation2 + $0x388] sm:$0xff]
        %v317 = vld [vmem:[#allocation2 + $0x390] sm:$0xff]
        %v318 = vld [vmem:[#allocation2 + $0x398] sm:$0xff]
        %v319 = vld [vmem:[#allocation2 + $0x3a0] sm:$0xff]
        %v320 = vld [vmem:[#allocation2 + $0x3a8] sm:$0xff]
        %v321 = vld [vmem:[#allocation2 + $0x3b0] sm:$0xff]
        %v322 = vld [vmem:[#allocation2 + $0x3b8] sm:$0xff]
        %v323 = vld [vmem:[#allocation2 + $0x3c0] sm:$0xff]
        %v324 = vld [vmem:[#allocation2 + $0x3c8] sm:$0xff]
        %v325 = vld [vmem:[#allocation2 + $0x3d0] sm:$0xff]
        %v326 = vld [vmem:[#allocation2 + $0x3d8] sm:$0xff]
        %v327 = vld [vmem:[#allocation2 + $0x3e0] sm:$0xff]
        %v328 = vld [vmem:[#allocation2 + $0x3e8] sm:$0xff]
        %v329 = vld [vmem:[#allocation2 + $0x3f0] sm:$0xff]
        %v330 = vld [vmem:[#allocation2 + $0x3f8] sm:$0xff]
        %v331 = vld [vmem:[#allocation2 + $0x400] sm:$0xff]
        %v332 = vld [vmem:[#allocation2 + $0x408] sm:$0xff]
        %v333 = vld [vmem:[#allocation2 + $0x410] sm:$0xff]
        %v334 = vld [vmem:[#allocation2 + $0x418] sm:$0xff]
        %v335 = vld [vmem:[#allocation2 + $0x420] sm:$0xff]
        %v336 = vld [vmem:[#allocation2 + $0x428] sm:$0xff]
        %v337 = vld [vmem:[#allocation2 + $0x430] sm:$0xff]
        %v338 = vld [vmem:[#allocation2 + $0x438] sm:$0xff]
        %v339 = vld [vmem:[#allocation2 + $0x440] sm:$0xff]
        %v340 = vld [vmem:[#allocation2 + $0x448] sm:$0xff]
        %v341 = vld [vmem:[#allocation2 + $0x450] sm:$0xff]
        %v342 = vld [vmem:[#allocation2 + $0x458] sm:$0xff]
        %v343 = vld [vmem:[#allocation2 + $0x460] sm:$0xff]
        %v344 = vld [vmem:[#allocation2 + $0x468] sm:$0xff]
        %v345 = vld [vmem:[#allocation2 + $0x470] sm:$0xff]
        %v346 = vld [vmem:[#allocation2 + $0x478] sm:$0xff]
        %v347 = vld [vmem:[%s197] sm:$0x7f]
        %v348 = vld [vmem:[%s197 + $0x8] sm:$0x7f]
        %v349 = vld [vmem:[%s197 + $0x10] sm:$0x7f]
        %s350 = scalar_lea.vmem %s197, 48
        %v351 = vld [vmem:[%s350] sm:$0x7f]
        %v352 = vld [vmem:[%s350 + $0x8] sm:$0x7f]
        %v353 = vld [vmem:[%s350 + $0x10] sm:$0x7f]
        %s354 = scalar_lea.vmem [#allocation2], 1152
        %v355 = vld [vmem:[%s354] sm:$0xff]
        %v356 = vld [vmem:[%s354 + $0x8] sm:$0xff]
        %v357 = vld [vmem:[%s354 + $0x10] sm:$0xff]
        %v358 = vld [vmem:[%s354 + $0x18] sm:$0xff]
        %v359 = vld [vmem:[%s354 + $0x20] sm:$0xff]
        %v360 = vld [vmem:[%s354 + $0x28] sm:$0xff]
        %v361 = vld [vmem:[%s354 + $0x30] sm:$0xff]
        %v362 = vld [vmem:[%s354 + $0x38] sm:$0xff]
        %v363 = vld [vmem:[%s354 + $0x40] sm:$0xff]
        %v364 = vld [vmem:[%s354 + $0x48] sm:$0xff]
        %v365 = vld [vmem:[%s354 + $0x50] sm:$0xff]
        %v366 = vld [vmem:[%s354 + $0x58] sm:$0xff]
        %v367 = vld [vmem:[%s354 + $0x60] sm:$0xff]
        %v368 = vld [vmem:[%s354 + $0x68] sm:$0xff]
        %v369 = vld [vmem:[%s354 + $0x70] sm:$0xff]
        %v370 = vld [vmem:[%s354 + $0x78] sm:$0xff]
        %v371 = vld [vmem:[%s354 + $0x80] sm:$0xff]
        %v372 = vld [vmem:[%s354 + $0x88] sm:$0xff]
        %v373 = vld [vmem:[%s354 + $0x90] sm:$0xff]
        %v374 = vld [vmem:[%s354 + $0x98] sm:$0xff]
        %v375 = vld [vmem:[%s354 + $0xa0] sm:$0xff]
        %v376 = vld [vmem:[%s354 + $0xa8] sm:$0xff]
        %v377 = vld [vmem:[%s354 + $0xb0] sm:$0xff]
        %v378 = vld [vmem:[%s354 + $0xb8] sm:$0xff]
        %v379 = vld [vmem:[%s354 + $0xc0] sm:$0xff]
        %v380 = vld [vmem:[%s354 + $0xc8] sm:$0xff]
        %v381 = vld [vmem:[%s354 + $0xd0] sm:$0xff]
        %v382 = vld [vmem:[%s354 + $0xd8] sm:$0xff]
        %v383 = vld [vmem:[%s354 + $0xe0] sm:$0xff]
        %v384 = vld [vmem:[%s354 + $0xe8] sm:$0xff]
        %v385 = vld [vmem:[%s354 + $0xf0] sm:$0xff]
        %v386 = vld [vmem:[%s354 + $0xf8] sm:$0xff]
        %v387 = vld [vmem:[%s354 + $0x100] sm:$0xff]
        %v388 = vld [vmem:[%s354 + $0x108] sm:$0xff]
        %v389 = vld [vmem:[%s354 + $0x110] sm:$0xff]
        %v390 = vld [vmem:[%s354 + $0x118] sm:$0xff]
        %v391 = vld [vmem:[%s354 + $0x120] sm:$0xff]
        %v392 = vld [vmem:[%s354 + $0x128] sm:$0xff]
        %v393 = vld [vmem:[%s354 + $0x130] sm:$0xff]
        %v394 = vld [vmem:[%s354 + $0x138] sm:$0xff]
        %v395 = vld [vmem:[%s354 + $0x140] sm:$0xff]
        %v396 = vld [vmem:[%s354 + $0x148] sm:$0xff]
        %v397 = vld [vmem:[%s354 + $0x150] sm:$0xff]
        %v398 = vld [vmem:[%s354 + $0x158] sm:$0xff]
        %v399 = vld [vmem:[%s354 + $0x160] sm:$0xff]
        %v400 = vld [vmem:[%s354 + $0x168] sm:$0xff]
        %v401 = vld [vmem:[%s354 + $0x170] sm:$0xff]
        %v402 = vld [vmem:[%s354 + $0x178] sm:$0xff]
        %v403 = vld [vmem:[%s354 + $0x180] sm:$0xff]
        %v404 = vld [vmem:[%s354 + $0x188] sm:$0xff]
        %v405 = vld [vmem:[%s354 + $0x190] sm:$0xff]
        %v406 = vld [vmem:[%s354 + $0x198] sm:$0xff]
        %v407 = vld [vmem:[%s354 + $0x1a0] sm:$0xff]
        %v408 = vld [vmem:[%s354 + $0x1a8] sm:$0xff]
        %v409 = vld [vmem:[%s354 + $0x1b0] sm:$0xff]
        %v410 = vld [vmem:[%s354 + $0x1b8] sm:$0xff]
        %v411 = vld [vmem:[%s354 + $0x1c0] sm:$0xff]
        %v412 = vld [vmem:[%s354 + $0x1c8] sm:$0xff]
        %v413 = vld [vmem:[%s354 + $0x1d0] sm:$0xff]
        %v414 = vld [vmem:[%s354 + $0x1d8] sm:$0xff]
        %v415 = vld [vmem:[%s354 + $0x1e0] sm:$0xff]
        %v416 = vld [vmem:[%s354 + $0x1e8] sm:$0xff]
        %v417 = vld [vmem:[%s354 + $0x1f0] sm:$0xff]
        %v418 = vld [vmem:[%s354 + $0x1f8] sm:$0xff]
        %v419 = vld [vmem:[%s354 + $0x200] sm:$0xff]
        %v420 = vld [vmem:[%s354 + $0x208] sm:$0xff]
        %v421 = vld [vmem:[%s354 + $0x210] sm:$0xff]
        %v422 = vld [vmem:[%s354 + $0x218] sm:$0xff]
        %v423 = vld [vmem:[%s354 + $0x220] sm:$0xff]
        %v424 = vld [vmem:[%s354 + $0x228] sm:$0xff]
        %v425 = vld [vmem:[%s354 + $0x230] sm:$0xff]
        %v426 = vld [vmem:[%s354 + $0x238] sm:$0xff]
        %v427 = vld [vmem:[%s354 + $0x240] sm:$0xff]
        %v428 = vld [vmem:[%s354 + $0x248] sm:$0xff]
        %v429 = vld [vmem:[%s354 + $0x250] sm:$0xff]
        %v430 = vld [vmem:[%s354 + $0x258] sm:$0xff]
        %v431 = vld [vmem:[%s354 + $0x260] sm:$0xff]
        %v432 = vld [vmem:[%s354 + $0x268] sm:$0xff]
        %v433 = vld [vmem:[%s354 + $0x270] sm:$0xff]
        %v434 = vld [vmem:[%s354 + $0x278] sm:$0xff]
        %v435 = vld [vmem:[%s354 + $0x280] sm:$0xff]
        %v436 = vld [vmem:[%s354 + $0x288] sm:$0xff]
        %v437 = vld [vmem:[%s354 + $0x290] sm:$0xff]
        %v438 = vld [vmem:[%s354 + $0x298] sm:$0xff]
        %v439 = vld [vmem:[%s354 + $0x2a0] sm:$0xff]
        %v440 = vld [vmem:[%s354 + $0x2a8] sm:$0xff]
        %v441 = vld [vmem:[%s354 + $0x2b0] sm:$0xff]
        %v442 = vld [vmem:[%s354 + $0x2b8] sm:$0xff]
        %v443 = vld [vmem:[%s354 + $0x2c0] sm:$0xff]
        %v444 = vld [vmem:[%s354 + $0x2c8] sm:$0xff]
        %v445 = vld [vmem:[%s354 + $0x2d0] sm:$0xff]
        %v446 = vld [vmem:[%s354 + $0x2d8] sm:$0xff]
        %v447 = vld [vmem:[%s354 + $0x2e0] sm:$0xff]
        %v448 = vld [vmem:[%s354 + $0x2e8] sm:$0xff]
        %v449 = vld [vmem:[%s354 + $0x2f0] sm:$0xff]
        %v450 = vld [vmem:[%s354 + $0x2f8] sm:$0xff]
        %v451 = vld [vmem:[%s354 + $0x300] sm:$0xff]
        %v452 = vld [vmem:[%s354 + $0x308] sm:$0xff]
        %v453 = vld [vmem:[%s354 + $0x310] sm:$0xff]
        %v454 = vld [vmem:[%s354 + $0x318] sm:$0xff]
        %v455 = vld [vmem:[%s354 + $0x320] sm:$0xff]
        %v456 = vld [vmem:[%s354 + $0x328] sm:$0xff]
        %v457 = vld [vmem:[%s354 + $0x330] sm:$0xff]
        %v458 = vld [vmem:[%s354 + $0x338] sm:$0xff]
        %v459 = vld [vmem:[%s354 + $0x340] sm:$0xff]
        %v460 = vld [vmem:[%s354 + $0x348] sm:$0xff]
        %v461 = vld [vmem:[%s354 + $0x350] sm:$0xff]
        %v462 = vld [vmem:[%s354 + $0x358] sm:$0xff]
        %v463 = vld [vmem:[%s354 + $0x360] sm:$0xff]
        %v464 = vld [vmem:[%s354 + $0x368] sm:$0xff]
        %v465 = vld [vmem:[%s354 + $0x370] sm:$0xff]
        %v466 = vld [vmem:[%s354 + $0x378] sm:$0xff]
        %v467 = vld [vmem:[%s354 + $0x380] sm:$0xff]
        %v468 = vld [vmem:[%s354 + $0x388] sm:$0xff]
        %v469 = vld [vmem:[%s354 + $0x390] sm:$0xff]
        %v470 = vld [vmem:[%s354 + $0x398] sm:$0xff]
        %v471 = vld [vmem:[%s354 + $0x3a0] sm:$0xff]
        %v472 = vld [vmem:[%s354 + $0x3a8] sm:$0xff]
        %v473 = vld [vmem:[%s354 + $0x3b0] sm:$0xff]
        %v474 = vld [vmem:[%s354 + $0x3b8] sm:$0xff]
        %v475 = vld [vmem:[%s354 + $0x3c0] sm:$0xff]
        %v476 = vld [vmem:[%s354 + $0x3c8] sm:$0xff]
        %v477 = vld [vmem:[%s354 + $0x3d0] sm:$0xff]
        %v478 = vld [vmem:[%s354 + $0x3d8] sm:$0xff]
        %v479 = vld [vmem:[%s354 + $0x3e0] sm:$0xff]
        %v480 = vld [vmem:[%s354 + $0x3e8] sm:$0xff]
        %v481 = vld [vmem:[%s354 + $0x3f0] sm:$0xff]
        %v482 = vld [vmem:[%s354 + $0x3f8] sm:$0xff]
        %v483 = vld [vmem:[%s354 + $0x400] sm:$0xff]
        %v484 = vld [vmem:[%s354 + $0x408] sm:$0xff]
        %v485 = vld [vmem:[%s354 + $0x410] sm:$0xff]
        %v486 = vld [vmem:[%s354 + $0x418] sm:$0xff]
        %v487 = vld [vmem:[%s354 + $0x420] sm:$0xff]
        %v488 = vld [vmem:[%s354 + $0x428] sm:$0xff]
        %v489 = vld [vmem:[%s354 + $0x430] sm:$0xff]
        %v490 = vld [vmem:[%s354 + $0x438] sm:$0xff]
        %v491 = vld [vmem:[%s354 + $0x440] sm:$0xff]
        %v492 = vld [vmem:[%s354 + $0x448] sm:$0xff]
        %v493 = vld [vmem:[%s354 + $0x450] sm:$0xff]
        %v494 = vld [vmem:[%s354 + $0x458] sm:$0xff]
        %v495 = vld [vmem:[%s354 + $0x460] sm:$0xff]
        %v496 = vld [vmem:[%s354 + $0x468] sm:$0xff]
        %v497 = vld [vmem:[%s354 + $0x470] sm:$0xff]
        %v498 = vld [vmem:[%s354 + $0x478] sm:$0xff]
        %vm499 = vcmask 261120
        %v501 = vsel %vm499, %v353, 0
        %503 = vmatpush.msra.mxu0 %v415
        %504 = vmatpush.msra.mxu0 %v411
        %505 = vmatpush.msra.mxu0 %v407
        %506 = vmatpush.msra.mxu0 %v403
        %507 = vmatpush.msra.mxu0 %v399
        %508 = vmatpush.msra.mxu0 %v395
        %509 = vmatpush.msra.mxu0 %v391
        %510 = vmatpush.msra.mxu0 %v387
        %511 = vmatpush.msra.mxu0 %v383
        %512 = vmatpush.msra.mxu0 %v379
        %513 = vmatpush.msra.mxu0 %v375
        %514 = vmatpush.msra.mxu0 %v371
        %515 = vmatpush.msra.mxu0 %v367
        %516 = vmatpush.msra.mxu0 %v363
        %517 = vmatpush.msra.mxu0 %v359
        %518 = vmatpush.msra.mxu0 %v355
        %519 = vmatmul.f32.gmra.mxu0 %v351
        %v520 = vpop.f32.mrf.mxu0
        %v521 = vadd.f32 0.0, %v520
        %522 = vdwg.mxu0
        %523 = vmatpush.msra.mxu0 %v479
        %524 = vmatpush.msra.mxu0 %v475
        %525 = vmatpush.msra.mxu0 %v471
        %526 = vmatpush.msra.mxu0 %v467
        %527 = vmatpush.msra.mxu0 %v463
        %528 = vmatpush.msra.mxu0 %v459
        %529 = vmatpush.msra.mxu0 %v455
        %530 = vmatpush.msra.mxu0 %v451
        %531 = vmatpush.msra.mxu0 %v447
        %532 = vmatpush.msra.mxu0 %v443
        %533 = vmatpush.msra.mxu0 %v439
        %534 = vmatpush.msra.mxu0 %v435
        %535 = vmatpush.msra.mxu0 %v431
        %536 = vmatpush.msra.mxu0 %v427
        %537 = vmatpush.msra.mxu0 %v423
        %538 = vmatpush.msra.mxu0 %v419
        %539 = vmatmul.f32.gmra.mxu0 %v352
        %v540 = vpop.f32.mrf.mxu0
        %v541 = vadd.f32 %v521, %v540
        %542 = vdwg.mxu0
        %543 = vmatpush.msra.mxu0 0.0
        %544 = vmatpush.msra.mxu0 0.0
        %545 = vmatpush.msra.mxu0 0.0
        %546 = vmatpush.msra.mxu0 0.0
        %547 = vmatpush.msra.mxu0 0.0
        %548 = vmatpush.msra.mxu0 0.0
        %549 = vmatpush.msra.mxu0 0.0
        %550 = vmatpush.msra.mxu0 0.0
        %551 = vmatpush.msra.mxu0 0.0
        %552 = vmatpush.msra.mxu0 0.0
        %553 = vmatpush.msra.mxu0 0.0
        %554 = vmatpush.msra.mxu0 0.0
        %555 = vmatpush.msra.mxu0 %v495
        %556 = vmatpush.msra.mxu0 %v491
        %557 = vmatpush.msra.mxu0 %v487
        %558 = vmatpush.msra.mxu0 %v483
        %559 = vmatmul.f32.gmra.mxu0 %v501
        %v560 = vpop.f32.mrf.mxu0
        %v561 = vadd.f32 %v541, %v560
        %562 = vdwg.mxu0
        %563 = vmatpush.msra.mxu0 %v416
        %564 = vmatpush.msra.mxu0 %v412
        %565 = vmatpush.msra.mxu0 %v408
        %566 = vmatpush.msra.mxu0 %v404
        %567 = vmatpush.msra.mxu0 %v400
        %568 = vmatpush.msra.mxu0 %v396
        %569 = vmatpush.msra.mxu0 %v392
        %570 = vmatpush.msra.mxu0 %v388
        %571 = vmatpush.msra.mxu0 %v384
        %572 = vmatpush.msra.mxu0 %v380
        %573 = vmatpush.msra.mxu0 %v376
        %574 = vmatpush.msra.mxu0 %v372
        %575 = vmatpush.msra.mxu0 %v368
        %576 = vmatpush.msra.mxu0 %v364
        %577 = vmatpush.msra.mxu0 %v360
        %578 = vmatpush.msra.mxu0 %v356
        %579 = vmatmul.f32.gmra.mxu0 %v351
        %v580 = vpop.f32.mrf.mxu0
        %v581 = vadd.f32 0.0, %v580
        %582 = vdwg.mxu0
        %583 = vmatpush.msra.mxu0 %v480
        %584 = vmatpush.msra.mxu0 %v476
        %585 = vmatpush.msra.mxu0 %v472
        %586 = vmatpush.msra.mxu0 %v468
        %587 = vmatpush.msra.mxu0 %v464
        %588 = vmatpush.msra.mxu0 %v460
        %589 = vmatpush.msra.mxu0 %v456
        %590 = vmatpush.msra.mxu0 %v452
        %591 = vmatpush.msra.mxu0 %v448
        %592 = vmatpush.msra.mxu0 %v444
        %593 = vmatpush.msra.mxu0 %v440
        %594 = vmatpush.msra.mxu0 %v436
        %595 = vmatpush.msra.mxu0 %v432
        %596 = vmatpush.msra.mxu0 %v428
        %597 = vmatpush.msra.mxu0 %v424
        %598 = vmatpush.msra.mxu0 %v420
        %599 = vmatmul.f32.gmra.mxu0 %v352
        %v600 = vpop.f32.mrf.mxu0
        %v601 = vadd.f32 %v581, %v600
        %602 = vdwg.mxu0
        %603 = vmatpush.msra.mxu0 0.0
        %604 = vmatpush.msra.mxu0 0.0
        %605 = vmatpush.msra.mxu0 0.0
        %606 = vmatpush.msra.mxu0 0.0
        %607 = vmatpush.msra.mxu0 0.0
        %608 = vmatpush.msra.mxu0 0.0
        %609 = vmatpush.msra.mxu0 0.0
        %610 = vmatpush.msra.mxu0 0.0
        %611 = vmatpush.msra.mxu0 0.0
        %612 = vmatpush.msra.mxu0 0.0
        %613 = vmatpush.msra.mxu0 0.0
        %614 = vmatpush.msra.mxu0 0.0
        %615 = vmatpush.msra.mxu0 %v496
        %616 = vmatpush.msra.mxu0 %v492
        %617 = vmatpush.msra.mxu0 %v488
        %618 = vmatpush.msra.mxu0 %v484
        %619 = vmatmul.f32.gmra.mxu0 %v501
        %v620 = vpop.f32.mrf.mxu0
        %v621 = vadd.f32 %v601, %v620
        %622 = vdwg.mxu0
        %623 = vmatpush.msra.mxu0 %v417
        %624 = vmatpush.msra.mxu0 %v413
        %625 = vmatpush.msra.mxu0 %v409
        %626 = vmatpush.msra.mxu0 %v405
        %627 = vmatpush.msra.mxu0 %v401
        %628 = vmatpush.msra.mxu0 %v397
        %629 = vmatpush.msra.mxu0 %v393
        %630 = vmatpush.msra.mxu0 %v389
        %631 = vmatpush.msra.mxu0 %v385
        %632 = vmatpush.msra.mxu0 %v381
        %633 = vmatpush.msra.mxu0 %v377
        %634 = vmatpush.msra.mxu0 %v373
        %635 = vmatpush.msra.mxu0 %v369
        %636 = vmatpush.msra.mxu0 %v365
        %637 = vmatpush.msra.mxu0 %v361
        %638 = vmatpush.msra.mxu0 %v357
        %639 = vmatmul.f32.gmra.mxu0 %v351
        %v640 = vpop.f32.mrf.mxu0
        %v641 = vadd.f32 0.0, %v640
        %642 = vdwg.mxu0
        %643 = vmatpush.msra.mxu0 %v481
        %644 = vmatpush.msra.mxu0 %v477
        %645 = vmatpush.msra.mxu0 %v473
        %646 = vmatpush.msra.mxu0 %v469
        %647 = vmatpush.msra.mxu0 %v465
        %648 = vmatpush.msra.mxu0 %v461
        %649 = vmatpush.msra.mxu0 %v457
        %650 = vmatpush.msra.mxu0 %v453
        %651 = vmatpush.msra.mxu0 %v449
        %652 = vmatpush.msra.mxu0 %v445
        %653 = vmatpush.msra.mxu0 %v441
        %654 = vmatpush.msra.mxu0 %v437
        %655 = vmatpush.msra.mxu0 %v433
        %656 = vmatpush.msra.mxu0 %v429
        %657 = vmatpush.msra.mxu0 %v425
        %658 = vmatpush.msra.mxu0 %v421
        %659 = vmatmul.f32.gmra.mxu0 %v352
        %v660 = vpop.f32.mrf.mxu0
        %v661 = vadd.f32 %v641, %v660
        %662 = vdwg.mxu0
        %663 = vmatpush.msra.mxu0 0.0
        %664 = vmatpush.msra.mxu0 0.0
        %665 = vmatpush.msra.mxu0 0.0
        %666 = vmatpush.msra.mxu0 0.0
        %667 = vmatpush.msra.mxu0 0.0
        %668 = vmatpush.msra.mxu0 0.0
        %669 = vmatpush.msra.mxu0 0.0
        %670 = vmatpush.msra.mxu0 0.0
        %671 = vmatpush.msra.mxu0 0.0
        %672 = vmatpush.msra.mxu0 0.0
        %673 = vmatpush.msra.mxu0 0.0
        %674 = vmatpush.msra.mxu0 0.0
        %675 = vmatpush.msra.mxu0 %v497
        %676 = vmatpush.msra.mxu0 %v493
        %677 = vmatpush.msra.mxu0 %v489
        %678 = vmatpush.msra.mxu0 %v485
        %679 = vmatmul.f32.gmra.mxu0 %v501
        %v680 = vpop.f32.mrf.mxu0
        %v681 = vadd.f32 %v661, %v680
        %682 = vdwg.mxu0
        %683 = vmatpush.msra.mxu0 %v418
        %684 = vmatpush.msra.mxu0 %v414
        %685 = vmatpush.msra.mxu0 %v410
        %686 = vmatpush.msra.mxu0 %v406
        %687 = vmatpush.msra.mxu0 %v402
        %688 = vmatpush.msra.mxu0 %v398
        %689 = vmatpush.msra.mxu0 %v394
        %690 = vmatpush.msra.mxu0 %v390
        %691 = vmatpush.msra.mxu0 %v386
        %692 = vmatpush.msra.mxu0 %v382
        %693 = vmatpush.msra.mxu0 %v378
        %694 = vmatpush.msra.mxu0 %v374
        %695 = vmatpush.msra.mxu0 %v370
        %696 = vmatpush.msra.mxu0 %v366
        %697 = vmatpush.msra.mxu0 %v362
        %698 = vmatpush.msra.mxu0 %v358
        %699 = vmatmul.f32.gmra.mxu0 %v351
        %v700 = vpop.f32.mrf.mxu0
        %v701 = vadd.f32 0.0, %v700
        %702 = vdwg.mxu0
        %703 = vmatpush.msra.mxu0 %v482
        %704 = vmatpush.msra.mxu0 %v478
        %705 = vmatpush.msra.mxu0 %v474
        %706 = vmatpush.msra.mxu0 %v470
        %707 = vmatpush.msra.mxu0 %v466
        %708 = vmatpush.msra.mxu0 %v462
        %709 = vmatpush.msra.mxu0 %v458
        %710 = vmatpush.msra.mxu0 %v454
        %711 = vmatpush.msra.mxu0 %v450
        %712 = vmatpush.msra.mxu0 %v446
        %713 = vmatpush.msra.mxu0 %v442
        %714 = vmatpush.msra.mxu0 %v438
        %715 = vmatpush.msra.mxu0 %v434
        %716 = vmatpush.msra.mxu0 %v430
        %717 = vmatpush.msra.mxu0 %v426
        %718 = vmatpush.msra.mxu0 %v422
        %719 = vmatmul.f32.gmra.mxu0 %v352
        %v720 = vpop.f32.mrf.mxu0
        %v721 = vadd.f32 %v701, %v720
        %722 = vdwg.mxu0
        %723 = vmatpush.msra.mxu0 0.0
        %724 = vmatpush.msra.mxu0 0.0
        %725 = vmatpush.msra.mxu0 0.0
        %726 = vmatpush.msra.mxu0 0.0
        %727 = vmatpush.msra.mxu0 0.0
        %728 = vmatpush.msra.mxu0 0.0
        %729 = vmatpush.msra.mxu0 0.0
        %730 = vmatpush.msra.mxu0 0.0
        %731 = vmatpush.msra.mxu0 0.0
        %732 = vmatpush.msra.mxu0 0.0
        %733 = vmatpush.msra.mxu0 0.0
        %734 = vmatpush.msra.mxu0 0.0
        %735 = vmatpush.msra.mxu0 %v498
        %736 = vmatpush.msra.mxu0 %v494
        %737 = vmatpush.msra.mxu0 %v490
        %738 = vmatpush.msra.mxu0 %v486
        %739 = vmatmul.f32.gmra.mxu0 %v501
        %v740 = vpop.f32.mrf.mxu0
        %v741 = vadd.f32 %v721, %v740
        %742 = vdwg.mxu0
        %v744 = vsel %vm499, %v349, 0
        %746 = vmatpush.msra.mxu0 %v263
        %747 = vmatpush.msra.mxu0 %v259
        %748 = vmatpush.msra.mxu0 %v255
        %749 = vmatpush.msra.mxu0 %v251
        %750 = vmatpush.msra.mxu0 %v247
        %751 = vmatpush.msra.mxu0 %v243
        %752 = vmatpush.msra.mxu0 %v239
        %753 = vmatpush.msra.mxu0 %v235
        %754 = vmatpush.msra.mxu0 %v231
        %755 = vmatpush.msra.mxu0 %v227
        %756 = vmatpush.msra.mxu0 %v223
        %757 = vmatpush.msra.mxu0 %v219
        %758 = vmatpush.msra.mxu0 %v215
        %759 = vmatpush.msra.mxu0 %v211
        %760 = vmatpush.msra.mxu0 %v207
        %761 = vmatpush.msra.mxu0 %v203
        %762 = vmatmul.f32.gmra.mxu0 %v347
        %v763 = vpop.f32.mrf.mxu0
        %v764 = vadd.f32 %v561, %v763
        %765 = vdwg.mxu0
        %766 = vmatpush.msra.mxu0 %v327
        %767 = vmatpush.msra.mxu0 %v323
        %768 = vmatpush.msra.mxu0 %v319
        %769 = vmatpush.msra.mxu0 %v315
        %770 = vmatpush.msra.mxu0 %v311
        %771 = vmatpush.msra.mxu0 %v307
        %772 = vmatpush.msra.mxu0 %v303
        %773 = vmatpush.msra.mxu0 %v299
        %774 = vmatpush.msra.mxu0 %v295
        %775 = vmatpush.msra.mxu0 %v291
        %776 = vmatpush.msra.mxu0 %v287
        %777 = vmatpush.msra.mxu0 %v283
        %778 = vmatpush.msra.mxu0 %v279
        %779 = vmatpush.msra.mxu0 %v275
        %780 = vmatpush.msra.mxu0 %v271
        %781 = vmatpush.msra.mxu0 %v267
        %782 = vmatmul.f32.gmra.mxu0 %v348
        %v783 = vpop.f32.mrf.mxu0
        %v784 = vadd.f32 %v764, %v783
        %785 = vdwg.mxu0
        %786 = vmatpush.msra.mxu0 0.0
        %787 = vmatpush.msra.mxu0 0.0
        %788 = vmatpush.msra.mxu0 0.0
        %789 = vmatpush.msra.mxu0 0.0
        %790 = vmatpush.msra.mxu0 0.0
        %791 = vmatpush.msra.mxu0 0.0
        %792 = vmatpush.msra.mxu0 0.0
        %793 = vmatpush.msra.mxu0 0.0
        %794 = vmatpush.msra.mxu0 0.0
        %795 = vmatpush.msra.mxu0 0.0
        %796 = vmatpush.msra.mxu0 0.0
        %797 = vmatpush.msra.mxu0 0.0
        %798 = vmatpush.msra.mxu0 %v343
        %799 = vmatpush.msra.mxu0 %v339
        %800 = vmatpush.msra.mxu0 %v335
        %801 = vmatpush.msra.mxu0 %v331
        %802 = vmatmul.f32.gmra.mxu0 %v744
        %v803 = vpop.f32.mrf.mxu0
        %v804 = vadd.f32 %v784, %v803
        %805 = vdwg.mxu0
        %806 = vmatpush.msra.mxu0 %v264
        %807 = vmatpush.msra.mxu0 %v260
        %808 = vmatpush.msra.mxu0 %v256
        %809 = vmatpush.msra.mxu0 %v252
        %810 = vmatpush.msra.mxu0 %v248
        %811 = vmatpush.msra.mxu0 %v244
        %812 = vmatpush.msra.mxu0 %v240
        %813 = vmatpush.msra.mxu0 %v236
        %814 = vmatpush.msra.mxu0 %v232
        %815 = vmatpush.msra.mxu0 %v228
        %816 = vmatpush.msra.mxu0 %v224
        %817 = vmatpush.msra.mxu0 %v220
        %818 = vmatpush.msra.mxu0 %v216
        %819 = vmatpush.msra.mxu0 %v212
        %820 = vmatpush.msra.mxu0 %v208
        %821 = vmatpush.msra.mxu0 %v204
        %822 = vmatmul.f32.gmra.mxu0 %v347
        %v823 = vpop.f32.mrf.mxu0
        %v824 = vadd.f32 %v621, %v823
        %825 = vdwg.mxu0
        %826 = vmatpush.msra.mxu0 %v328
        %827 = vmatpush.msra.mxu0 %v324
        %828 = vmatpush.msra.mxu0 %v320
        %829 = vmatpush.msra.mxu0 %v316
        %830 = vmatpush.msra.mxu0 %v312
        %831 = vmatpush.msra.mxu0 %v308
        %832 = vmatpush.msra.mxu0 %v304
        %833 = vmatpush.msra.mxu0 %v300
        %834 = vmatpush.msra.mxu0 %v296
        %835 = vmatpush.msra.mxu0 %v292
        %836 = vmatpush.msra.mxu0 %v288
        %837 = vmatpush.msra.mxu0 %v284
        %838 = vmatpush.msra.mxu0 %v280
        %839 = vmatpush.msra.mxu0 %v276
        %840 = vmatpush.msra.mxu0 %v272
        %841 = vmatpush.msra.mxu0 %v268
        %842 = vmatmul.f32.gmra.mxu0 %v348
        %v843 = vpop.f32.mrf.mxu0
        %v844 = vadd.f32 %v824, %v843
        %845 = vdwg.mxu0
        %846 = vmatpush.msra.mxu0 0.0
        %847 = vmatpush.msra.mxu0 0.0
        %848 = vmatpush.msra.mxu0 0.0
        %849 = vmatpush.msra.mxu0 0.0
        %850 = vmatpush.msra.mxu0 0.0
        %851 = vmatpush.msra.mxu0 0.0
        %852 = vmatpush.msra.mxu0 0.0
        %853 = vmatpush.msra.mxu0 0.0
        %854 = vmatpush.msra.mxu0 0.0
        %855 = vmatpush.msra.mxu0 0.0
        %856 = vmatpush.msra.mxu0 0.0
        %857 = vmatpush.msra.mxu0 0.0
        %858 = vmatpush.msra.mxu0 %v344
        %859 = vmatpush.msra.mxu0 %v340
        %860 = vmatpush.msra.mxu0 %v336
        %861 = vmatpush.msra.mxu0 %v332
        %862 = vmatmul.f32.gmra.mxu0 %v744
        %v863 = vpop.f32.mrf.mxu0
        %v864 = vadd.f32 %v844, %v863
        %865 = vdwg.mxu0
        %866 = vmatpush.msra.mxu0 %v265
        %867 = vmatpush.msra.mxu0 %v261
        %868 = vmatpush.msra.mxu0 %v257
        %869 = vmatpush.msra.mxu0 %v253
        %870 = vmatpush.msra.mxu0 %v249
        %871 = vmatpush.msra.mxu0 %v245
        %872 = vmatpush.msra.mxu0 %v241
        %873 = vmatpush.msra.mxu0 %v237
        %874 = vmatpush.msra.mxu0 %v233
        %875 = vmatpush.msra.mxu0 %v229
        %876 = vmatpush.msra.mxu0 %v225
        %877 = vmatpush.msra.mxu0 %v221
        %878 = vmatpush.msra.mxu0 %v217
        %879 = vmatpush.msra.mxu0 %v213
        %880 = vmatpush.msra.mxu0 %v209
        %881 = vmatpush.msra.mxu0 %v205
        %882 = vmatmul.f32.gmra.mxu0 %v347
        %v883 = vpop.f32.mrf.mxu0
        %v884 = vadd.f32 %v681, %v883
        %885 = vdwg.mxu0
        %886 = vmatpush.msra.mxu0 %v329
        %887 = vmatpush.msra.mxu0 %v325
        %888 = vmatpush.msra.mxu0 %v321
        %889 = vmatpush.msra.mxu0 %v317
        %890 = vmatpush.msra.mxu0 %v313
        %891 = vmatpush.msra.mxu0 %v309
        %892 = vmatpush.msra.mxu0 %v305
        %893 = vmatpush.msra.mxu0 %v301
        %894 = vmatpush.msra.mxu0 %v297
        %895 = vmatpush.msra.mxu0 %v293
        %896 = vmatpush.msra.mxu0 %v289
        %897 = vmatpush.msra.mxu0 %v285
        %898 = vmatpush.msra.mxu0 %v281
        %899 = vmatpush.msra.mxu0 %v277
        %900 = vmatpush.msra.mxu0 %v273
        %901 = vmatpush.msra.mxu0 %v269
        %902 = vmatmul.f32.gmra.mxu0 %v348
        %v903 = vpop.f32.mrf.mxu0
        %v904 = vadd.f32 %v884, %v903
        %905 = vdwg.mxu0
        %906 = vmatpush.msra.mxu0 0.0
        %907 = vmatpush.msra.mxu0 0.0
        %908 = vmatpush.msra.mxu0 0.0
        %909 = vmatpush.msra.mxu0 0.0
        %910 = vmatpush.msra.mxu0 0.0
        %911 = vmatpush.msra.mxu0 0.0
        %912 = vmatpush.msra.mxu0 0.0
        %913 = vmatpush.msra.mxu0 0.0
        %914 = vmatpush.msra.mxu0 0.0
        %915 = vmatpush.msra.mxu0 0.0
        %916 = vmatpush.msra.mxu0 0.0
        %917 = vmatpush.msra.mxu0 0.0
        %918 = vmatpush.msra.mxu0 %v345
        %919 = vmatpush.msra.mxu0 %v341
        %920 = vmatpush.msra.mxu0 %v337
        %921 = vmatpush.msra.mxu0 %v333
        %922 = vmatmul.f32.gmra.mxu0 %v744
        %v923 = vpop.f32.mrf.mxu0
        %v924 = vadd.f32 %v904, %v923
        %925 = vdwg.mxu0
        %926 = vmatpush.msra.mxu0 %v266
        %927 = vmatpush.msra.mxu0 %v262
        %928 = vmatpush.msra.mxu0 %v258
        %929 = vmatpush.msra.mxu0 %v254
        %930 = vmatpush.msra.mxu0 %v250
        %931 = vmatpush.msra.mxu0 %v246
        %932 = vmatpush.msra.mxu0 %v242
        %933 = vmatpush.msra.mxu0 %v238
        %934 = vmatpush.msra.mxu0 %v234
        %935 = vmatpush.msra.mxu0 %v230
        %936 = vmatpush.msra.mxu0 %v226
        %937 = vmatpush.msra.mxu0 %v222
        %938 = vmatpush.msra.mxu0 %v218
        %939 = vmatpush.msra.mxu0 %v214
        %940 = vmatpush.msra.mxu0 %v210
        %941 = vmatpush.msra.mxu0 %v206
        %942 = vmatmul.f32.gmra.mxu0 %v347
        %v943 = vpop.f32.mrf.mxu0
        %v944 = vadd.f32 %v741, %v943
        %945 = vdwg.mxu0
        %946 = vmatpush.msra.mxu0 %v330
        %947 = vmatpush.msra.mxu0 %v326
        %948 = vmatpush.msra.mxu0 %v322
        %949 = vmatpush.msra.mxu0 %v318
        %950 = vmatpush.msra.mxu0 %v314
        %951 = vmatpush.msra.mxu0 %v310
        %952 = vmatpush.msra.mxu0 %v306
        %953 = vmatpush.msra.mxu0 %v302
        %954 = vmatpush.msra.mxu0 %v298
        %955 = vmatpush.msra.mxu0 %v294
        %956 = vmatpush.msra.mxu0 %v290
        %957 = vmatpush.msra.mxu0 %v286
        %958 = vmatpush.msra.mxu0 %v282
        %959 = vmatpush.msra.mxu0 %v278
        %960 = vmatpush.msra.mxu0 %v274
        %961 = vmatpush.msra.mxu0 %v270
        %962 = vmatmul.f32.gmra.mxu0 %v348
        %v963 = vpop.f32.mrf.mxu0
        %v964 = vadd.f32 %v944, %v963
        %965 = vdwg.mxu0
        %966 = vmatpush.msra.mxu0 0.0
        %967 = vmatpush.msra.mxu0 0.0
        %968 = vmatpush.msra.mxu0 0.0
        %969 = vmatpush.msra.mxu0 0.0
        %970 = vmatpush.msra.mxu0 0.0
        %971 = vmatpush.msra.mxu0 0.0
        %972 = vmatpush.msra.mxu0 0.0
        %973 = vmatpush.msra.mxu0 0.0
        %974 = vmatpush.msra.mxu0 0.0
        %975 = vmatpush.msra.mxu0 0.0
        %976 = vmatpush.msra.mxu0 0.0
        %977 = vmatpush.msra.mxu0 0.0
        %978 = vmatpush.msra.mxu0 %v346
        %979 = vmatpush.msra.mxu0 %v342
        %980 = vmatpush.msra.mxu0 %v338
        %981 = vmatpush.msra.mxu0 %v334
        %982 = vmatmul.f32.gmra.mxu0 %v744
        %v983 = vpop.f32.mrf.mxu0
        %v984 = vadd.f32 %v964, %v983
        %985 = vdwg.mxu0
        %v986 = vld [vmem:[%s197] sm:$0xfe]
        %v987 = vld [vmem:[%s197 + $0x8] sm:$0xfe]
        %v988 = vld [vmem:[%s197 + $0x10] sm:$0xfe]
        %v992 = vrot.slane %v986, 1
        %v993 = vrot.slane %v987, 1
        %v994 = vrot.slane %v988, 1
        %v997 = vsel %vm499, %v994, 0
        %999 = vmatpush.msra.mxu0 %v415
        %1000 = vmatpush.msra.mxu0 %v411
        %1001 = vmatpush.msra.mxu0 %v407
        %1002 = vmatpush.msra.mxu0 %v403
        %1003 = vmatpush.msra.mxu0 %v399
        %1004 = vmatpush.msra.mxu0 %v395
        %1005 = vmatpush.msra.mxu0 %v391
        %1006 = vmatpush.msra.mxu0 %v387
        %1007 = vmatpush.msra.mxu0 %v383
        %1008 = vmatpush.msra.mxu0 %v379
        %1009 = vmatpush.msra.mxu0 %v375
        %1010 = vmatpush.msra.mxu0 %v371
        %1011 = vmatpush.msra.mxu0 %v367
        %1012 = vmatpush.msra.mxu0 %v363
        %1013 = vmatpush.msra.mxu0 %v359
        %1014 = vmatpush.msra.mxu0 %v355
        %1015 = vmatmul.f32.gmra.mxu0 %v992
        %v1016 = vpop.f32.mrf.mxu0
        %v1017 = vadd.f32 0.0, %v1016
        %1018 = vdwg.mxu0
        %1019 = vmatpush.msra.mxu0 %v479
        %1020 = vmatpush.msra.mxu0 %v475
        %1021 = vmatpush.msra.mxu0 %v471
        %1022 = vmatpush.msra.mxu0 %v467
        %1023 = vmatpush.msra.mxu0 %v463
        %1024 = vmatpush.msra.mxu0 %v459
        %1025 = vmatpush.msra.mxu0 %v455
        %1026 = vmatpush.msra.mxu0 %v451
        %1027 = vmatpush.msra.mxu0 %v447
        %1028 = vmatpush.msra.mxu0 %v443
        %1029 = vmatpush.msra.mxu0 %v439
        %1030 = vmatpush.msra.mxu0 %v435
        %1031 = vmatpush.msra.mxu0 %v431
        %1032 = vmatpush.msra.mxu0 %v427
        %1033 = vmatpush.msra.mxu0 %v423
        %1034 = vmatpush.msra.mxu0 %v419
        %1035 = vmatmul.f32.gmra.mxu0 %v993
        %v1036 = vpop.f32.mrf.mxu0
        %v1037 = vadd.f32 %v1017, %v1036
        %1038 = vdwg.mxu0
        %1039 = vmatpush.msra.mxu0 0.0
        %1040 = vmatpush.msra.mxu0 0.0
        %1041 = vmatpush.msra.mxu0 0.0
        %1042 = vmatpush.msra.mxu0 0.0
        %1043 = vmatpush.msra.mxu0 0.0
        %1044 = vmatpush.msra.mxu0 0.0
        %1045 = vmatpush.msra.mxu0 0.0
        %1046 = vmatpush.msra.mxu0 0.0
        %1047 = vmatpush.msra.mxu0 0.0
        %1048 = vmatpush.msra.mxu0 0.0
        %1049 = vmatpush.msra.mxu0 0.0
        %1050 = vmatpush.msra.mxu0 0.0
        %1051 = vmatpush.msra.mxu0 %v495
        %1052 = vmatpush.msra.mxu0 %v491
        %1053 = vmatpush.msra.mxu0 %v487
        %1054 = vmatpush.msra.mxu0 %v483
        %1055 = vmatmul.f32.gmra.mxu0 %v997
        %v1056 = vpop.f32.mrf.mxu0
        %v1057 = vadd.f32 %v1037, %v1056
        %1058 = vdwg.mxu0
        %1059 = vmatpush.msra.mxu0 %v416
        %1060 = vmatpush.msra.mxu0 %v412
        %1061 = vmatpush.msra.mxu0 %v408
        %1062 = vmatpush.msra.mxu0 %v404
        %1063 = vmatpush.msra.mxu0 %v400
        %1064 = vmatpush.msra.mxu0 %v396
        %1065 = vmatpush.msra.mxu0 %v392
        %1066 = vmatpush.msra.mxu0 %v388
        %1067 = vmatpush.msra.mxu0 %v384
        %1068 = vmatpush.msra.mxu0 %v380
        %1069 = vmatpush.msra.mxu0 %v376
        %1070 = vmatpush.msra.mxu0 %v372
        %1071 = vmatpush.msra.mxu0 %v368
        %1072 = vmatpush.msra.mxu0 %v364
        %1073 = vmatpush.msra.mxu0 %v360
        %1074 = vmatpush.msra.mxu0 %v356
        %1075 = vmatmul.f32.gmra.mxu0 %v992
        %v1076 = vpop.f32.mrf.mxu0
        %v1077 = vadd.f32 0.0, %v1076
        %1078 = vdwg.mxu0
        %1079 = vmatpush.msra.mxu0 %v480
        %1080 = vmatpush.msra.mxu0 %v476
        %1081 = vmatpush.msra.mxu0 %v472
        %1082 = vmatpush.msra.mxu0 %v468
        %1083 = vmatpush.msra.mxu0 %v464
        %1084 = vmatpush.msra.mxu0 %v460
        %1085 = vmatpush.msra.mxu0 %v456
        %1086 = vmatpush.msra.mxu0 %v452
        %1087 = vmatpush.msra.mxu0 %v448
        %1088 = vmatpush.msra.mxu0 %v444
        %1089 = vmatpush.msra.mxu0 %v440
        %1090 = vmatpush.msra.mxu0 %v436
        %1091 = vmatpush.msra.mxu0 %v432
        %1092 = vmatpush.msra.mxu0 %v428
        %1093 = vmatpush.msra.mxu0 %v424
        %1094 = vmatpush.msra.mxu0 %v420
        %1095 = vmatmul.f32.gmra.mxu0 %v993
        %v1096 = vpop.f32.mrf.mxu0
        %v1097 = vadd.f32 %v1077, %v1096
        %1098 = vdwg.mxu0
        %1099 = vmatpush.msra.mxu0 0.0
        %1100 = vmatpush.msra.mxu0 0.0
        %1101 = vmatpush.msra.mxu0 0.0
        %1102 = vmatpush.msra.mxu0 0.0
        %1103 = vmatpush.msra.mxu0 0.0
        %1104 = vmatpush.msra.mxu0 0.0
        %1105 = vmatpush.msra.mxu0 0.0
        %1106 = vmatpush.msra.mxu0 0.0
        %1107 = vmatpush.msra.mxu0 0.0
        %1108 = vmatpush.msra.mxu0 0.0
        %1109 = vmatpush.msra.mxu0 0.0
        %1110 = vmatpush.msra.mxu0 0.0
        %1111 = vmatpush.msra.mxu0 %v496
        %1112 = vmatpush.msra.mxu0 %v492
        %1113 = vmatpush.msra.mxu0 %v488
        %1114 = vmatpush.msra.mxu0 %v484
        %1115 = vmatmul.f32.gmra.mxu0 %v997
        %v1116 = vpop.f32.mrf.mxu0
        %v1117 = vadd.f32 %v1097, %v1116
        %1118 = vdwg.mxu0
        %1119 = vmatpush.msra.mxu0 %v417
        %1120 = vmatpush.msra.mxu0 %v413
        %1121 = vmatpush.msra.mxu0 %v409
        %1122 = vmatpush.msra.mxu0 %v405
        %1123 = vmatpush.msra.mxu0 %v401
        %1124 = vmatpush.msra.mxu0 %v397
        %1125 = vmatpush.msra.mxu0 %v393
        %1126 = vmatpush.msra.mxu0 %v389
        %1127 = vmatpush.msra.mxu0 %v385
        %1128 = vmatpush.msra.mxu0 %v381
        %1129 = vmatpush.msra.mxu0 %v377
        %1130 = vmatpush.msra.mxu0 %v373
        %1131 = vmatpush.msra.mxu0 %v369
        %1132 = vmatpush.msra.mxu0 %v365
        %1133 = vmatpush.msra.mxu0 %v361
        %1134 = vmatpush.msra.mxu0 %v357
        %1135 = vmatmul.f32.gmra.mxu0 %v992
        %v1136 = vpop.f32.mrf.mxu0
        %v1137 = vadd.f32 0.0, %v1136
        %1138 = vdwg.mxu0
        %1139 = vmatpush.msra.mxu0 %v481
        %1140 = vmatpush.msra.mxu0 %v477
        %1141 = vmatpush.msra.mxu0 %v473
        %1142 = vmatpush.msra.mxu0 %v469
        %1143 = vmatpush.msra.mxu0 %v465
        %1144 = vmatpush.msra.mxu0 %v461
        %1145 = vmatpush.msra.mxu0 %v457
        %1146 = vmatpush.msra.mxu0 %v453
        %1147 = vmatpush.msra.mxu0 %v449
        %1148 = vmatpush.msra.mxu0 %v445
        %1149 = vmatpush.msra.mxu0 %v441
        %1150 = vmatpush.msra.mxu0 %v437
        %1151 = vmatpush.msra.mxu0 %v433
        %1152 = vmatpush.msra.mxu0 %v429
        %1153 = vmatpush.msra.mxu0 %v425
        %1154 = vmatpush.msra.mxu0 %v421
        %1155 = vmatmul.f32.gmra.mxu0 %v993
        %v1156 = vpop.f32.mrf.mxu0
        %v1157 = vadd.f32 %v1137, %v1156
        %1158 = vdwg.mxu0
        %1159 = vmatpush.msra.mxu0 0.0
        %1160 = vmatpush.msra.mxu0 0.0
        %1161 = vmatpush.msra.mxu0 0.0
        %1162 = vmatpush.msra.mxu0 0.0
        %1163 = vmatpush.msra.mxu0 0.0
        %1164 = vmatpush.msra.mxu0 0.0
        %1165 = vmatpush.msra.mxu0 0.0
        %1166 = vmatpush.msra.mxu0 0.0
        %1167 = vmatpush.msra.mxu0 0.0
        %1168 = vmatpush.msra.mxu0 0.0
        %1169 = vmatpush.msra.mxu0 0.0
        %1170 = vmatpush.msra.mxu0 0.0
        %1171 = vmatpush.msra.mxu0 %v497
        %1172 = vmatpush.msra.mxu0 %v493
        %1173 = vmatpush.msra.mxu0 %v489
        %1174 = vmatpush.msra.mxu0 %v485
        %1175 = vmatmul.f32.gmra.mxu0 %v997
        %v1176 = vpop.f32.mrf.mxu0
        %v1177 = vadd.f32 %v1157, %v1176
        %1178 = vdwg.mxu0
        %1179 = vmatpush.msra.mxu0 %v418
        %1180 = vmatpush.msra.mxu0 %v414
        %1181 = vmatpush.msra.mxu0 %v410
        %1182 = vmatpush.msra.mxu0 %v406
        %1183 = vmatpush.msra.mxu0 %v402
        %1184 = vmatpush.msra.mxu0 %v398
        %1185 = vmatpush.msra.mxu0 %v394
        %1186 = vmatpush.msra.mxu0 %v390
        %1187 = vmatpush.msra.mxu0 %v386
        %1188 = vmatpush.msra.mxu0 %v382
        %1189 = vmatpush.msra.mxu0 %v378
        %1190 = vmatpush.msra.mxu0 %v374
        %1191 = vmatpush.msra.mxu0 %v370
        %1192 = vmatpush.msra.mxu0 %v366
        %1193 = vmatpush.msra.mxu0 %v362
        %1194 = vmatpush.msra.mxu0 %v358
        %1195 = vmatmul.f32.gmra.mxu0 %v992
        %v1196 = vpop.f32.mrf.mxu0
        %v1197 = vadd.f32 0.0, %v1196
        %1198 = vdwg.mxu0
        %1199 = vmatpush.msra.mxu0 %v482
        %1200 = vmatpush.msra.mxu0 %v478
        %1201 = vmatpush.msra.mxu0 %v474
        %1202 = vmatpush.msra.mxu0 %v470
        %1203 = vmatpush.msra.mxu0 %v466
        %1204 = vmatpush.msra.mxu0 %v462
        %1205 = vmatpush.msra.mxu0 %v458
        %1206 = vmatpush.msra.mxu0 %v454
        %1207 = vmatpush.msra.mxu0 %v450
        %1208 = vmatpush.msra.mxu0 %v446
        %1209 = vmatpush.msra.mxu0 %v442
        %1210 = vmatpush.msra.mxu0 %v438
        %1211 = vmatpush.msra.mxu0 %v434
        %1212 = vmatpush.msra.mxu0 %v430
        %1213 = vmatpush.msra.mxu0 %v426
        %1214 = vmatpush.msra.mxu0 %v422
        %1215 = vmatmul.f32.gmra.mxu0 %v993
        %v1216 = vpop.f32.mrf.mxu0
        %v1217 = vadd.f32 %v1197, %v1216
        %1218 = vdwg.mxu0
        %1219 = vmatpush.msra.mxu0 0.0
        %1220 = vmatpush.msra.mxu0 0.0
        %1221 = vmatpush.msra.mxu0 0.0
        %1222 = vmatpush.msra.mxu0 0.0
        %1223 = vmatpush.msra.mxu0 0.0
        %1224 = vmatpush.msra.mxu0 0.0
        %1225 = vmatpush.msra.mxu0 0.0
        %1226 = vmatpush.msra.mxu0 0.0
        %1227 = vmatpush.msra.mxu0 0.0
        %1228 = vmatpush.msra.mxu0 0.0
        %1229 = vmatpush.msra.mxu0 0.0
        %1230 = vmatpush.msra.mxu0 0.0
        %1231 = vmatpush.msra.mxu0 %v498
        %1232 = vmatpush.msra.mxu0 %v494
        %1233 = vmatpush.msra.mxu0 %v490
        %1234 = vmatpush.msra.mxu0 %v486
        %1235 = vmatmul.f32.gmra.mxu0 %v997
        %v1236 = vpop.f32.mrf.mxu0
        %v1237 = vadd.f32 %v1217, %v1236
        %1238 = vdwg.mxu0
        %1239 = vmatpush.msra.mxu0 %v263
        %1240 = vmatpush.msra.mxu0 %v259
        %1241 = vmatpush.msra.mxu0 %v255
        %1242 = vmatpush.msra.mxu0 %v251
        %1243 = vmatpush.msra.mxu0 %v247
        %1244 = vmatpush.msra.mxu0 %v243
        %1245 = vmatpush.msra.mxu0 %v239
        %1246 = vmatpush.msra.mxu0 %v235
        %1247 = vmatpush.msra.mxu0 %v231
        %1248 = vmatpush.msra.mxu0 %v227
        %1249 = vmatpush.msra.mxu0 %v223
        %1250 = vmatpush.msra.mxu0 %v219
        %1251 = vmatpush.msra.mxu0 %v215
        %1252 = vmatpush.msra.mxu0 %v211
        %1253 = vmatpush.msra.mxu0 %v207
        %1254 = vmatpush.msra.mxu0 %v203
        %1255 = vmatmul.f32.gmra.mxu0 %v351
        %v1256 = vpop.f32.mrf.mxu0
        %v1257 = vadd.f32 %v1057, %v1256
        %1258 = vdwg.mxu0
        %1259 = vmatpush.msra.mxu0 %v327
        %1260 = vmatpush.msra.mxu0 %v323
        %1261 = vmatpush.msra.mxu0 %v319
        %1262 = vmatpush.msra.mxu0 %v315
        %1263 = vmatpush.msra.mxu0 %v311
        %1264 = vmatpush.msra.mxu0 %v307
        %1265 = vmatpush.msra.mxu0 %v303
        %1266 = vmatpush.msra.mxu0 %v299
        %1267 = vmatpush.msra.mxu0 %v295
        %1268 = vmatpush.msra.mxu0 %v291
        %1269 = vmatpush.msra.mxu0 %v287
        %1270 = vmatpush.msra.mxu0 %v283
        %1271 = vmatpush.msra.mxu0 %v279
        %1272 = vmatpush.msra.mxu0 %v275
        %1273 = vmatpush.msra.mxu0 %v271
        %1274 = vmatpush.msra.mxu0 %v267
        %1275 = vmatmul.f32.gmra.mxu0 %v352
        %v1276 = vpop.f32.mrf.mxu0
        %v1277 = vadd.f32 %v1257, %v1276
        %1278 = vdwg.mxu0
        %1279 = vmatpush.msra.mxu0 0.0
        %1280 = vmatpush.msra.mxu0 0.0
        %1281 = vmatpush.msra.mxu0 0.0
        %1282 = vmatpush.msra.mxu0 0.0
        %1283 = vmatpush.msra.mxu0 0.0
        %1284 = vmatpush.msra.mxu0 0.0
        %1285 = vmatpush.msra.mxu0 0.0
        %1286 = vmatpush.msra.mxu0 0.0
        %1287 = vmatpush.msra.mxu0 0.0
        %1288 = vmatpush.msra.mxu0 0.0
        %1289 = vmatpush.msra.mxu0 0.0
        %1290 = vmatpush.msra.mxu0 0.0
        %1291 = vmatpush.msra.mxu0 %v343
        %1292 = vmatpush.msra.mxu0 %v339
        %1293 = vmatpush.msra.mxu0 %v335
        %1294 = vmatpush.msra.mxu0 %v331
        %1295 = vmatmul.f32.gmra.mxu0 %v501
        %v1296 = vpop.f32.mrf.mxu0
        %v1297 = vadd.f32 %v1277, %v1296
        %1298 = vdwg.mxu0
        %1299 = vmatpush.msra.mxu0 %v264
        %1300 = vmatpush.msra.mxu0 %v260
        %1301 = vmatpush.msra.mxu0 %v256
        %1302 = vmatpush.msra.mxu0 %v252
        %1303 = vmatpush.msra.mxu0 %v248
        %1304 = vmatpush.msra.mxu0 %v244
        %1305 = vmatpush.msra.mxu0 %v240
        %1306 = vmatpush.msra.mxu0 %v236
        %1307 = vmatpush.msra.mxu0 %v232
        %1308 = vmatpush.msra.mxu0 %v228
        %1309 = vmatpush.msra.mxu0 %v224
        %1310 = vmatpush.msra.mxu0 %v220
        %1311 = vmatpush.msra.mxu0 %v216
        %1312 = vmatpush.msra.mxu0 %v212
        %1313 = vmatpush.msra.mxu0 %v208
        %1314 = vmatpush.msra.mxu0 %v204
        %1315 = vmatmul.f32.gmra.mxu0 %v351
        %v1316 = vpop.f32.mrf.mxu0
        %v1317 = vadd.f32 %v1117, %v1316
        %1318 = vdwg.mxu0
        %1319 = vmatpush.msra.mxu0 %v328
        %1320 = vmatpush.msra.mxu0 %v324
        %1321 = vmatpush.msra.mxu0 %v320
        %1322 = vmatpush.msra.mxu0 %v316
        %1323 = vmatpush.msra.mxu0 %v312
        %1324 = vmatpush.msra.mxu0 %v308
        %1325 = vmatpush.msra.mxu0 %v304
        %1326 = vmatpush.msra.mxu0 %v300
        %1327 = vmatpush.msra.mxu0 %v296
        %1328 = vmatpush.msra.mxu0 %v292
        %1329 = vmatpush.msra.mxu0 %v288
        %1330 = vmatpush.msra.mxu0 %v284
        %1331 = vmatpush.msra.mxu0 %v280
        %1332 = vmatpush.msra.mxu0 %v276
        %1333 = vmatpush.msra.mxu0 %v272
        %1334 = vmatpush.msra.mxu0 %v268
        %1335 = vmatmul.f32.gmra.mxu0 %v352
        %v1336 = vpop.f32.mrf.mxu0
        %v1337 = vadd.f32 %v1317, %v1336
        %1338 = vdwg.mxu0
        %1339 = vmatpush.msra.mxu0 0.0
        %1340 = vmatpush.msra.mxu0 0.0
        %1341 = vmatpush.msra.mxu0 0.0
        %1342 = vmatpush.msra.mxu0 0.0
        %1343 = vmatpush.msra.mxu0 0.0
        %1344 = vmatpush.msra.mxu0 0.0
        %1345 = vmatpush.msra.mxu0 0.0
        %1346 = vmatpush.msra.mxu0 0.0
        %1347 = vmatpush.msra.mxu0 0.0
        %1348 = vmatpush.msra.mxu0 0.0
        %1349 = vmatpush.msra.mxu0 0.0
        %1350 = vmatpush.msra.mxu0 0.0
        %1351 = vmatpush.msra.mxu0 %v344
        %1352 = vmatpush.msra.mxu0 %v340
        %1353 = vmatpush.msra.mxu0 %v336
        %1354 = vmatpush.msra.mxu0 %v332
        %1355 = vmatmul.f32.gmra.mxu0 %v501
        %v1356 = vpop.f32.mrf.mxu0
        %v1357 = vadd.f32 %v1337, %v1356
        %1358 = vdwg.mxu0
        %1359 = vmatpush.msra.mxu0 %v265
        %1360 = vmatpush.msra.mxu0 %v261
        %1361 = vmatpush.msra.mxu0 %v257
        %1362 = vmatpush.msra.mxu0 %v253
        %1363 = vmatpush.msra.mxu0 %v249
        %1364 = vmatpush.msra.mxu0 %v245
        %1365 = vmatpush.msra.mxu0 %v241
        %1366 = vmatpush.msra.mxu0 %v237
        %1367 = vmatpush.msra.mxu0 %v233
        %1368 = vmatpush.msra.mxu0 %v229
        %1369 = vmatpush.msra.mxu0 %v225
        %1370 = vmatpush.msra.mxu0 %v221
        %1371 = vmatpush.msra.mxu0 %v217
        %1372 = vmatpush.msra.mxu0 %v213
        %1373 = vmatpush.msra.mxu0 %v209
        %1374 = vmatpush.msra.mxu0 %v205
        %1375 = vmatmul.f32.gmra.mxu0 %v351
        %v1376 = vpop.f32.mrf.mxu0
        %v1377 = vadd.f32 %v1177, %v1376
        %1378 = vdwg.mxu0
        %1379 = vmatpush.msra.mxu0 %v329
        %1380 = vmatpush.msra.mxu0 %v325
        %1381 = vmatpush.msra.mxu0 %v321
        %1382 = vmatpush.msra.mxu0 %v317
        %1383 = vmatpush.msra.mxu0 %v313
        %1384 = vmatpush.msra.mxu0 %v309
        %1385 = vmatpush.msra.mxu0 %v305
        %1386 = vmatpush.msra.mxu0 %v301
        %1387 = vmatpush.msra.mxu0 %v297
        %1388 = vmatpush.msra.mxu0 %v293
        %1389 = vmatpush.msra.mxu0 %v289
        %1390 = vmatpush.msra.mxu0 %v285
        %1391 = vmatpush.msra.mxu0 %v281
        %1392 = vmatpush.msra.mxu0 %v277
        %1393 = vmatpush.msra.mxu0 %v273
        %1394 = vmatpush.msra.mxu0 %v269
        %1395 = vmatmul.f32.gmra.mxu0 %v352
        %v1396 = vpop.f32.mrf.mxu0
        %v1397 = vadd.f32 %v1377, %v1396
        %1398 = vdwg.mxu0
        %1399 = vmatpush.msra.mxu0 0.0
        %1400 = vmatpush.msra.mxu0 0.0
        %1401 = vmatpush.msra.mxu0 0.0
        %1402 = vmatpush.msra.mxu0 0.0
        %1403 = vmatpush.msra.mxu0 0.0
        %1404 = vmatpush.msra.mxu0 0.0
        %1405 = vmatpush.msra.mxu0 0.0
        %1406 = vmatpush.msra.mxu0 0.0
        %1407 = vmatpush.msra.mxu0 0.0
        %1408 = vmatpush.msra.mxu0 0.0
        %1409 = vmatpush.msra.mxu0 0.0
        %1410 = vmatpush.msra.mxu0 0.0
        %1411 = vmatpush.msra.mxu0 %v345
        %1412 = vmatpush.msra.mxu0 %v341
        %1413 = vmatpush.msra.mxu0 %v337
        %1414 = vmatpush.msra.mxu0 %v333
        %1415 = vmatmul.f32.gmra.mxu0 %v501
        %v1416 = vpop.f32.mrf.mxu0
        %v1417 = vadd.f32 %v1397, %v1416
        %1418 = vdwg.mxu0
        %1419 = vmatpush.msra.mxu0 %v266
        %1420 = vmatpush.msra.mxu0 %v262
        %1421 = vmatpush.msra.mxu0 %v258
        %1422 = vmatpush.msra.mxu0 %v254
        %1423 = vmatpush.msra.mxu0 %v250
        %1424 = vmatpush.msra.mxu0 %v246
        %1425 = vmatpush.msra.mxu0 %v242
        %1426 = vmatpush.msra.mxu0 %v238
        %1427 = vmatpush.msra.mxu0 %v234
        %1428 = vmatpush.msra.mxu0 %v230
        %1429 = vmatpush.msra.mxu0 %v226
        %1430 = vmatpush.msra.mxu0 %v222
        %1431 = vmatpush.msra.mxu0 %v218
        %1432 = vmatpush.msra.mxu0 %v214
        %1433 = vmatpush.msra.mxu0 %v210
        %1434 = vmatpush.msra.mxu0 %v206
        %1435 = vmatmul.f32.gmra.mxu0 %v351
        %v1436 = vpop.f32.mrf.mxu0
        %v1437 = vadd.f32 %v1237, %v1436
        %1438 = vdwg.mxu0
        %1439 = vmatpush.msra.mxu0 %v330
        %1440 = vmatpush.msra.mxu0 %v326
        %1441 = vmatpush.msra.mxu0 %v322
        %1442 = vmatpush.msra.mxu0 %v318
        %1443 = vmatpush.msra.mxu0 %v314
        %1444 = vmatpush.msra.mxu0 %v310
        %1445 = vmatpush.msra.mxu0 %v306
        %1446 = vmatpush.msra.mxu0 %v302
        %1447 = vmatpush.msra.mxu0 %v298
        %1448 = vmatpush.msra.mxu0 %v294
        %1449 = vmatpush.msra.mxu0 %v290
        %1450 = vmatpush.msra.mxu0 %v286
        %1451 = vmatpush.msra.mxu0 %v282
        %1452 = vmatpush.msra.mxu0 %v278
        %1453 = vmatpush.msra.mxu0 %v274
        %1454 = vmatpush.msra.mxu0 %v270
        %1455 = vmatmul.f32.gmra.mxu0 %v352
        %v1456 = vpop.f32.mrf.mxu0
        %v1457 = vadd.f32 %v1437, %v1456
        %1458 = vdwg.mxu0
        %1459 = vmatpush.msra.mxu0 0.0
        %1460 = vmatpush.msra.mxu0 0.0
        %1461 = vmatpush.msra.mxu0 0.0
        %1462 = vmatpush.msra.mxu0 0.0
        %1463 = vmatpush.msra.mxu0 0.0
        %1464 = vmatpush.msra.mxu0 0.0
        %1465 = vmatpush.msra.mxu0 0.0
        %1466 = vmatpush.msra.mxu0 0.0
        %1467 = vmatpush.msra.mxu0 0.0
        %1468 = vmatpush.msra.mxu0 0.0
        %1469 = vmatpush.msra.mxu0 0.0
        %1470 = vmatpush.msra.mxu0 0.0
        %1471 = vmatpush.msra.mxu0 %v346
        %1472 = vmatpush.msra.mxu0 %v342
        %1473 = vmatpush.msra.mxu0 %v338
        %1474 = vmatpush.msra.mxu0 %v334
        %1475 = vmatmul.f32.gmra.mxu0 %v501
        %v1476 = vpop.f32.mrf.mxu0
        %v1477 = vadd.f32 %v1457, %v1476
        %1478 = vdwg.mxu0
        %s1479 = scalar_lea.vmem [#allocation2], 2304
        %v1480 = vld [vmem:[%s1479] sm:$0xff]
        %v1481 = vld [vmem:[%s1479 + $0x8] sm:$0xff]
        %v1482 = vld [vmem:[%s1479 + $0x10] sm:$0xff]
        %v1483 = vld [vmem:[%s1479 + $0x18] sm:$0xff]
        %v1484 = vld [vmem:[%s1479 + $0x20] sm:$0xff]
        %v1485 = vld [vmem:[%s1479 + $0x28] sm:$0xff]
        %v1486 = vld [vmem:[%s1479 + $0x30] sm:$0xff]
        %v1487 = vld [vmem:[%s1479 + $0x38] sm:$0xff]
        %v1488 = vld [vmem:[%s1479 + $0x40] sm:$0xff]
        %v1489 = vld [vmem:[%s1479 + $0x48] sm:$0xff]
        %v1490 = vld [vmem:[%s1479 + $0x50] sm:$0xff]
        %v1491 = vld [vmem:[%s1479 + $0x58] sm:$0xff]
        %v1492 = vld [vmem:[%s1479 + $0x60] sm:$0xff]
        %v1493 = vld [vmem:[%s1479 + $0x68] sm:$0xff]
        %v1494 = vld [vmem:[%s1479 + $0x70] sm:$0xff]
        %v1495 = vld [vmem:[%s1479 + $0x78] sm:$0xff]
        %v1496 = vld [vmem:[%s1479 + $0x80] sm:$0xff]
        %v1497 = vld [vmem:[%s1479 + $0x88] sm:$0xff]
        %v1498 = vld [vmem:[%s1479 + $0x90] sm:$0xff]
        %v1499 = vld [vmem:[%s1479 + $0x98] sm:$0xff]
        %v1500 = vld [vmem:[%s1479 + $0xa0] sm:$0xff]
        %v1501 = vld [vmem:[%s1479 + $0xa8] sm:$0xff]
        %v1502 = vld [vmem:[%s1479 + $0xb0] sm:$0xff]
        %v1503 = vld [vmem:[%s1479 + $0xb8] sm:$0xff]
        %v1504 = vld [vmem:[%s1479 + $0xc0] sm:$0xff]
        %v1505 = vld [vmem:[%s1479 + $0xc8] sm:$0xff]
        %v1506 = vld [vmem:[%s1479 + $0xd0] sm:$0xff]
        %v1507 = vld [vmem:[%s1479 + $0xd8] sm:$0xff]
        %v1508 = vld [vmem:[%s1479 + $0xe0] sm:$0xff]
        %v1509 = vld [vmem:[%s1479 + $0xe8] sm:$0xff]
        %v1510 = vld [vmem:[%s1479 + $0xf0] sm:$0xff]
        %v1511 = vld [vmem:[%s1479 + $0xf8] sm:$0xff]
        %v1512 = vld [vmem:[%s1479 + $0x100] sm:$0xff]
        %v1513 = vld [vmem:[%s1479 + $0x108] sm:$0xff]
        %v1514 = vld [vmem:[%s1479 + $0x110] sm:$0xff]
        %v1515 = vld [vmem:[%s1479 + $0x118] sm:$0xff]
        %v1516 = vld [vmem:[%s1479 + $0x120] sm:$0xff]
        %v1517 = vld [vmem:[%s1479 + $0x128] sm:$0xff]
        %v1518 = vld [vmem:[%s1479 + $0x130] sm:$0xff]
        %v1519 = vld [vmem:[%s1479 + $0x138] sm:$0xff]
        %v1520 = vld [vmem:[%s1479 + $0x140] sm:$0xff]
        %v1521 = vld [vmem:[%s1479 + $0x148] sm:$0xff]
        %v1522 = vld [vmem:[%s1479 + $0x150] sm:$0xff]
        %v1523 = vld [vmem:[%s1479 + $0x158] sm:$0xff]
        %v1524 = vld [vmem:[%s1479 + $0x160] sm:$0xff]
        %v1525 = vld [vmem:[%s1479 + $0x168] sm:$0xff]
        %v1526 = vld [vmem:[%s1479 + $0x170] sm:$0xff]
        %v1527 = vld [vmem:[%s1479 + $0x178] sm:$0xff]
        %v1528 = vld [vmem:[%s1479 + $0x180] sm:$0xff]
        %v1529 = vld [vmem:[%s1479 + $0x188] sm:$0xff]
        %v1530 = vld [vmem:[%s1479 + $0x190] sm:$0xff]
        %v1531 = vld [vmem:[%s1479 + $0x198] sm:$0xff]
        %v1532 = vld [vmem:[%s1479 + $0x1a0] sm:$0xff]
        %v1533 = vld [vmem:[%s1479 + $0x1a8] sm:$0xff]
        %v1534 = vld [vmem:[%s1479 + $0x1b0] sm:$0xff]
        %v1535 = vld [vmem:[%s1479 + $0x1b8] sm:$0xff]
        %v1536 = vld [vmem:[%s1479 + $0x1c0] sm:$0xff]
        %v1537 = vld [vmem:[%s1479 + $0x1c8] sm:$0xff]
        %v1538 = vld [vmem:[%s1479 + $0x1d0] sm:$0xff]
        %v1539 = vld [vmem:[%s1479 + $0x1d8] sm:$0xff]
        %v1540 = vld [vmem:[%s1479 + $0x1e0] sm:$0xff]
        %v1541 = vld [vmem:[%s1479 + $0x1e8] sm:$0xff]
        %v1542 = vld [vmem:[%s1479 + $0x1f0] sm:$0xff]
        %v1543 = vld [vmem:[%s1479 + $0x1f8] sm:$0xff]
        %v1544 = vld [vmem:[%s1479 + $0x200] sm:$0xff]
        %v1545 = vld [vmem:[%s1479 + $0x208] sm:$0xff]
        %v1546 = vld [vmem:[%s1479 + $0x210] sm:$0xff]
        %v1547 = vld [vmem:[%s1479 + $0x218] sm:$0xff]
        %v1548 = vld [vmem:[%s1479 + $0x220] sm:$0xff]
        %v1549 = vld [vmem:[%s1479 + $0x228] sm:$0xff]
        %v1550 = vld [vmem:[%s1479 + $0x230] sm:$0xff]
        %v1551 = vld [vmem:[%s1479 + $0x238] sm:$0xff]
        %v1552 = vld [vmem:[%s1479 + $0x240] sm:$0xff]
        %v1553 = vld [vmem:[%s1479 + $0x248] sm:$0xff]
        %v1554 = vld [vmem:[%s1479 + $0x250] sm:$0xff]
        %v1555 = vld [vmem:[%s1479 + $0x258] sm:$0xff]
        %v1556 = vld [vmem:[%s1479 + $0x260] sm:$0xff]
        %v1557 = vld [vmem:[%s1479 + $0x268] sm:$0xff]
        %v1558 = vld [vmem:[%s1479 + $0x270] sm:$0xff]
        %v1559 = vld [vmem:[%s1479 + $0x278] sm:$0xff]
        %v1560 = vld [vmem:[%s1479 + $0x280] sm:$0xff]
        %v1561 = vld [vmem:[%s1479 + $0x288] sm:$0xff]
        %v1562 = vld [vmem:[%s1479 + $0x290] sm:$0xff]
        %v1563 = vld [vmem:[%s1479 + $0x298] sm:$0xff]
        %v1564 = vld [vmem:[%s1479 + $0x2a0] sm:$0xff]
        %v1565 = vld [vmem:[%s1479 + $0x2a8] sm:$0xff]
        %v1566 = vld [vmem:[%s1479 + $0x2b0] sm:$0xff]
        %v1567 = vld [vmem:[%s1479 + $0x2b8] sm:$0xff]
        %v1568 = vld [vmem:[%s1479 + $0x2c0] sm:$0xff]
        %v1569 = vld [vmem:[%s1479 + $0x2c8] sm:$0xff]
        %v1570 = vld [vmem:[%s1479 + $0x2d0] sm:$0xff]
        %v1571 = vld [vmem:[%s1479 + $0x2d8] sm:$0xff]
        %v1572 = vld [vmem:[%s1479 + $0x2e0] sm:$0xff]
        %v1573 = vld [vmem:[%s1479 + $0x2e8] sm:$0xff]
        %v1574 = vld [vmem:[%s1479 + $0x2f0] sm:$0xff]
        %v1575 = vld [vmem:[%s1479 + $0x2f8] sm:$0xff]
        %v1576 = vld [vmem:[%s1479 + $0x300] sm:$0xff]
        %v1577 = vld [vmem:[%s1479 + $0x308] sm:$0xff]
        %v1578 = vld [vmem:[%s1479 + $0x310] sm:$0xff]
        %v1579 = vld [vmem:[%s1479 + $0x318] sm:$0xff]
        %v1580 = vld [vmem:[%s1479 + $0x320] sm:$0xff]
        %v1581 = vld [vmem:[%s1479 + $0x328] sm:$0xff]
        %v1582 = vld [vmem:[%s1479 + $0x330] sm:$0xff]
        %v1583 = vld [vmem:[%s1479 + $0x338] sm:$0xff]
        %v1584 = vld [vmem:[%s1479 + $0x340] sm:$0xff]
        %v1585 = vld [vmem:[%s1479 + $0x348] sm:$0xff]
        %v1586 = vld [vmem:[%s1479 + $0x350] sm:$0xff]
        %v1587 = vld [vmem:[%s1479 + $0x358] sm:$0xff]
        %v1588 = vld [vmem:[%s1479 + $0x360] sm:$0xff]
        %v1589 = vld [vmem:[%s1479 + $0x368] sm:$0xff]
        %v1590 = vld [vmem:[%s1479 + $0x370] sm:$0xff]
        %v1591 = vld [vmem:[%s1479 + $0x378] sm:$0xff]
        %v1592 = vld [vmem:[%s1479 + $0x380] sm:$0xff]
        %v1593 = vld [vmem:[%s1479 + $0x388] sm:$0xff]
        %v1594 = vld [vmem:[%s1479 + $0x390] sm:$0xff]
        %v1595 = vld [vmem:[%s1479 + $0x398] sm:$0xff]
        %v1596 = vld [vmem:[%s1479 + $0x3a0] sm:$0xff]
        %v1597 = vld [vmem:[%s1479 + $0x3a8] sm:$0xff]
        %v1598 = vld [vmem:[%s1479 + $0x3b0] sm:$0xff]
        %v1599 = vld [vmem:[%s1479 + $0x3b8] sm:$0xff]
        %v1600 = vld [vmem:[%s1479 + $0x3c0] sm:$0xff]
        %v1601 = vld [vmem:[%s1479 + $0x3c8] sm:$0xff]
        %v1602 = vld [vmem:[%s1479 + $0x3d0] sm:$0xff]
        %v1603 = vld [vmem:[%s1479 + $0x3d8] sm:$0xff]
        %v1604 = vld [vmem:[%s1479 + $0x3e0] sm:$0xff]
        %v1605 = vld [vmem:[%s1479 + $0x3e8] sm:$0xff]
        %v1606 = vld [vmem:[%s1479 + $0x3f0] sm:$0xff]
        %v1607 = vld [vmem:[%s1479 + $0x3f8] sm:$0xff]
        %v1608 = vld [vmem:[%s1479 + $0x400] sm:$0xff]
        %v1609 = vld [vmem:[%s1479 + $0x408] sm:$0xff]
        %v1610 = vld [vmem:[%s1479 + $0x410] sm:$0xff]
        %v1611 = vld [vmem:[%s1479 + $0x418] sm:$0xff]
        %v1612 = vld [vmem:[%s1479 + $0x420] sm:$0xff]
        %v1613 = vld [vmem:[%s1479 + $0x428] sm:$0xff]
        %v1614 = vld [vmem:[%s1479 + $0x430] sm:$0xff]
        %v1615 = vld [vmem:[%s1479 + $0x438] sm:$0xff]
        %v1616 = vld [vmem:[%s1479 + $0x440] sm:$0xff]
        %v1617 = vld [vmem:[%s1479 + $0x448] sm:$0xff]
        %v1618 = vld [vmem:[%s1479 + $0x450] sm:$0xff]
        %v1619 = vld [vmem:[%s1479 + $0x458] sm:$0xff]
        %v1620 = vld [vmem:[%s1479 + $0x460] sm:$0xff]
        %v1621 = vld [vmem:[%s1479 + $0x468] sm:$0xff]
        %v1622 = vld [vmem:[%s1479 + $0x470] sm:$0xff]
        %v1623 = vld [vmem:[%s1479 + $0x478] sm:$0xff]
        %1624 = vmatpush.msra.mxu0 %v1540
        %1625 = vmatpush.msra.mxu0 %v1536
        %1626 = vmatpush.msra.mxu0 %v1532
        %1627 = vmatpush.msra.mxu0 %v1528
        %1628 = vmatpush.msra.mxu0 %v1524
        %1629 = vmatpush.msra.mxu0 %v1520
        %1630 = vmatpush.msra.mxu0 %v1516
        %1631 = vmatpush.msra.mxu0 %v1512
        %1632 = vmatpush.msra.mxu0 %v1508
        %1633 = vmatpush.msra.mxu0 %v1504
        %1634 = vmatpush.msra.mxu0 %v1500
        %1635 = vmatpush.msra.mxu0 %v1496
        %1636 = vmatpush.msra.mxu0 %v1492
        %1637 = vmatpush.msra.mxu0 %v1488
        %1638 = vmatpush.msra.mxu0 %v1484
        %1639 = vmatpush.msra.mxu0 %v1480
        %1640 = vmatmul.f32.gmra.mxu0 %v992
        %v1641 = vpop.f32.mrf.mxu0
        %v1642 = vadd.f32 0.0, %v1641
        %1643 = vdwg.mxu0
        %1644 = vmatpush.msra.mxu0 %v1604
        %1645 = vmatpush.msra.mxu0 %v1600
        %1646 = vmatpush.msra.mxu0 %v1596
        %1647 = vmatpush.msra.mxu0 %v1592
        %1648 = vmatpush.msra.mxu0 %v1588
        %1649 = vmatpush.msra.mxu0 %v1584
        %1650 = vmatpush.msra.mxu0 %v1580
        %1651 = vmatpush.msra.mxu0 %v1576
        %1652 = vmatpush.msra.mxu0 %v1572
        %1653 = vmatpush.msra.mxu0 %v1568
        %1654 = vmatpush.msra.mxu0 %v1564
        %1655 = vmatpush.msra.mxu0 %v1560
        %1656 = vmatpush.msra.mxu0 %v1556
        %1657 = vmatpush.msra.mxu0 %v1552
        %1658 = vmatpush.msra.mxu0 %v1548
        %1659 = vmatpush.msra.mxu0 %v1544
        %1660 = vmatmul.f32.gmra.mxu0 %v993
        %v1661 = vpop.f32.mrf.mxu0
        %v1662 = vadd.f32 %v1642, %v1661
        %1663 = vdwg.mxu0
        %1664 = vmatpush.msra.mxu0 0.0
        %1665 = vmatpush.msra.mxu0 0.0
        %1666 = vmatpush.msra.mxu0 0.0
        %1667 = vmatpush.msra.mxu0 0.0
        %1668 = vmatpush.msra.mxu0 0.0
        %1669 = vmatpush.msra.mxu0 0.0
        %1670 = vmatpush.msra.mxu0 0.0
        %1671 = vmatpush.msra.mxu0 0.0
        %1672 = vmatpush.msra.mxu0 0.0
        %1673 = vmatpush.msra.mxu0 0.0
        %1674 = vmatpush.msra.mxu0 0.0
        %1675 = vmatpush.msra.mxu0 0.0
        %1676 = vmatpush.msra.mxu0 %v1620
        %1677 = vmatpush.msra.mxu0 %v1616
        %1678 = vmatpush.msra.mxu0 %v1612
        %1679 = vmatpush.msra.mxu0 %v1608
        %1680 = vmatmul.f32.gmra.mxu0 %v997
        %v1681 = vpop.f32.mrf.mxu0
        %v1682 = vadd.f32 %v1662, %v1681
        %1683 = vdwg.mxu0
        %1684 = vmatpush.msra.mxu0 %v1541
        %1685 = vmatpush.msra.mxu0 %v1537
        %1686 = vmatpush.msra.mxu0 %v1533
        %1687 = vmatpush.msra.mxu0 %v1529
        %1688 = vmatpush.msra.mxu0 %v1525
        %1689 = vmatpush.msra.mxu0 %v1521
        %1690 = vmatpush.msra.mxu0 %v1517
        %1691 = vmatpush.msra.mxu0 %v1513
        %1692 = vmatpush.msra.mxu0 %v1509
        %1693 = vmatpush.msra.mxu0 %v1505
        %1694 = vmatpush.msra.mxu0 %v1501
        %1695 = vmatpush.msra.mxu0 %v1497
        %1696 = vmatpush.msra.mxu0 %v1493
        %1697 = vmatpush.msra.mxu0 %v1489
        %1698 = vmatpush.msra.mxu0 %v1485
        %1699 = vmatpush.msra.mxu0 %v1481
        %1700 = vmatmul.f32.gmra.mxu0 %v992
        %v1701 = vpop.f32.mrf.mxu0
        %v1702 = vadd.f32 0.0, %v1701
        %1703 = vdwg.mxu0
        %1704 = vmatpush.msra.mxu0 %v1605
        %1705 = vmatpush.msra.mxu0 %v1601
        %1706 = vmatpush.msra.mxu0 %v1597
        %1707 = vmatpush.msra.mxu0 %v1593
        %1708 = vmatpush.msra.mxu0 %v1589
        %1709 = vmatpush.msra.mxu0 %v1585
        %1710 = vmatpush.msra.mxu0 %v1581
        %1711 = vmatpush.msra.mxu0 %v1577
        %1712 = vmatpush.msra.mxu0 %v1573
        %1713 = vmatpush.msra.mxu0 %v1569
        %1714 = vmatpush.msra.mxu0 %v1565
        %1715 = vmatpush.msra.mxu0 %v1561
        %1716 = vmatpush.msra.mxu0 %v1557
        %1717 = vmatpush.msra.mxu0 %v1553
        %1718 = vmatpush.msra.mxu0 %v1549
        %1719 = vmatpush.msra.mxu0 %v1545
        %1720 = vmatmul.f32.gmra.mxu0 %v993
        %v1721 = vpop.f32.mrf.mxu0
        %v1722 = vadd.f32 %v1702, %v1721
        %1723 = vdwg.mxu0
        %1724 = vmatpush.msra.mxu0 0.0
        %1725 = vmatpush.msra.mxu0 0.0
        %1726 = vmatpush.msra.mxu0 0.0
        %1727 = vmatpush.msra.mxu0 0.0
        %1728 = vmatpush.msra.mxu0 0.0
        %1729 = vmatpush.msra.mxu0 0.0
        %1730 = vmatpush.msra.mxu0 0.0
        %1731 = vmatpush.msra.mxu0 0.0
        %1732 = vmatpush.msra.mxu0 0.0
        %1733 = vmatpush.msra.mxu0 0.0
        %1734 = vmatpush.msra.mxu0 0.0
        %1735 = vmatpush.msra.mxu0 0.0
        %1736 = vmatpush.msra.mxu0 %v1621
        %1737 = vmatpush.msra.mxu0 %v1617
        %1738 = vmatpush.msra.mxu0 %v1613
        %1739 = vmatpush.msra.mxu0 %v1609
        %1740 = vmatmul.f32.gmra.mxu0 %v997
        %v1741 = vpop.f32.mrf.mxu0
        %v1742 = vadd.f32 %v1722, %v1741
        %1743 = vdwg.mxu0
        %1744 = vmatpush.msra.mxu0 %v1542
        %1745 = vmatpush.msra.mxu0 %v1538
        %1746 = vmatpush.msra.mxu0 %v1534
        %1747 = vmatpush.msra.mxu0 %v1530
        %1748 = vmatpush.msra.mxu0 %v1526
        %1749 = vmatpush.msra.mxu0 %v1522
        %1750 = vmatpush.msra.mxu0 %v1518
        %1751 = vmatpush.msra.mxu0 %v1514
        %1752 = vmatpush.msra.mxu0 %v1510
        %1753 = vmatpush.msra.mxu0 %v1506
        %1754 = vmatpush.msra.mxu0 %v1502
        %1755 = vmatpush.msra.mxu0 %v1498
        %1756 = vmatpush.msra.mxu0 %v1494
        %1757 = vmatpush.msra.mxu0 %v1490
        %1758 = vmatpush.msra.mxu0 %v1486
        %1759 = vmatpush.msra.mxu0 %v1482
        %1760 = vmatmul.f32.gmra.mxu0 %v992
        %v1761 = vpop.f32.mrf.mxu0
        %v1762 = vadd.f32 0.0, %v1761
        %1763 = vdwg.mxu0
        %1764 = vmatpush.msra.mxu0 %v1606
        %1765 = vmatpush.msra.mxu0 %v1602
        %1766 = vmatpush.msra.mxu0 %v1598
        %1767 = vmatpush.msra.mxu0 %v1594
        %1768 = vmatpush.msra.mxu0 %v1590
        %1769 = vmatpush.msra.mxu0 %v1586
        %1770 = vmatpush.msra.mxu0 %v1582
        %1771 = vmatpush.msra.mxu0 %v1578
        %1772 = vmatpush.msra.mxu0 %v1574
        %1773 = vmatpush.msra.mxu0 %v1570
        %1774 = vmatpush.msra.mxu0 %v1566
        %1775 = vmatpush.msra.mxu0 %v1562
        %1776 = vmatpush.msra.mxu0 %v1558
        %1777 = vmatpush.msra.mxu0 %v1554
        %1778 = vmatpush.msra.mxu0 %v1550
        %1779 = vmatpush.msra.mxu0 %v1546
        %1780 = vmatmul.f32.gmra.mxu0 %v993
        %v1781 = vpop.f32.mrf.mxu0
        %v1782 = vadd.f32 %v1762, %v1781
        %1783 = vdwg.mxu0
        %1784 = vmatpush.msra.mxu0 0.0
        %1785 = vmatpush.msra.mxu0 0.0
        %1786 = vmatpush.msra.mxu0 0.0
        %1787 = vmatpush.msra.mxu0 0.0
        %1788 = vmatpush.msra.mxu0 0.0
        %1789 = vmatpush.msra.mxu0 0.0
        %1790 = vmatpush.msra.mxu0 0.0
        %1791 = vmatpush.msra.mxu0 0.0
        %1792 = vmatpush.msra.mxu0 0.0
        %1793 = vmatpush.msra.mxu0 0.0
        %1794 = vmatpush.msra.mxu0 0.0
        %1795 = vmatpush.msra.mxu0 0.0
        %1796 = vmatpush.msra.mxu0 %v1622
        %1797 = vmatpush.msra.mxu0 %v1618
        %1798 = vmatpush.msra.mxu0 %v1614
        %1799 = vmatpush.msra.mxu0 %v1610
        %1800 = vmatmul.f32.gmra.mxu0 %v997
        %v1801 = vpop.f32.mrf.mxu0
        %v1802 = vadd.f32 %v1782, %v1801
        %1803 = vdwg.mxu0
        %1804 = vmatpush.msra.mxu0 %v1543
        %1805 = vmatpush.msra.mxu0 %v1539
        %1806 = vmatpush.msra.mxu0 %v1535
        %1807 = vmatpush.msra.mxu0 %v1531
        %1808 = vmatpush.msra.mxu0 %v1527
        %1809 = vmatpush.msra.mxu0 %v1523
        %1810 = vmatpush.msra.mxu0 %v1519
        %1811 = vmatpush.msra.mxu0 %v1515
        %1812 = vmatpush.msra.mxu0 %v1511
        %1813 = vmatpush.msra.mxu0 %v1507
        %1814 = vmatpush.msra.mxu0 %v1503
        %1815 = vmatpush.msra.mxu0 %v1499
        %1816 = vmatpush.msra.mxu0 %v1495
        %1817 = vmatpush.msra.mxu0 %v1491
        %1818 = vmatpush.msra.mxu0 %v1487
        %1819 = vmatpush.msra.mxu0 %v1483
        %1820 = vmatmul.f32.gmra.mxu0 %v992
        %v1821 = vpop.f32.mrf.mxu0
        %v1822 = vadd.f32 0.0, %v1821
        %1823 = vdwg.mxu0
        %1824 = vmatpush.msra.mxu0 %v1607
        %1825 = vmatpush.msra.mxu0 %v1603
        %1826 = vmatpush.msra.mxu0 %v1599
        %1827 = vmatpush.msra.mxu0 %v1595
        %1828 = vmatpush.msra.mxu0 %v1591
        %1829 = vmatpush.msra.mxu0 %v1587
        %1830 = vmatpush.msra.mxu0 %v1583
        %1831 = vmatpush.msra.mxu0 %v1579
        %1832 = vmatpush.msra.mxu0 %v1575
        %1833 = vmatpush.msra.mxu0 %v1571
        %1834 = vmatpush.msra.mxu0 %v1567
        %1835 = vmatpush.msra.mxu0 %v1563
        %1836 = vmatpush.msra.mxu0 %v1559
        %1837 = vmatpush.msra.mxu0 %v1555
        %1838 = vmatpush.msra.mxu0 %v1551
        %1839 = vmatpush.msra.mxu0 %v1547
        %1840 = vmatmul.f32.gmra.mxu0 %v993
        %v1841 = vpop.f32.mrf.mxu0
        %v1842 = vadd.f32 %v1822, %v1841
        %1843 = vdwg.mxu0
        %1844 = vmatpush.msra.mxu0 0.0
        %1845 = vmatpush.msra.mxu0 0.0
        %1846 = vmatpush.msra.mxu0 0.0
        %1847 = vmatpush.msra.mxu0 0.0
        %1848 = vmatpush.msra.mxu0 0.0
        %1849 = vmatpush.msra.mxu0 0.0
        %1850 = vmatpush.msra.mxu0 0.0
        %1851 = vmatpush.msra.mxu0 0.0
        %1852 = vmatpush.msra.mxu0 0.0
        %1853 = vmatpush.msra.mxu0 0.0
        %1854 = vmatpush.msra.mxu0 0.0
        %1855 = vmatpush.msra.mxu0 0.0
        %1856 = vmatpush.msra.mxu0 %v1623
        %1857 = vmatpush.msra.mxu0 %v1619
        %1858 = vmatpush.msra.mxu0 %v1615
        %1859 = vmatpush.msra.mxu0 %v1611
        %1860 = vmatmul.f32.gmra.mxu0 %v997
        %v1861 = vpop.f32.mrf.mxu0
        %v1862 = vadd.f32 %v1842, %v1861
        %1863 = vdwg.mxu0
        %v1864 = vadd.f32 %v804, %v1682
        %v1865 = vadd.f32 %v864, %v1742
        %v1866 = vadd.f32 %v924, %v1802
        %v1867 = vadd.f32 %v984, %v1862
        %v1868 = vld [vmem:[%s350] sm:$0xfe]
        %v1869 = vld [vmem:[%s350 + $0x8] sm:$0xfe]
        %v1870 = vld [vmem:[%s350 + $0x10] sm:$0xfe]
        %v1874 = vrot.slane %v1868, 1
        %v1875 = vrot.slane %v1869, 1
        %v1876 = vrot.slane %v1870, 1
        %v1879 = vsel %vm499, %v1876, 0
        %1881 = vmatpush.msra.mxu0 %v1540
        %1882 = vmatpush.msra.mxu0 %v1536
        %1883 = vmatpush.msra.mxu0 %v1532
        %1884 = vmatpush.msra.mxu0 %v1528
        %1885 = vmatpush.msra.mxu0 %v1524
        %1886 = vmatpush.msra.mxu0 %v1520
        %1887 = vmatpush.msra.mxu0 %v1516
        %1888 = vmatpush.msra.mxu0 %v1512
        %1889 = vmatpush.msra.mxu0 %v1508
        %1890 = vmatpush.msra.mxu0 %v1504
        %1891 = vmatpush.msra.mxu0 %v1500
        %1892 = vmatpush.msra.mxu0 %v1496
        %1893 = vmatpush.msra.mxu0 %v1492
        %1894 = vmatpush.msra.mxu0 %v1488
        %1895 = vmatpush.msra.mxu0 %v1484
        %1896 = vmatpush.msra.mxu0 %v1480
        %1897 = vmatmul.f32.gmra.mxu0 %v1874
        %v1898 = vpop.f32.mrf.mxu0
        %v1899 = vadd.f32 0.0, %v1898
        %1900 = vdwg.mxu0
        %1901 = vmatpush.msra.mxu0 %v1604
        %1902 = vmatpush.msra.mxu0 %v1600
        %1903 = vmatpush.msra.mxu0 %v1596
        %1904 = vmatpush.msra.mxu0 %v1592
        %1905 = vmatpush.msra.mxu0 %v1588
        %1906 = vmatpush.msra.mxu0 %v1584
        %1907 = vmatpush.msra.mxu0 %v1580
        %1908 = vmatpush.msra.mxu0 %v1576
        %1909 = vmatpush.msra.mxu0 %v1572
        %1910 = vmatpush.msra.mxu0 %v1568
        %1911 = vmatpush.msra.mxu0 %v1564
        %1912 = vmatpush.msra.mxu0 %v1560
        %1913 = vmatpush.msra.mxu0 %v1556
        %1914 = vmatpush.msra.mxu0 %v1552
        %1915 = vmatpush.msra.mxu0 %v1548
        %1916 = vmatpush.msra.mxu0 %v1544
        %1917 = vmatmul.f32.gmra.mxu0 %v1875
        %v1918 = vpop.f32.mrf.mxu0
        %v1919 = vadd.f32 %v1899, %v1918
        %1920 = vdwg.mxu0
        %1921 = vmatpush.msra.mxu0 0.0
        %1922 = vmatpush.msra.mxu0 0.0
        %1923 = vmatpush.msra.mxu0 0.0
        %1924 = vmatpush.msra.mxu0 0.0
        %1925 = vmatpush.msra.mxu0 0.0
        %1926 = vmatpush.msra.mxu0 0.0
        %1927 = vmatpush.msra.mxu0 0.0
        %1928 = vmatpush.msra.mxu0 0.0
        %1929 = vmatpush.msra.mxu0 0.0
        %1930 = vmatpush.msra.mxu0 0.0
        %1931 = vmatpush.msra.mxu0 0.0
        %1932 = vmatpush.msra.mxu0 0.0
        %1933 = vmatpush.msra.mxu0 %v1620
        %1934 = vmatpush.msra.mxu0 %v1616
        %1935 = vmatpush.msra.mxu0 %v1612
        %1936 = vmatpush.msra.mxu0 %v1608
        %1937 = vmatmul.f32.gmra.mxu0 %v1879
        %v1938 = vpop.f32.mrf.mxu0
        %v1939 = vadd.f32 %v1919, %v1938
        %1940 = vdwg.mxu0
        %1941 = vmatpush.msra.mxu0 %v1541
        %1942 = vmatpush.msra.mxu0 %v1537
        %1943 = vmatpush.msra.mxu0 %v1533
        %1944 = vmatpush.msra.mxu0 %v1529
        %1945 = vmatpush.msra.mxu0 %v1525
        %1946 = vmatpush.msra.mxu0 %v1521
        %1947 = vmatpush.msra.mxu0 %v1517
        %1948 = vmatpush.msra.mxu0 %v1513
        %1949 = vmatpush.msra.mxu0 %v1509
        %1950 = vmatpush.msra.mxu0 %v1505
        %1951 = vmatpush.msra.mxu0 %v1501
        %1952 = vmatpush.msra.mxu0 %v1497
        %1953 = vmatpush.msra.mxu0 %v1493
        %1954 = vmatpush.msra.mxu0 %v1489
        %1955 = vmatpush.msra.mxu0 %v1485
        %1956 = vmatpush.msra.mxu0 %v1481
        %1957 = vmatmul.f32.gmra.mxu0 %v1874
        %v1958 = vpop.f32.mrf.mxu0
        %v1959 = vadd.f32 0.0, %v1958
        %1960 = vdwg.mxu0
        %1961 = vmatpush.msra.mxu0 %v1605
        %1962 = vmatpush.msra.mxu0 %v1601
        %1963 = vmatpush.msra.mxu0 %v1597
        %1964 = vmatpush.msra.mxu0 %v1593
        %1965 = vmatpush.msra.mxu0 %v1589
        %1966 = vmatpush.msra.mxu0 %v1585
        %1967 = vmatpush.msra.mxu0 %v1581
        %1968 = vmatpush.msra.mxu0 %v1577
        %1969 = vmatpush.msra.mxu0 %v1573
        %1970 = vmatpush.msra.mxu0 %v1569
        %1971 = vmatpush.msra.mxu0 %v1565
        %1972 = vmatpush.msra.mxu0 %v1561
        %1973 = vmatpush.msra.mxu0 %v1557
        %1974 = vmatpush.msra.mxu0 %v1553
        %1975 = vmatpush.msra.mxu0 %v1549
        %1976 = vmatpush.msra.mxu0 %v1545
        %1977 = vmatmul.f32.gmra.mxu0 %v1875
        %v1978 = vpop.f32.mrf.mxu0
        %v1979 = vadd.f32 %v1959, %v1978
        %1980 = vdwg.mxu0
        %1981 = vmatpush.msra.mxu0 0.0
        %1982 = vmatpush.msra.mxu0 0.0
        %1983 = vmatpush.msra.mxu0 0.0
        %1984 = vmatpush.msra.mxu0 0.0
        %1985 = vmatpush.msra.mxu0 0.0
        %1986 = vmatpush.msra.mxu0 0.0
        %1987 = vmatpush.msra.mxu0 0.0
        %1988 = vmatpush.msra.mxu0 0.0
        %1989 = vmatpush.msra.mxu0 0.0
        %1990 = vmatpush.msra.mxu0 0.0
        %1991 = vmatpush.msra.mxu0 0.0
        %1992 = vmatpush.msra.mxu0 0.0
        %1993 = vmatpush.msra.mxu0 %v1621
        %1994 = vmatpush.msra.mxu0 %v1617
        %1995 = vmatpush.msra.mxu0 %v1613
        %1996 = vmatpush.msra.mxu0 %v1609
        %1997 = vmatmul.f32.gmra.mxu0 %v1879
        %v1998 = vpop.f32.mrf.mxu0
        %v1999 = vadd.f32 %v1979, %v1998
        %2000 = vdwg.mxu0
        %2001 = vmatpush.msra.mxu0 %v1542
        %2002 = vmatpush.msra.mxu0 %v1538
        %2003 = vmatpush.msra.mxu0 %v1534
        %2004 = vmatpush.msra.mxu0 %v1530
        %2005 = vmatpush.msra.mxu0 %v1526
        %2006 = vmatpush.msra.mxu0 %v1522
        %2007 = vmatpush.msra.mxu0 %v1518
        %2008 = vmatpush.msra.mxu0 %v1514
        %2009 = vmatpush.msra.mxu0 %v1510
        %2010 = vmatpush.msra.mxu0 %v1506
        %2011 = vmatpush.msra.mxu0 %v1502
        %2012 = vmatpush.msra.mxu0 %v1498
        %2013 = vmatpush.msra.mxu0 %v1494
        %2014 = vmatpush.msra.mxu0 %v1490
        %2015 = vmatpush.msra.mxu0 %v1486
        %2016 = vmatpush.msra.mxu0 %v1482
        %2017 = vmatmul.f32.gmra.mxu0 %v1874
        %v2018 = vpop.f32.mrf.mxu0
        %v2019 = vadd.f32 0.0, %v2018
        %2020 = vdwg.mxu0
        %2021 = vmatpush.msra.mxu0 %v1606
        %2022 = vmatpush.msra.mxu0 %v1602
        %2023 = vmatpush.msra.mxu0 %v1598
        %2024 = vmatpush.msra.mxu0 %v1594
        %2025 = vmatpush.msra.mxu0 %v1590
        %2026 = vmatpush.msra.mxu0 %v1586
        %2027 = vmatpush.msra.mxu0 %v1582
        %2028 = vmatpush.msra.mxu0 %v1578
        %2029 = vmatpush.msra.mxu0 %v1574
        %2030 = vmatpush.msra.mxu0 %v1570
        %2031 = vmatpush.msra.mxu0 %v1566
        %2032 = vmatpush.msra.mxu0 %v1562
        %2033 = vmatpush.msra.mxu0 %v1558
        %2034 = vmatpush.msra.mxu0 %v1554
        %2035 = vmatpush.msra.mxu0 %v1550
        %2036 = vmatpush.msra.mxu0 %v1546
        %2037 = vmatmul.f32.gmra.mxu0 %v1875
        %v2038 = vpop.f32.mrf.mxu0
        %v2039 = vadd.f32 %v2019, %v2038
        %2040 = vdwg.mxu0
        %2041 = vmatpush.msra.mxu0 0.0
        %2042 = vmatpush.msra.mxu0 0.0
        %2043 = vmatpush.msra.mxu0 0.0
        %2044 = vmatpush.msra.mxu0 0.0
        %2045 = vmatpush.msra.mxu0 0.0
        %2046 = vmatpush.msra.mxu0 0.0
        %2047 = vmatpush.msra.mxu0 0.0
        %2048 = vmatpush.msra.mxu0 0.0
        %2049 = vmatpush.msra.mxu0 0.0
        %2050 = vmatpush.msra.mxu0 0.0
        %2051 = vmatpush.msra.mxu0 0.0
        %2052 = vmatpush.msra.mxu0 0.0
        %2053 = vmatpush.msra.mxu0 %v1622
        %2054 = vmatpush.msra.mxu0 %v1618
        %2055 = vmatpush.msra.mxu0 %v1614
        %2056 = vmatpush.msra.mxu0 %v1610
        %2057 = vmatmul.f32.gmra.mxu0 %v1879
        %v2058 = vpop.f32.mrf.mxu0
        %v2059 = vadd.f32 %v2039, %v2058
        %2060 = vdwg.mxu0
        %2061 = vmatpush.msra.mxu0 %v1543
        %2062 = vmatpush.msra.mxu0 %v1539
        %2063 = vmatpush.msra.mxu0 %v1535
        %2064 = vmatpush.msra.mxu0 %v1531
        %2065 = vmatpush.msra.mxu0 %v1527
        %2066 = vmatpush.msra.mxu0 %v1523
        %2067 = vmatpush.msra.mxu0 %v1519
        %2068 = vmatpush.msra.mxu0 %v1515
        %2069 = vmatpush.msra.mxu0 %v1511
        %2070 = vmatpush.msra.mxu0 %v1507
        %2071 = vmatpush.msra.mxu0 %v1503
        %2072 = vmatpush.msra.mxu0 %v1499
        %2073 = vmatpush.msra.mxu0 %v1495
        %2074 = vmatpush.msra.mxu0 %v1491
        %2075 = vmatpush.msra.mxu0 %v1487
        %2076 = vmatpush.msra.mxu0 %v1483
        %2077 = vmatmul.f32.gmra.mxu0 %v1874
        %v2078 = vpop.f32.mrf.mxu0
        %v2079 = vadd.f32 0.0, %v2078
        %2080 = vdwg.mxu0
        %2081 = vmatpush.msra.mxu0 %v1607
        %2082 = vmatpush.msra.mxu0 %v1603
        %2083 = vmatpush.msra.mxu0 %v1599
        %2084 = vmatpush.msra.mxu0 %v1595
        %2085 = vmatpush.msra.mxu0 %v1591
        %2086 = vmatpush.msra.mxu0 %v1587
        %2087 = vmatpush.msra.mxu0 %v1583
        %2088 = vmatpush.msra.mxu0 %v1579
        %2089 = vmatpush.msra.mxu0 %v1575
        %2090 = vmatpush.msra.mxu0 %v1571
        %2091 = vmatpush.msra.mxu0 %v1567
        %2092 = vmatpush.msra.mxu0 %v1563
        %2093 = vmatpush.msra.mxu0 %v1559
        %2094 = vmatpush.msra.mxu0 %v1555
        %2095 = vmatpush.msra.mxu0 %v1551
        %2096 = vmatpush.msra.mxu0 %v1547
        %2097 = vmatmul.f32.gmra.mxu0 %v1875
        %v2098 = vpop.f32.mrf.mxu0
        %v2099 = vadd.f32 %v2079, %v2098
        %2100 = vdwg.mxu0
        %2101 = vmatpush.msra.mxu0 0.0
        %2102 = vmatpush.msra.mxu0 0.0
        %2103 = vmatpush.msra.mxu0 0.0
        %2104 = vmatpush.msra.mxu0 0.0
        %2105 = vmatpush.msra.mxu0 0.0
        %2106 = vmatpush.msra.mxu0 0.0
        %2107 = vmatpush.msra.mxu0 0.0
        %2108 = vmatpush.msra.mxu0 0.0
        %2109 = vmatpush.msra.mxu0 0.0
        %2110 = vmatpush.msra.mxu0 0.0
        %2111 = vmatpush.msra.mxu0 0.0
        %2112 = vmatpush.msra.mxu0 0.0
        %2113 = vmatpush.msra.mxu0 %v1623
        %2114 = vmatpush.msra.mxu0 %v1619
        %2115 = vmatpush.msra.mxu0 %v1615
        %2116 = vmatpush.msra.mxu0 %v1611
        %2117 = vmatmul.f32.gmra.mxu0 %v1879
        %v2118 = vpop.f32.mrf.mxu0
        %v2119 = vadd.f32 %v2099, %v2118
        %2120 = vdwg.mxu0
        %v2121 = vadd.f32 %v1297, %v1939
        %v2122 = vadd.f32 %v1357, %v1999
        %v2123 = vadd.f32 %v1417, %v2059
        %v2124 = vadd.f32 %v1477, %v2119
        %s2125 = scalar_lea.vmem [#allocation2], 3456
        %v2126 = vld [vmem:[%s2125] sm:$0xff]
        %v2127 = vld [vmem:[%s2125 + $0x8] sm:$0xff]
        %v2128 = vld [vmem:[%s2125 + $0x10] sm:$0xff]
        %v2129 = vld [vmem:[%s2125 + $0x18] sm:$0xff]
        %v2130 = vld [vmem:[%s2125 + $0x20] sm:$0xff]
        %v2131 = vld [vmem:[%s2125 + $0x28] sm:$0xff]
        %v2132 = vld [vmem:[%s2125 + $0x30] sm:$0xff]
        %v2133 = vld [vmem:[%s2125 + $0x38] sm:$0xff]
        %v2134 = vld [vmem:[%s2125 + $0x40] sm:$0xff]
        %v2135 = vld [vmem:[%s2125 + $0x48] sm:$0xff]
        %v2136 = vld [vmem:[%s2125 + $0x50] sm:$0xff]
        %v2137 = vld [vmem:[%s2125 + $0x58] sm:$0xff]
        %v2138 = vld [vmem:[%s2125 + $0x60] sm:$0xff]
        %v2139 = vld [vmem:[%s2125 + $0x68] sm:$0xff]
        %v2140 = vld [vmem:[%s2125 + $0x70] sm:$0xff]
        %v2141 = vld [vmem:[%s2125 + $0x78] sm:$0xff]
        %v2142 = vld [vmem:[%s2125 + $0x80] sm:$0xff]
        %v2143 = vld [vmem:[%s2125 + $0x88] sm:$0xff]
        %v2144 = vld [vmem:[%s2125 + $0x90] sm:$0xff]
        %v2145 = vld [vmem:[%s2125 + $0x98] sm:$0xff]
        %v2146 = vld [vmem:[%s2125 + $0xa0] sm:$0xff]
        %v2147 = vld [vmem:[%s2125 + $0xa8] sm:$0xff]
        %v2148 = vld [vmem:[%s2125 + $0xb0] sm:$0xff]
        %v2149 = vld [vmem:[%s2125 + $0xb8] sm:$0xff]
        %v2150 = vld [vmem:[%s2125 + $0xc0] sm:$0xff]
        %v2151 = vld [vmem:[%s2125 + $0xc8] sm:$0xff]
        %v2152 = vld [vmem:[%s2125 + $0xd0] sm:$0xff]
        %v2153 = vld [vmem:[%s2125 + $0xd8] sm:$0xff]
        %v2154 = vld [vmem:[%s2125 + $0xe0] sm:$0xff]
        %v2155 = vld [vmem:[%s2125 + $0xe8] sm:$0xff]
        %v2156 = vld [vmem:[%s2125 + $0xf0] sm:$0xff]
        %v2157 = vld [vmem:[%s2125 + $0xf8] sm:$0xff]
        %v2158 = vld [vmem:[%s2125 + $0x100] sm:$0xff]
        %v2159 = vld [vmem:[%s2125 + $0x108] sm:$0xff]
        %v2160 = vld [vmem:[%s2125 + $0x110] sm:$0xff]
        %v2161 = vld [vmem:[%s2125 + $0x118] sm:$0xff]
        %v2162 = vld [vmem:[%s2125 + $0x120] sm:$0xff]
        %v2163 = vld [vmem:[%s2125 + $0x128] sm:$0xff]
        %v2164 = vld [vmem:[%s2125 + $0x130] sm:$0xff]
        %v2165 = vld [vmem:[%s2125 + $0x138] sm:$0xff]
        %v2166 = vld [vmem:[%s2125 + $0x140] sm:$0xff]
        %v2167 = vld [vmem:[%s2125 + $0x148] sm:$0xff]
        %v2168 = vld [vmem:[%s2125 + $0x150] sm:$0xff]
        %v2169 = vld [vmem:[%s2125 + $0x158] sm:$0xff]
        %v2170 = vld [vmem:[%s2125 + $0x160] sm:$0xff]
        %v2171 = vld [vmem:[%s2125 + $0x168] sm:$0xff]
        %v2172 = vld [vmem:[%s2125 + $0x170] sm:$0xff]
        %v2173 = vld [vmem:[%s2125 + $0x178] sm:$0xff]
        %v2174 = vld [vmem:[%s2125 + $0x180] sm:$0xff]
        %v2175 = vld [vmem:[%s2125 + $0x188] sm:$0xff]
        %v2176 = vld [vmem:[%s2125 + $0x190] sm:$0xff]
        %v2177 = vld [vmem:[%s2125 + $0x198] sm:$0xff]
        %v2178 = vld [vmem:[%s2125 + $0x1a0] sm:$0xff]
        %v2179 = vld [vmem:[%s2125 + $0x1a8] sm:$0xff]
        %v2180 = vld [vmem:[%s2125 + $0x1b0] sm:$0xff]
        %v2181 = vld [vmem:[%s2125 + $0x1b8] sm:$0xff]
        %v2182 = vld [vmem:[%s2125 + $0x1c0] sm:$0xff]
        %v2183 = vld [vmem:[%s2125 + $0x1c8] sm:$0xff]
        %v2184 = vld [vmem:[%s2125 + $0x1d0] sm:$0xff]
        %v2185 = vld [vmem:[%s2125 + $0x1d8] sm:$0xff]
        %v2186 = vld [vmem:[%s2125 + $0x1e0] sm:$0xff]
        %v2187 = vld [vmem:[%s2125 + $0x1e8] sm:$0xff]
        %v2188 = vld [vmem:[%s2125 + $0x1f0] sm:$0xff]
        %v2189 = vld [vmem:[%s2125 + $0x1f8] sm:$0xff]
        %v2190 = vld [vmem:[%s2125 + $0x200] sm:$0xff]
        %v2191 = vld [vmem:[%s2125 + $0x208] sm:$0xff]
        %v2192 = vld [vmem:[%s2125 + $0x210] sm:$0xff]
        %v2193 = vld [vmem:[%s2125 + $0x218] sm:$0xff]
        %v2194 = vld [vmem:[%s2125 + $0x220] sm:$0xff]
        %v2195 = vld [vmem:[%s2125 + $0x228] sm:$0xff]
        %v2196 = vld [vmem:[%s2125 + $0x230] sm:$0xff]
        %v2197 = vld [vmem:[%s2125 + $0x238] sm:$0xff]
        %v2198 = vld [vmem:[%s2125 + $0x240] sm:$0xff]
        %v2199 = vld [vmem:[%s2125 + $0x248] sm:$0xff]
        %v2200 = vld [vmem:[%s2125 + $0x250] sm:$0xff]
        %v2201 = vld [vmem:[%s2125 + $0x258] sm:$0xff]
        %v2202 = vld [vmem:[%s2125 + $0x260] sm:$0xff]
        %v2203 = vld [vmem:[%s2125 + $0x268] sm:$0xff]
        %v2204 = vld [vmem:[%s2125 + $0x270] sm:$0xff]
        %v2205 = vld [vmem:[%s2125 + $0x278] sm:$0xff]
        %v2206 = vld [vmem:[%s2125 + $0x280] sm:$0xff]
        %v2207 = vld [vmem:[%s2125 + $0x288] sm:$0xff]
        %v2208 = vld [vmem:[%s2125 + $0x290] sm:$0xff]
        %v2209 = vld [vmem:[%s2125 + $0x298] sm:$0xff]
        %v2210 = vld [vmem:[%s2125 + $0x2a0] sm:$0xff]
        %v2211 = vld [vmem:[%s2125 + $0x2a8] sm:$0xff]
        %v2212 = vld [vmem:[%s2125 + $0x2b0] sm:$0xff]
        %v2213 = vld [vmem:[%s2125 + $0x2b8] sm:$0xff]
        %v2214 = vld [vmem:[%s2125 + $0x2c0] sm:$0xff]
        %v2215 = vld [vmem:[%s2125 + $0x2c8] sm:$0xff]
        %v2216 = vld [vmem:[%s2125 + $0x2d0] sm:$0xff]
        %v2217 = vld [vmem:[%s2125 + $0x2d8] sm:$0xff]
        %v2218 = vld [vmem:[%s2125 + $0x2e0] sm:$0xff]
        %v2219 = vld [vmem:[%s2125 + $0x2e8] sm:$0xff]
        %v2220 = vld [vmem:[%s2125 + $0x2f0] sm:$0xff]
        %v2221 = vld [vmem:[%s2125 + $0x2f8] sm:$0xff]
        %v2222 = vld [vmem:[%s2125 + $0x300] sm:$0xff]
        %v2223 = vld [vmem:[%s2125 + $0x308] sm:$0xff]
        %v2224 = vld [vmem:[%s2125 + $0x310] sm:$0xff]
        %v2225 = vld [vmem:[%s2125 + $0x318] sm:$0xff]
        %v2226 = vld [vmem:[%s2125 + $0x320] sm:$0xff]
        %v2227 = vld [vmem:[%s2125 + $0x328] sm:$0xff]
        %v2228 = vld [vmem:[%s2125 + $0x330] sm:$0xff]
        %v2229 = vld [vmem:[%s2125 + $0x338] sm:$0xff]
        %v2230 = vld [vmem:[%s2125 + $0x340] sm:$0xff]
        %v2231 = vld [vmem:[%s2125 + $0x348] sm:$0xff]
        %v2232 = vld [vmem:[%s2125 + $0x350] sm:$0xff]
        %v2233 = vld [vmem:[%s2125 + $0x358] sm:$0xff]
        %v2234 = vld [vmem:[%s2125 + $0x360] sm:$0xff]
        %v2235 = vld [vmem:[%s2125 + $0x368] sm:$0xff]
        %v2236 = vld [vmem:[%s2125 + $0x370] sm:$0xff]
        %v2237 = vld [vmem:[%s2125 + $0x378] sm:$0xff]
        %v2238 = vld [vmem:[%s2125 + $0x380] sm:$0xff]
        %v2239 = vld [vmem:[%s2125 + $0x388] sm:$0xff]
        %v2240 = vld [vmem:[%s2125 + $0x390] sm:$0xff]
        %v2241 = vld [vmem:[%s2125 + $0x398] sm:$0xff]
        %v2242 = vld [vmem:[%s2125 + $0x3a0] sm:$0xff]
        %v2243 = vld [vmem:[%s2125 + $0x3a8] sm:$0xff]
        %v2244 = vld [vmem:[%s2125 + $0x3b0] sm:$0xff]
        %v2245 = vld [vmem:[%s2125 + $0x3b8] sm:$0xff]
        %v2246 = vld [vmem:[%s2125 + $0x3c0] sm:$0xff]
        %v2247 = vld [vmem:[%s2125 + $0x3c8] sm:$0xff]
        %v2248 = vld [vmem:[%s2125 + $0x3d0] sm:$0xff]
        %v2249 = vld [vmem:[%s2125 + $0x3d8] sm:$0xff]
        %v2250 = vld [vmem:[%s2125 + $0x3e0] sm:$0xff]
        %v2251 = vld [vmem:[%s2125 + $0x3e8] sm:$0xff]
        %v2252 = vld [vmem:[%s2125 + $0x3f0] sm:$0xff]
        %v2253 = vld [vmem:[%s2125 + $0x3f8] sm:$0xff]
        %v2254 = vld [vmem:[%s2125 + $0x400] sm:$0xff]
        %v2255 = vld [vmem:[%s2125 + $0x408] sm:$0xff]
        %v2256 = vld [vmem:[%s2125 + $0x410] sm:$0xff]
        %v2257 = vld [vmem:[%s2125 + $0x418] sm:$0xff]
        %v2258 = vld [vmem:[%s2125 + $0x420] sm:$0xff]
        %v2259 = vld [vmem:[%s2125 + $0x428] sm:$0xff]
        %v2260 = vld [vmem:[%s2125 + $0x430] sm:$0xff]
        %v2261 = vld [vmem:[%s2125 + $0x438] sm:$0xff]
        %v2262 = vld [vmem:[%s2125 + $0x440] sm:$0xff]
        %v2263 = vld [vmem:[%s2125 + $0x448] sm:$0xff]
        %v2264 = vld [vmem:[%s2125 + $0x450] sm:$0xff]
        %v2265 = vld [vmem:[%s2125 + $0x458] sm:$0xff]
        %v2266 = vld [vmem:[%s2125 + $0x460] sm:$0xff]
        %v2267 = vld [vmem:[%s2125 + $0x468] sm:$0xff]
        %v2268 = vld [vmem:[%s2125 + $0x470] sm:$0xff]
        %v2269 = vld [vmem:[%s2125 + $0x478] sm:$0xff]
        %2270 = vmatpush.msra.mxu0 %v2186
        %2271 = vmatpush.msra.mxu0 %v2182
        %2272 = vmatpush.msra.mxu0 %v2178
        %2273 = vmatpush.msra.mxu0 %v2174
        %2274 = vmatpush.msra.mxu0 %v2170
        %2275 = vmatpush.msra.mxu0 %v2166
        %2276 = vmatpush.msra.mxu0 %v2162
        %2277 = vmatpush.msra.mxu0 %v2158
        %2278 = vmatpush.msra.mxu0 %v2154
        %2279 = vmatpush.msra.mxu0 %v2150
        %2280 = vmatpush.msra.mxu0 %v2146
        %2281 = vmatpush.msra.mxu0 %v2142
        %2282 = vmatpush.msra.mxu0 %v2138
        %2283 = vmatpush.msra.mxu0 %v2134
        %2284 = vmatpush.msra.mxu0 %v2130
        %2285 = vmatpush.msra.mxu0 %v2126
        %2286 = vmatmul.f32.gmra.mxu0 %v1874
        %v2287 = vpop.f32.mrf.mxu0
        %v2288 = vadd.f32 0.0, %v2287
        %2289 = vdwg.mxu0
        %2290 = vmatpush.msra.mxu0 %v2250
        %2291 = vmatpush.msra.mxu0 %v2246
        %2292 = vmatpush.msra.mxu0 %v2242
        %2293 = vmatpush.msra.mxu0 %v2238
        %2294 = vmatpush.msra.mxu0 %v2234
        %2295 = vmatpush.msra.mxu0 %v2230
        %2296 = vmatpush.msra.mxu0 %v2226
        %2297 = vmatpush.msra.mxu0 %v2222
        %2298 = vmatpush.msra.mxu0 %v2218
        %2299 = vmatpush.msra.mxu0 %v2214
        %2300 = vmatpush.msra.mxu0 %v2210
        %2301 = vmatpush.msra.mxu0 %v2206
        %2302 = vmatpush.msra.mxu0 %v2202
        %2303 = vmatpush.msra.mxu0 %v2198
        %2304 = vmatpush.msra.mxu0 %v2194
        %2305 = vmatpush.msra.mxu0 %v2190
        %2306 = vmatmul.f32.gmra.mxu0 %v1875
        %v2307 = vpop.f32.mrf.mxu0
        %v2308 = vadd.f32 %v2288, %v2307
        %2309 = vdwg.mxu0
        %2310 = vmatpush.msra.mxu0 0.0
        %2311 = vmatpush.msra.mxu0 0.0
        %2312 = vmatpush.msra.mxu0 0.0
        %2313 = vmatpush.msra.mxu0 0.0
        %2314 = vmatpush.msra.mxu0 0.0
        %2315 = vmatpush.msra.mxu0 0.0
        %2316 = vmatpush.msra.mxu0 0.0
        %2317 = vmatpush.msra.mxu0 0.0
        %2318 = vmatpush.msra.mxu0 0.0
        %2319 = vmatpush.msra.mxu0 0.0
        %2320 = vmatpush.msra.mxu0 0.0
        %2321 = vmatpush.msra.mxu0 0.0
        %2322 = vmatpush.msra.mxu0 %v2266
        %2323 = vmatpush.msra.mxu0 %v2262
        %2324 = vmatpush.msra.mxu0 %v2258
        %2325 = vmatpush.msra.mxu0 %v2254
        %2326 = vmatmul.f32.gmra.mxu0 %v1879
        %v2327 = vpop.f32.mrf.mxu0
        %v2328 = vadd.f32 %v2308, %v2327
        %2329 = vdwg.mxu0
        %2330 = vmatpush.msra.mxu0 %v2187
        %2331 = vmatpush.msra.mxu0 %v2183
        %2332 = vmatpush.msra.mxu0 %v2179
        %2333 = vmatpush.msra.mxu0 %v2175
        %2334 = vmatpush.msra.mxu0 %v2171
        %2335 = vmatpush.msra.mxu0 %v2167
        %2336 = vmatpush.msra.mxu0 %v2163
        %2337 = vmatpush.msra.mxu0 %v2159
        %2338 = vmatpush.msra.mxu0 %v2155
        %2339 = vmatpush.msra.mxu0 %v2151
        %2340 = vmatpush.msra.mxu0 %v2147
        %2341 = vmatpush.msra.mxu0 %v2143
        %2342 = vmatpush.msra.mxu0 %v2139
        %2343 = vmatpush.msra.mxu0 %v2135
        %2344 = vmatpush.msra.mxu0 %v2131
        %2345 = vmatpush.msra.mxu0 %v2127
        %2346 = vmatmul.f32.gmra.mxu0 %v1874
        %v2347 = vpop.f32.mrf.mxu0
        %v2348 = vadd.f32 0.0, %v2347
        %2349 = vdwg.mxu0
        %2350 = vmatpush.msra.mxu0 %v2251
        %2351 = vmatpush.msra.mxu0 %v2247
        %2352 = vmatpush.msra.mxu0 %v2243
        %2353 = vmatpush.msra.mxu0 %v2239
        %2354 = vmatpush.msra.mxu0 %v2235
        %2355 = vmatpush.msra.mxu0 %v2231
        %2356 = vmatpush.msra.mxu0 %v2227
        %2357 = vmatpush.msra.mxu0 %v2223
        %2358 = vmatpush.msra.mxu0 %v2219
        %2359 = vmatpush.msra.mxu0 %v2215
        %2360 = vmatpush.msra.mxu0 %v2211
        %2361 = vmatpush.msra.mxu0 %v2207
        %2362 = vmatpush.msra.mxu0 %v2203
        %2363 = vmatpush.msra.mxu0 %v2199
        %2364 = vmatpush.msra.mxu0 %v2195
        %2365 = vmatpush.msra.mxu0 %v2191
        %2366 = vmatmul.f32.gmra.mxu0 %v1875
        %v2367 = vpop.f32.mrf.mxu0
        %v2368 = vadd.f32 %v2348, %v2367
        %2369 = vdwg.mxu0
        %2370 = vmatpush.msra.mxu0 0.0
        %2371 = vmatpush.msra.mxu0 0.0
        %2372 = vmatpush.msra.mxu0 0.0
        %2373 = vmatpush.msra.mxu0 0.0
        %2374 = vmatpush.msra.mxu0 0.0
        %2375 = vmatpush.msra.mxu0 0.0
        %2376 = vmatpush.msra.mxu0 0.0
        %2377 = vmatpush.msra.mxu0 0.0
        %2378 = vmatpush.msra.mxu0 0.0
        %2379 = vmatpush.msra.mxu0 0.0
        %2380 = vmatpush.msra.mxu0 0.0
        %2381 = vmatpush.msra.mxu0 0.0
        %2382 = vmatpush.msra.mxu0 %v2267
        %2383 = vmatpush.msra.mxu0 %v2263
        %2384 = vmatpush.msra.mxu0 %v2259
        %2385 = vmatpush.msra.mxu0 %v2255
        %2386 = vmatmul.f32.gmra.mxu0 %v1879
        %v2387 = vpop.f32.mrf.mxu0
        %v2388 = vadd.f32 %v2368, %v2387
        %2389 = vdwg.mxu0
        %2390 = vmatpush.msra.mxu0 %v2188
        %2391 = vmatpush.msra.mxu0 %v2184
        %2392 = vmatpush.msra.mxu0 %v2180
        %2393 = vmatpush.msra.mxu0 %v2176
        %2394 = vmatpush.msra.mxu0 %v2172
        %2395 = vmatpush.msra.mxu0 %v2168
        %2396 = vmatpush.msra.mxu0 %v2164
        %2397 = vmatpush.msra.mxu0 %v2160
        %2398 = vmatpush.msra.mxu0 %v2156
        %2399 = vmatpush.msra.mxu0 %v2152
        %2400 = vmatpush.msra.mxu0 %v2148
        %2401 = vmatpush.msra.mxu0 %v2144
        %2402 = vmatpush.msra.mxu0 %v2140
        %2403 = vmatpush.msra.mxu0 %v2136
        %2404 = vmatpush.msra.mxu0 %v2132
        %2405 = vmatpush.msra.mxu0 %v2128
        %2406 = vmatmul.f32.gmra.mxu0 %v1874
        %v2407 = vpop.f32.mrf.mxu0
        %v2408 = vadd.f32 0.0, %v2407
        %2409 = vdwg.mxu0
        %2410 = vmatpush.msra.mxu0 %v2252
        %2411 = vmatpush.msra.mxu0 %v2248
        %2412 = vmatpush.msra.mxu0 %v2244
        %2413 = vmatpush.msra.mxu0 %v2240
        %2414 = vmatpush.msra.mxu0 %v2236
        %2415 = vmatpush.msra.mxu0 %v2232
        %2416 = vmatpush.msra.mxu0 %v2228
        %2417 = vmatpush.msra.mxu0 %v2224
        %2418 = vmatpush.msra.mxu0 %v2220
        %2419 = vmatpush.msra.mxu0 %v2216
        %2420 = vmatpush.msra.mxu0 %v2212
        %2421 = vmatpush.msra.mxu0 %v2208
        %2422 = vmatpush.msra.mxu0 %v2204
        %2423 = vmatpush.msra.mxu0 %v2200
        %2424 = vmatpush.msra.mxu0 %v2196
        %2425 = vmatpush.msra.mxu0 %v2192
        %2426 = vmatmul.f32.gmra.mxu0 %v1875
        %v2427 = vpop.f32.mrf.mxu0
        %v2428 = vadd.f32 %v2408, %v2427
        %2429 = vdwg.mxu0
        %2430 = vmatpush.msra.mxu0 0.0
        %2431 = vmatpush.msra.mxu0 0.0
        %2432 = vmatpush.msra.mxu0 0.0
        %2433 = vmatpush.msra.mxu0 0.0
        %2434 = vmatpush.msra.mxu0 0.0
        %2435 = vmatpush.msra.mxu0 0.0
        %2436 = vmatpush.msra.mxu0 0.0
        %2437 = vmatpush.msra.mxu0 0.0
        %2438 = vmatpush.msra.mxu0 0.0
        %2439 = vmatpush.msra.mxu0 0.0
        %2440 = vmatpush.msra.mxu0 0.0
        %2441 = vmatpush.msra.mxu0 0.0
        %2442 = vmatpush.msra.mxu0 %v2268
        %2443 = vmatpush.msra.mxu0 %v2264
        %2444 = vmatpush.msra.mxu0 %v2260
        %2445 = vmatpush.msra.mxu0 %v2256
        %2446 = vmatmul.f32.gmra.mxu0 %v1879
        %v2447 = vpop.f32.mrf.mxu0
        %v2448 = vadd.f32 %v2428, %v2447
        %2449 = vdwg.mxu0
        %2450 = vmatpush.msra.mxu0 %v2189
        %2451 = vmatpush.msra.mxu0 %v2185
        %2452 = vmatpush.msra.mxu0 %v2181
        %2453 = vmatpush.msra.mxu0 %v2177
        %2454 = vmatpush.msra.mxu0 %v2173
        %2455 = vmatpush.msra.mxu0 %v2169
        %2456 = vmatpush.msra.mxu0 %v2165
        %2457 = vmatpush.msra.mxu0 %v2161
        %2458 = vmatpush.msra.mxu0 %v2157
        %2459 = vmatpush.msra.mxu0 %v2153
        %2460 = vmatpush.msra.mxu0 %v2149
        %2461 = vmatpush.msra.mxu0 %v2145
        %2462 = vmatpush.msra.mxu0 %v2141
        %2463 = vmatpush.msra.mxu0 %v2137
        %2464 = vmatpush.msra.mxu0 %v2133
        %2465 = vmatpush.msra.mxu0 %v2129
        %2466 = vmatmul.f32.gmra.mxu0 %v1874
        %v2467 = vpop.f32.mrf.mxu0
        %v2468 = vadd.f32 0.0, %v2467
        %2469 = vdwg.mxu0
        %2470 = vmatpush.msra.mxu0 %v2253
        %2471 = vmatpush.msra.mxu0 %v2249
        %2472 = vmatpush.msra.mxu0 %v2245
        %2473 = vmatpush.msra.mxu0 %v2241
        %2474 = vmatpush.msra.mxu0 %v2237
        %2475 = vmatpush.msra.mxu0 %v2233
        %2476 = vmatpush.msra.mxu0 %v2229
        %2477 = vmatpush.msra.mxu0 %v2225
        %2478 = vmatpush.msra.mxu0 %v2221
        %2479 = vmatpush.msra.mxu0 %v2217
        %2480 = vmatpush.msra.mxu0 %v2213
        %2481 = vmatpush.msra.mxu0 %v2209
        %2482 = vmatpush.msra.mxu0 %v2205
        %2483 = vmatpush.msra.mxu0 %v2201
        %2484 = vmatpush.msra.mxu0 %v2197
        %2485 = vmatpush.msra.mxu0 %v2193
        %2486 = vmatmul.f32.gmra.mxu0 %v1875
        %v2487 = vpop.f32.mrf.mxu0
        %v2488 = vadd.f32 %v2468, %v2487
        %2489 = vdwg.mxu0
        %2490 = vmatpush.msra.mxu0 0.0
        %2491 = vmatpush.msra.mxu0 0.0
        %2492 = vmatpush.msra.mxu0 0.0
        %2493 = vmatpush.msra.mxu0 0.0
        %2494 = vmatpush.msra.mxu0 0.0
        %2495 = vmatpush.msra.mxu0 0.0
        %2496 = vmatpush.msra.mxu0 0.0
        %2497 = vmatpush.msra.mxu0 0.0
        %2498 = vmatpush.msra.mxu0 0.0
        %2499 = vmatpush.msra.mxu0 0.0
        %2500 = vmatpush.msra.mxu0 0.0
        %2501 = vmatpush.msra.mxu0 0.0
        %2502 = vmatpush.msra.mxu0 %v2269
        %2503 = vmatpush.msra.mxu0 %v2265
        %2504 = vmatpush.msra.mxu0 %v2261
        %2505 = vmatpush.msra.mxu0 %v2257
        %2506 = vmatmul.f32.gmra.mxu0 %v1879
        %v2507 = vpop.f32.mrf.mxu0
        %v2508 = vadd.f32 %v2488, %v2507
        %2509 = vdwg.mxu0
        %v2510 = vadd.f32 %v1864, %v2328
        %v2511 = vadd.f32 %v1865, %v2388
        %v2512 = vadd.f32 %v1866, %v2448
        %v2513 = vadd.f32 %v1867, %v2508
        %v2514 = vld [vmem:[%s197] sm:$0xfc]
        %v2515 = vld [vmem:[%s197 + $0x8] sm:$0xfc]
        %v2516 = vld [vmem:[%s197 + $0x10] sm:$0xfc]
        %v2517 = vld [vmem:[%s197 + $0x18] sm:$0x1]
        %v2518 = vld [vmem:[%s197 + $0x20] sm:$0x1]
        %v2519 = vld [vmem:[%s197 + $0x28] sm:$0x1]
        %vm2526 = vcmask 1045504
        %v2527 = vrot.slane %v2514, 2
        %v2528 = vrot.slane %v2517, 2
        %v2529 = vsel %vm2526, %v2527, %v2528
        %v2530 = vrot.slane %v2515, 2
        %v2531 = vrot.slane %v2518, 2
        %v2532 = vsel %vm2526, %v2530, %v2531
        %v2533 = vrot.slane %v2516, 2
        %v2534 = vrot.slane %v2519, 2
        %v2535 = vsel %vm2526, %v2533, %v2534
        %v2538 = vsel %vm499, %v2535, 0
        %2540 = vmatpush.msra.mxu0 %v2186
        %2541 = vmatpush.msra.mxu0 %v2182
        %2542 = vmatpush.msra.mxu0 %v2178
        %2543 = vmatpush.msra.mxu0 %v2174
        %2544 = vmatpush.msra.mxu0 %v2170
        %2545 = vmatpush.msra.mxu0 %v2166
        %2546 = vmatpush.msra.mxu0 %v2162
        %2547 = vmatpush.msra.mxu0 %v2158
        %2548 = vmatpush.msra.mxu0 %v2154
        %2549 = vmatpush.msra.mxu0 %v2150
        %2550 = vmatpush.msra.mxu0 %v2146
        %2551 = vmatpush.msra.mxu0 %v2142
        %2552 = vmatpush.msra.mxu0 %v2138
        %2553 = vmatpush.msra.mxu0 %v2134
        %2554 = vmatpush.msra.mxu0 %v2130
        %2555 = vmatpush.msra.mxu0 %v2126
        %2556 = vmatmul.f32.gmra.mxu0 %v2529
        %v2557 = vpop.f32.mrf.mxu0
        %v2558 = vadd.f32 0.0, %v2557
        %2559 = vdwg.mxu0
        %2560 = vmatpush.msra.mxu0 %v2250
        %2561 = vmatpush.msra.mxu0 %v2246
        %2562 = vmatpush.msra.mxu0 %v2242
        %2563 = vmatpush.msra.mxu0 %v2238
        %2564 = vmatpush.msra.mxu0 %v2234
        %2565 = vmatpush.msra.mxu0 %v2230
        %2566 = vmatpush.msra.mxu0 %v2226
        %2567 = vmatpush.msra.mxu0 %v2222
        %2568 = vmatpush.msra.mxu0 %v2218
        %2569 = vmatpush.msra.mxu0 %v2214
        %2570 = vmatpush.msra.mxu0 %v2210
        %2571 = vmatpush.msra.mxu0 %v2206
        %2572 = vmatpush.msra.mxu0 %v2202
        %2573 = vmatpush.msra.mxu0 %v2198
        %2574 = vmatpush.msra.mxu0 %v2194
        %2575 = vmatpush.msra.mxu0 %v2190
        %2576 = vmatmul.f32.gmra.mxu0 %v2532
        %v2577 = vpop.f32.mrf.mxu0
        %v2578 = vadd.f32 %v2558, %v2577
        %2579 = vdwg.mxu0
        %2580 = vmatpush.msra.mxu0 0.0
        %2581 = vmatpush.msra.mxu0 0.0
        %2582 = vmatpush.msra.mxu0 0.0
        %2583 = vmatpush.msra.mxu0 0.0
        %2584 = vmatpush.msra.mxu0 0.0
        %2585 = vmatpush.msra.mxu0 0.0
        %2586 = vmatpush.msra.mxu0 0.0
        %2587 = vmatpush.msra.mxu0 0.0
        %2588 = vmatpush.msra.mxu0 0.0
        %2589 = vmatpush.msra.mxu0 0.0
        %2590 = vmatpush.msra.mxu0 0.0
        %2591 = vmatpush.msra.mxu0 0.0
        %2592 = vmatpush.msra.mxu0 %v2266
        %2593 = vmatpush.msra.mxu0 %v2262
        %2594 = vmatpush.msra.mxu0 %v2258
        %2595 = vmatpush.msra.mxu0 %v2254
        %2596 = vmatmul.f32.gmra.mxu0 %v2538
        %v2597 = vpop.f32.mrf.mxu0
        %v2598 = vadd.f32 %v2578, %v2597
        %2599 = vdwg.mxu0
        %2600 = vmatpush.msra.mxu0 %v2187
        %2601 = vmatpush.msra.mxu0 %v2183
        %2602 = vmatpush.msra.mxu0 %v2179
        %2603 = vmatpush.msra.mxu0 %v2175
        %2604 = vmatpush.msra.mxu0 %v2171
        %2605 = vmatpush.msra.mxu0 %v2167
        %2606 = vmatpush.msra.mxu0 %v2163
        %2607 = vmatpush.msra.mxu0 %v2159
        %2608 = vmatpush.msra.mxu0 %v2155
        %2609 = vmatpush.msra.mxu0 %v2151
        %2610 = vmatpush.msra.mxu0 %v2147
        %2611 = vmatpush.msra.mxu0 %v2143
        %2612 = vmatpush.msra.mxu0 %v2139
        %2613 = vmatpush.msra.mxu0 %v2135
        %2614 = vmatpush.msra.mxu0 %v2131
        %2615 = vmatpush.msra.mxu0 %v2127
        %2616 = vmatmul.f32.gmra.mxu0 %v2529
        %v2617 = vpop.f32.mrf.mxu0
        %v2618 = vadd.f32 0.0, %v2617
        %2619 = vdwg.mxu0
        %2620 = vmatpush.msra.mxu0 %v2251
        %2621 = vmatpush.msra.mxu0 %v2247
        %2622 = vmatpush.msra.mxu0 %v2243
        %2623 = vmatpush.msra.mxu0 %v2239
        %2624 = vmatpush.msra.mxu0 %v2235
        %2625 = vmatpush.msra.mxu0 %v2231
        %2626 = vmatpush.msra.mxu0 %v2227
        %2627 = vmatpush.msra.mxu0 %v2223
        %2628 = vmatpush.msra.mxu0 %v2219
        %2629 = vmatpush.msra.mxu0 %v2215
        %2630 = vmatpush.msra.mxu0 %v2211
        %2631 = vmatpush.msra.mxu0 %v2207
        %2632 = vmatpush.msra.mxu0 %v2203
        %2633 = vmatpush.msra.mxu0 %v2199
        %2634 = vmatpush.msra.mxu0 %v2195
        %2635 = vmatpush.msra.mxu0 %v2191
        %2636 = vmatmul.f32.gmra.mxu0 %v2532
        %v2637 = vpop.f32.mrf.mxu0
        %v2638 = vadd.f32 %v2618, %v2637
        %2639 = vdwg.mxu0
        %2640 = vmatpush.msra.mxu0 0.0
        %2641 = vmatpush.msra.mxu0 0.0
        %2642 = vmatpush.msra.mxu0 0.0
        %2643 = vmatpush.msra.mxu0 0.0
        %2644 = vmatpush.msra.mxu0 0.0
        %2645 = vmatpush.msra.mxu0 0.0
        %2646 = vmatpush.msra.mxu0 0.0
        %2647 = vmatpush.msra.mxu0 0.0
        %2648 = vmatpush.msra.mxu0 0.0
        %2649 = vmatpush.msra.mxu0 0.0
        %2650 = vmatpush.msra.mxu0 0.0
        %2651 = vmatpush.msra.mxu0 0.0
        %2652 = vmatpush.msra.mxu0 %v2267
        %2653 = vmatpush.msra.mxu0 %v2263
        %2654 = vmatpush.msra.mxu0 %v2259
        %2655 = vmatpush.msra.mxu0 %v2255
        %2656 = vmatmul.f32.gmra.mxu0 %v2538
        %v2657 = vpop.f32.mrf.mxu0
        %v2658 = vadd.f32 %v2638, %v2657
        %2659 = vdwg.mxu0
        %2660 = vmatpush.msra.mxu0 %v2188
        %2661 = vmatpush.msra.mxu0 %v2184
        %2662 = vmatpush.msra.mxu0 %v2180
        %2663 = vmatpush.msra.mxu0 %v2176
        %2664 = vmatpush.msra.mxu0 %v2172
        %2665 = vmatpush.msra.mxu0 %v2168
        %2666 = vmatpush.msra.mxu0 %v2164
        %2667 = vmatpush.msra.mxu0 %v2160
        %2668 = vmatpush.msra.mxu0 %v2156
        %2669 = vmatpush.msra.mxu0 %v2152
        %2670 = vmatpush.msra.mxu0 %v2148
        %2671 = vmatpush.msra.mxu0 %v2144
        %2672 = vmatpush.msra.mxu0 %v2140
        %2673 = vmatpush.msra.mxu0 %v2136
        %2674 = vmatpush.msra.mxu0 %v2132
        %2675 = vmatpush.msra.mxu0 %v2128
        %2676 = vmatmul.f32.gmra.mxu0 %v2529
        %v2677 = vpop.f32.mrf.mxu0
        %v2678 = vadd.f32 0.0, %v2677
        %2679 = vdwg.mxu0
        %2680 = vmatpush.msra.mxu0 %v2252
        %2681 = vmatpush.msra.mxu0 %v2248
        %2682 = vmatpush.msra.mxu0 %v2244
        %2683 = vmatpush.msra.mxu0 %v2240
        %2684 = vmatpush.msra.mxu0 %v2236
        %2685 = vmatpush.msra.mxu0 %v2232
        %2686 = vmatpush.msra.mxu0 %v2228
        %2687 = vmatpush.msra.mxu0 %v2224
        %2688 = vmatpush.msra.mxu0 %v2220
        %2689 = vmatpush.msra.mxu0 %v2216
        %2690 = vmatpush.msra.mxu0 %v2212
        %2691 = vmatpush.msra.mxu0 %v2208
        %2692 = vmatpush.msra.mxu0 %v2204
        %2693 = vmatpush.msra.mxu0 %v2200
        %2694 = vmatpush.msra.mxu0 %v2196
        %2695 = vmatpush.msra.mxu0 %v2192
        %2696 = vmatmul.f32.gmra.mxu0 %v2532
        %v2697 = vpop.f32.mrf.mxu0
        %v2698 = vadd.f32 %v2678, %v2697
        %2699 = vdwg.mxu0
        %2700 = vmatpush.msra.mxu0 0.0
        %2701 = vmatpush.msra.mxu0 0.0
        %2702 = vmatpush.msra.mxu0 0.0
        %2703 = vmatpush.msra.mxu0 0.0
        %2704 = vmatpush.msra.mxu0 0.0
        %2705 = vmatpush.msra.mxu0 0.0
        %2706 = vmatpush.msra.mxu0 0.0
        %2707 = vmatpush.msra.mxu0 0.0
        %2708 = vmatpush.msra.mxu0 0.0
        %2709 = vmatpush.msra.mxu0 0.0
        %2710 = vmatpush.msra.mxu0 0.0
        %2711 = vmatpush.msra.mxu0 0.0
        %2712 = vmatpush.msra.mxu0 %v2268
        %2713 = vmatpush.msra.mxu0 %v2264
        %2714 = vmatpush.msra.mxu0 %v2260
        %2715 = vmatpush.msra.mxu0 %v2256
        %2716 = vmatmul.f32.gmra.mxu0 %v2538
        %v2717 = vpop.f32.mrf.mxu0
        %v2718 = vadd.f32 %v2698, %v2717
        %2719 = vdwg.mxu0
        %2720 = vmatpush.msra.mxu0 %v2189
        %2721 = vmatpush.msra.mxu0 %v2185
        %2722 = vmatpush.msra.mxu0 %v2181
        %2723 = vmatpush.msra.mxu0 %v2177
        %2724 = vmatpush.msra.mxu0 %v2173
        %2725 = vmatpush.msra.mxu0 %v2169
        %2726 = vmatpush.msra.mxu0 %v2165
        %2727 = vmatpush.msra.mxu0 %v2161
        %2728 = vmatpush.msra.mxu0 %v2157
        %2729 = vmatpush.msra.mxu0 %v2153
        %2730 = vmatpush.msra.mxu0 %v2149
        %2731 = vmatpush.msra.mxu0 %v2145
        %2732 = vmatpush.msra.mxu0 %v2141
        %2733 = vmatpush.msra.mxu0 %v2137
        %2734 = vmatpush.msra.mxu0 %v2133
        %2735 = vmatpush.msra.mxu0 %v2129
        %2736 = vmatmul.f32.gmra.mxu0 %v2529
        %v2737 = vpop.f32.mrf.mxu0
        %v2738 = vadd.f32 0.0, %v2737
        %2739 = vdwg.mxu0
        %2740 = vmatpush.msra.mxu0 %v2253
        %2741 = vmatpush.msra.mxu0 %v2249
        %2742 = vmatpush.msra.mxu0 %v2245
        %2743 = vmatpush.msra.mxu0 %v2241
        %2744 = vmatpush.msra.mxu0 %v2237
        %2745 = vmatpush.msra.mxu0 %v2233
        %2746 = vmatpush.msra.mxu0 %v2229
        %2747 = vmatpush.msra.mxu0 %v2225
        %2748 = vmatpush.msra.mxu0 %v2221
        %2749 = vmatpush.msra.mxu0 %v2217
        %2750 = vmatpush.msra.mxu0 %v2213
        %2751 = vmatpush.msra.mxu0 %v2209
        %2752 = vmatpush.msra.mxu0 %v2205
        %2753 = vmatpush.msra.mxu0 %v2201
        %2754 = vmatpush.msra.mxu0 %v2197
        %2755 = vmatpush.msra.mxu0 %v2193
        %2756 = vmatmul.f32.gmra.mxu0 %v2532
        %v2757 = vpop.f32.mrf.mxu0
        %v2758 = vadd.f32 %v2738, %v2757
        %2759 = vdwg.mxu0
        %2760 = vmatpush.msra.mxu0 0.0
        %2761 = vmatpush.msra.mxu0 0.0
        %2762 = vmatpush.msra.mxu0 0.0
        %2763 = vmatpush.msra.mxu0 0.0
        %2764 = vmatpush.msra.mxu0 0.0
        %2765 = vmatpush.msra.mxu0 0.0
        %2766 = vmatpush.msra.mxu0 0.0
        %2767 = vmatpush.msra.mxu0 0.0
        %2768 = vmatpush.msra.mxu0 0.0
        %2769 = vmatpush.msra.mxu0 0.0
        %2770 = vmatpush.msra.mxu0 0.0
        %2771 = vmatpush.msra.mxu0 0.0
        %2772 = vmatpush.msra.mxu0 %v2269
        %2773 = vmatpush.msra.mxu0 %v2265
        %2774 = vmatpush.msra.mxu0 %v2261
        %2775 = vmatpush.msra.mxu0 %v2257
        %2776 = vmatmul.f32.gmra.mxu0 %v2538
        %v2777 = vpop.f32.mrf.mxu0
        %v2778 = vadd.f32 %v2758, %v2777
        %2779 = vdwg.mxu0
        %v2780 = vadd.f32 %v2121, %v2598
        %v2781 = vadd.f32 %v2122, %v2658
        %v2782 = vadd.f32 %v2123, %v2718
        %v2783 = vadd.f32 %v2124, %v2778
        %s2784 = scalar_lea.vmem [#allocation2], 4608
        %v2785 = vld [vmem:[%s2784] sm:$0xff]
        %v2786 = vld [vmem:[%s2784 + $0x8] sm:$0xff]
        %v2787 = vld [vmem:[%s2784 + $0x10] sm:$0xff]
        %v2788 = vld [vmem:[%s2784 + $0x18] sm:$0xff]
        %v2789 = vld [vmem:[%s2784 + $0x20] sm:$0xff]
        %v2790 = vld [vmem:[%s2784 + $0x28] sm:$0xff]
        %v2791 = vld [vmem:[%s2784 + $0x30] sm:$0xff]
        %v2792 = vld [vmem:[%s2784 + $0x38] sm:$0xff]
        %v2793 = vld [vmem:[%s2784 + $0x40] sm:$0xff]
        %v2794 = vld [vmem:[%s2784 + $0x48] sm:$0xff]
        %v2795 = vld [vmem:[%s2784 + $0x50] sm:$0xff]
        %v2796 = vld [vmem:[%s2784 + $0x58] sm:$0xff]
        %v2797 = vld [vmem:[%s2784 + $0x60] sm:$0xff]
        %v2798 = vld [vmem:[%s2784 + $0x68] sm:$0xff]
        %v2799 = vld [vmem:[%s2784 + $0x70] sm:$0xff]
        %v2800 = vld [vmem:[%s2784 + $0x78] sm:$0xff]
        %v2801 = vld [vmem:[%s2784 + $0x80] sm:$0xff]
        %v2802 = vld [vmem:[%s2784 + $0x88] sm:$0xff]
        %v2803 = vld [vmem:[%s2784 + $0x90] sm:$0xff]
        %v2804 = vld [vmem:[%s2784 + $0x98] sm:$0xff]
        %v2805 = vld [vmem:[%s2784 + $0xa0] sm:$0xff]
        %v2806 = vld [vmem:[%s2784 + $0xa8] sm:$0xff]
        %v2807 = vld [vmem:[%s2784 + $0xb0] sm:$0xff]
        %v2808 = vld [vmem:[%s2784 + $0xb8] sm:$0xff]
        %v2809 = vld [vmem:[%s2784 + $0xc0] sm:$0xff]
        %v2810 = vld [vmem:[%s2784 + $0xc8] sm:$0xff]
        %v2811 = vld [vmem:[%s2784 + $0xd0] sm:$0xff]
        %v2812 = vld [vmem:[%s2784 + $0xd8] sm:$0xff]
        %v2813 = vld [vmem:[%s2784 + $0xe0] sm:$0xff]
        %v2814 = vld [vmem:[%s2784 + $0xe8] sm:$0xff]
        %v2815 = vld [vmem:[%s2784 + $0xf0] sm:$0xff]
        %v2816 = vld [vmem:[%s2784 + $0xf8] sm:$0xff]
        %v2817 = vld [vmem:[%s2784 + $0x100] sm:$0xff]
        %v2818 = vld [vmem:[%s2784 + $0x108] sm:$0xff]
        %v2819 = vld [vmem:[%s2784 + $0x110] sm:$0xff]
        %v2820 = vld [vmem:[%s2784 + $0x118] sm:$0xff]
        %v2821 = vld [vmem:[%s2784 + $0x120] sm:$0xff]
        %v2822 = vld [vmem:[%s2784 + $0x128] sm:$0xff]
        %v2823 = vld [vmem:[%s2784 + $0x130] sm:$0xff]
        %v2824 = vld [vmem:[%s2784 + $0x138] sm:$0xff]
        %v2825 = vld [vmem:[%s2784 + $0x140] sm:$0xff]
        %v2826 = vld [vmem:[%s2784 + $0x148] sm:$0xff]
        %v2827 = vld [vmem:[%s2784 + $0x150] sm:$0xff]
        %v2828 = vld [vmem:[%s2784 + $0x158] sm:$0xff]
        %v2829 = vld [vmem:[%s2784 + $0x160] sm:$0xff]
        %v2830 = vld [vmem:[%s2784 + $0x168] sm:$0xff]
        %v2831 = vld [vmem:[%s2784 + $0x170] sm:$0xff]
        %v2832 = vld [vmem:[%s2784 + $0x178] sm:$0xff]
        %v2833 = vld [vmem:[%s2784 + $0x180] sm:$0xff]
        %v2834 = vld [vmem:[%s2784 + $0x188] sm:$0xff]
        %v2835 = vld [vmem:[%s2784 + $0x190] sm:$0xff]
        %v2836 = vld [vmem:[%s2784 + $0x198] sm:$0xff]
        %v2837 = vld [vmem:[%s2784 + $0x1a0] sm:$0xff]
        %v2838 = vld [vmem:[%s2784 + $0x1a8] sm:$0xff]
        %v2839 = vld [vmem:[%s2784 + $0x1b0] sm:$0xff]
        %v2840 = vld [vmem:[%s2784 + $0x1b8] sm:$0xff]
        %v2841 = vld [vmem:[%s2784 + $0x1c0] sm:$0xff]
        %v2842 = vld [vmem:[%s2784 + $0x1c8] sm:$0xff]
        %v2843 = vld [vmem:[%s2784 + $0x1d0] sm:$0xff]
        %v2844 = vld [vmem:[%s2784 + $0x1d8] sm:$0xff]
        %v2845 = vld [vmem:[%s2784 + $0x1e0] sm:$0xff]
        %v2846 = vld [vmem:[%s2784 + $0x1e8] sm:$0xff]
        %v2847 = vld [vmem:[%s2784 + $0x1f0] sm:$0xff]
        %v2848 = vld [vmem:[%s2784 + $0x1f8] sm:$0xff]
        %v2849 = vld [vmem:[%s2784 + $0x200] sm:$0xff]
        %v2850 = vld [vmem:[%s2784 + $0x208] sm:$0xff]
        %v2851 = vld [vmem:[%s2784 + $0x210] sm:$0xff]
        %v2852 = vld [vmem:[%s2784 + $0x218] sm:$0xff]
        %v2853 = vld [vmem:[%s2784 + $0x220] sm:$0xff]
        %v2854 = vld [vmem:[%s2784 + $0x228] sm:$0xff]
        %v2855 = vld [vmem:[%s2784 + $0x230] sm:$0xff]
        %v2856 = vld [vmem:[%s2784 + $0x238] sm:$0xff]
        %v2857 = vld [vmem:[%s2784 + $0x240] sm:$0xff]
        %v2858 = vld [vmem:[%s2784 + $0x248] sm:$0xff]
        %v2859 = vld [vmem:[%s2784 + $0x250] sm:$0xff]
        %v2860 = vld [vmem:[%s2784 + $0x258] sm:$0xff]
        %v2861 = vld [vmem:[%s2784 + $0x260] sm:$0xff]
        %v2862 = vld [vmem:[%s2784 + $0x268] sm:$0xff]
        %v2863 = vld [vmem:[%s2784 + $0x270] sm:$0xff]
        %v2864 = vld [vmem:[%s2784 + $0x278] sm:$0xff]
        %v2865 = vld [vmem:[%s2784 + $0x280] sm:$0xff]
        %v2866 = vld [vmem:[%s2784 + $0x288] sm:$0xff]
        %v2867 = vld [vmem:[%s2784 + $0x290] sm:$0xff]
        %v2868 = vld [vmem:[%s2784 + $0x298] sm:$0xff]
        %v2869 = vld [vmem:[%s2784 + $0x2a0] sm:$0xff]
        %v2870 = vld [vmem:[%s2784 + $0x2a8] sm:$0xff]
        %v2871 = vld [vmem:[%s2784 + $0x2b0] sm:$0xff]
        %v2872 = vld [vmem:[%s2784 + $0x2b8] sm:$0xff]
        %v2873 = vld [vmem:[%s2784 + $0x2c0] sm:$0xff]
        %v2874 = vld [vmem:[%s2784 + $0x2c8] sm:$0xff]
        %v2875 = vld [vmem:[%s2784 + $0x2d0] sm:$0xff]
        %v2876 = vld [vmem:[%s2784 + $0x2d8] sm:$0xff]
        %v2877 = vld [vmem:[%s2784 + $0x2e0] sm:$0xff]
        %v2878 = vld [vmem:[%s2784 + $0x2e8] sm:$0xff]
        %v2879 = vld [vmem:[%s2784 + $0x2f0] sm:$0xff]
        %v2880 = vld [vmem:[%s2784 + $0x2f8] sm:$0xff]
        %v2881 = vld [vmem:[%s2784 + $0x300] sm:$0xff]
        %v2882 = vld [vmem:[%s2784 + $0x308] sm:$0xff]
        %v2883 = vld [vmem:[%s2784 + $0x310] sm:$0xff]
        %v2884 = vld [vmem:[%s2784 + $0x318] sm:$0xff]
        %v2885 = vld [vmem:[%s2784 + $0x320] sm:$0xff]
        %v2886 = vld [vmem:[%s2784 + $0x328] sm:$0xff]
        %v2887 = vld [vmem:[%s2784 + $0x330] sm:$0xff]
        %v2888 = vld [vmem:[%s2784 + $0x338] sm:$0xff]
        %v2889 = vld [vmem:[%s2784 + $0x340] sm:$0xff]
        %v2890 = vld [vmem:[%s2784 + $0x348] sm:$0xff]
        %v2891 = vld [vmem:[%s2784 + $0x350] sm:$0xff]
        %v2892 = vld [vmem:[%s2784 + $0x358] sm:$0xff]
        %v2893 = vld [vmem:[%s2784 + $0x360] sm:$0xff]
        %v2894 = vld [vmem:[%s2784 + $0x368] sm:$0xff]
        %v2895 = vld [vmem:[%s2784 + $0x370] sm:$0xff]
        %v2896 = vld [vmem:[%s2784 + $0x378] sm:$0xff]
        %v2897 = vld [vmem:[%s2784 + $0x380] sm:$0xff]
        %v2898 = vld [vmem:[%s2784 + $0x388] sm:$0xff]
        %v2899 = vld [vmem:[%s2784 + $0x390] sm:$0xff]
        %v2900 = vld [vmem:[%s2784 + $0x398] sm:$0xff]
        %v2901 = vld [vmem:[%s2784 + $0x3a0] sm:$0xff]
        %v2902 = vld [vmem:[%s2784 + $0x3a8] sm:$0xff]
        %v2903 = vld [vmem:[%s2784 + $0x3b0] sm:$0xff]
        %v2904 = vld [vmem:[%s2784 + $0x3b8] sm:$0xff]
        %v2905 = vld [vmem:[%s2784 + $0x3c0] sm:$0xff]
        %v2906 = vld [vmem:[%s2784 + $0x3c8] sm:$0xff]
        %v2907 = vld [vmem:[%s2784 + $0x3d0] sm:$0xff]
        %v2908 = vld [vmem:[%s2784 + $0x3d8] sm:$0xff]
        %v2909 = vld [vmem:[%s2784 + $0x3e0] sm:$0xff]
        %v2910 = vld [vmem:[%s2784 + $0x3e8] sm:$0xff]
        %v2911 = vld [vmem:[%s2784 + $0x3f0] sm:$0xff]
        %v2912 = vld [vmem:[%s2784 + $0x3f8] sm:$0xff]
        %v2913 = vld [vmem:[%s2784 + $0x400] sm:$0xff]
        %v2914 = vld [vmem:[%s2784 + $0x408] sm:$0xff]
        %v2915 = vld [vmem:[%s2784 + $0x410] sm:$0xff]
        %v2916 = vld [vmem:[%s2784 + $0x418] sm:$0xff]
        %v2917 = vld [vmem:[%s2784 + $0x420] sm:$0xff]
        %v2918 = vld [vmem:[%s2784 + $0x428] sm:$0xff]
        %v2919 = vld [vmem:[%s2784 + $0x430] sm:$0xff]
        %v2920 = vld [vmem:[%s2784 + $0x438] sm:$0xff]
        %v2921 = vld [vmem:[%s2784 + $0x440] sm:$0xff]
        %v2922 = vld [vmem:[%s2784 + $0x448] sm:$0xff]
        %v2923 = vld [vmem:[%s2784 + $0x450] sm:$0xff]
        %v2924 = vld [vmem:[%s2784 + $0x458] sm:$0xff]
        %v2925 = vld [vmem:[%s2784 + $0x460] sm:$0xff]
        %v2926 = vld [vmem:[%s2784 + $0x468] sm:$0xff]
        %v2927 = vld [vmem:[%s2784 + $0x470] sm:$0xff]
        %v2928 = vld [vmem:[%s2784 + $0x478] sm:$0xff]
        %2929 = vmatpush.msra.mxu0 %v2845
        %2930 = vmatpush.msra.mxu0 %v2841
        %2931 = vmatpush.msra.mxu0 %v2837
        %2932 = vmatpush.msra.mxu0 %v2833
        %2933 = vmatpush.msra.mxu0 %v2829
        %2934 = vmatpush.msra.mxu0 %v2825
        %2935 = vmatpush.msra.mxu0 %v2821
        %2936 = vmatpush.msra.mxu0 %v2817
        %2937 = vmatpush.msra.mxu0 %v2813
        %2938 = vmatpush.msra.mxu0 %v2809
        %2939 = vmatpush.msra.mxu0 %v2805
        %2940 = vmatpush.msra.mxu0 %v2801
        %2941 = vmatpush.msra.mxu0 %v2797
        %2942 = vmatpush.msra.mxu0 %v2793
        %2943 = vmatpush.msra.mxu0 %v2789
        %2944 = vmatpush.msra.mxu0 %v2785
        %2945 = vmatmul.f32.gmra.mxu0 %v2529
        %v2946 = vpop.f32.mrf.mxu0
        %v2947 = vadd.f32 0.0, %v2946
        %2948 = vdwg.mxu0
        %2949 = vmatpush.msra.mxu0 %v2909
        %2950 = vmatpush.msra.mxu0 %v2905
        %2951 = vmatpush.msra.mxu0 %v2901
        %2952 = vmatpush.msra.mxu0 %v2897
        %2953 = vmatpush.msra.mxu0 %v2893
        %2954 = vmatpush.msra.mxu0 %v2889
        %2955 = vmatpush.msra.mxu0 %v2885
        %2956 = vmatpush.msra.mxu0 %v2881
        %2957 = vmatpush.msra.mxu0 %v2877
        %2958 = vmatpush.msra.mxu0 %v2873
        %2959 = vmatpush.msra.mxu0 %v2869
        %2960 = vmatpush.msra.mxu0 %v2865
        %2961 = vmatpush.msra.mxu0 %v2861
        %2962 = vmatpush.msra.mxu0 %v2857
        %2963 = vmatpush.msra.mxu0 %v2853
        %2964 = vmatpush.msra.mxu0 %v2849
        %2965 = vmatmul.f32.gmra.mxu0 %v2532
        %v2966 = vpop.f32.mrf.mxu0
        %v2967 = vadd.f32 %v2947, %v2966
        %2968 = vdwg.mxu0
        %2969 = vmatpush.msra.mxu0 0.0
        %2970 = vmatpush.msra.mxu0 0.0
        %2971 = vmatpush.msra.mxu0 0.0
        %2972 = vmatpush.msra.mxu0 0.0
        %2973 = vmatpush.msra.mxu0 0.0
        %2974 = vmatpush.msra.mxu0 0.0
        %2975 = vmatpush.msra.mxu0 0.0
        %2976 = vmatpush.msra.mxu0 0.0
        %2977 = vmatpush.msra.mxu0 0.0
        %2978 = vmatpush.msra.mxu0 0.0
        %2979 = vmatpush.msra.mxu0 0.0
        %2980 = vmatpush.msra.mxu0 0.0
        %2981 = vmatpush.msra.mxu0 %v2925
        %2982 = vmatpush.msra.mxu0 %v2921
        %2983 = vmatpush.msra.mxu0 %v2917
        %2984 = vmatpush.msra.mxu0 %v2913
        %2985 = vmatmul.f32.gmra.mxu0 %v2538
        %v2986 = vpop.f32.mrf.mxu0
        %v2987 = vadd.f32 %v2967, %v2986
        %2988 = vdwg.mxu0
        %2989 = vmatpush.msra.mxu0 %v2846
        %2990 = vmatpush.msra.mxu0 %v2842
        %2991 = vmatpush.msra.mxu0 %v2838
        %2992 = vmatpush.msra.mxu0 %v2834
        %2993 = vmatpush.msra.mxu0 %v2830
        %2994 = vmatpush.msra.mxu0 %v2826
        %2995 = vmatpush.msra.mxu0 %v2822
        %2996 = vmatpush.msra.mxu0 %v2818
        %2997 = vmatpush.msra.mxu0 %v2814
        %2998 = vmatpush.msra.mxu0 %v2810
        %2999 = vmatpush.msra.mxu0 %v2806
        %3000 = vmatpush.msra.mxu0 %v2802
        %3001 = vmatpush.msra.mxu0 %v2798
        %3002 = vmatpush.msra.mxu0 %v2794
        %3003 = vmatpush.msra.mxu0 %v2790
        %3004 = vmatpush.msra.mxu0 %v2786
        %3005 = vmatmul.f32.gmra.mxu0 %v2529
        %v3006 = vpop.f32.mrf.mxu0
        %v3007 = vadd.f32 0.0, %v3006
        %3008 = vdwg.mxu0
        %3009 = vmatpush.msra.mxu0 %v2910
        %3010 = vmatpush.msra.mxu0 %v2906
        %3011 = vmatpush.msra.mxu0 %v2902
        %3012 = vmatpush.msra.mxu0 %v2898
        %3013 = vmatpush.msra.mxu0 %v2894
        %3014 = vmatpush.msra.mxu0 %v2890
        %3015 = vmatpush.msra.mxu0 %v2886
        %3016 = vmatpush.msra.mxu0 %v2882
        %3017 = vmatpush.msra.mxu0 %v2878
        %3018 = vmatpush.msra.mxu0 %v2874
        %3019 = vmatpush.msra.mxu0 %v2870
        %3020 = vmatpush.msra.mxu0 %v2866
        %3021 = vmatpush.msra.mxu0 %v2862
        %3022 = vmatpush.msra.mxu0 %v2858
        %3023 = vmatpush.msra.mxu0 %v2854
        %3024 = vmatpush.msra.mxu0 %v2850
        %3025 = vmatmul.f32.gmra.mxu0 %v2532
        %v3026 = vpop.f32.mrf.mxu0
        %v3027 = vadd.f32 %v3007, %v3026
        %3028 = vdwg.mxu0
        %3029 = vmatpush.msra.mxu0 0.0
        %3030 = vmatpush.msra.mxu0 0.0
        %3031 = vmatpush.msra.mxu0 0.0
        %3032 = vmatpush.msra.mxu0 0.0
        %3033 = vmatpush.msra.mxu0 0.0
        %3034 = vmatpush.msra.mxu0 0.0
        %3035 = vmatpush.msra.mxu0 0.0
        %3036 = vmatpush.msra.mxu0 0.0
        %3037 = vmatpush.msra.mxu0 0.0
        %3038 = vmatpush.msra.mxu0 0.0
        %3039 = vmatpush.msra.mxu0 0.0
        %3040 = vmatpush.msra.mxu0 0.0
        %3041 = vmatpush.msra.mxu0 %v2926
        %3042 = vmatpush.msra.mxu0 %v2922
        %3043 = vmatpush.msra.mxu0 %v2918
        %3044 = vmatpush.msra.mxu0 %v2914
        %3045 = vmatmul.f32.gmra.mxu0 %v2538
        %v3046 = vpop.f32.mrf.mxu0
        %v3047 = vadd.f32 %v3027, %v3046
        %3048 = vdwg.mxu0
        %3049 = vmatpush.msra.mxu0 %v2847
        %3050 = vmatpush.msra.mxu0 %v2843
        %3051 = vmatpush.msra.mxu0 %v2839
        %3052 = vmatpush.msra.mxu0 %v2835
        %3053 = vmatpush.msra.mxu0 %v2831
        %3054 = vmatpush.msra.mxu0 %v2827
        %3055 = vmatpush.msra.mxu0 %v2823
        %3056 = vmatpush.msra.mxu0 %v2819
        %3057 = vmatpush.msra.mxu0 %v2815
        %3058 = vmatpush.msra.mxu0 %v2811
        %3059 = vmatpush.msra.mxu0 %v2807
        %3060 = vmatpush.msra.mxu0 %v2803
        %3061 = vmatpush.msra.mxu0 %v2799
        %3062 = vmatpush.msra.mxu0 %v2795
        %3063 = vmatpush.msra.mxu0 %v2791
        %3064 = vmatpush.msra.mxu0 %v2787
        %3065 = vmatmul.f32.gmra.mxu0 %v2529
        %v3066 = vpop.f32.mrf.mxu0
        %v3067 = vadd.f32 0.0, %v3066
        %3068 = vdwg.mxu0
        %3069 = vmatpush.msra.mxu0 %v2911
        %3070 = vmatpush.msra.mxu0 %v2907
        %3071 = vmatpush.msra.mxu0 %v2903
        %3072 = vmatpush.msra.mxu0 %v2899
        %3073 = vmatpush.msra.mxu0 %v2895
        %3074 = vmatpush.msra.mxu0 %v2891
        %3075 = vmatpush.msra.mxu0 %v2887
        %3076 = vmatpush.msra.mxu0 %v2883
        %3077 = vmatpush.msra.mxu0 %v2879
        %3078 = vmatpush.msra.mxu0 %v2875
        %3079 = vmatpush.msra.mxu0 %v2871
        %3080 = vmatpush.msra.mxu0 %v2867
        %3081 = vmatpush.msra.mxu0 %v2863
        %3082 = vmatpush.msra.mxu0 %v2859
        %3083 = vmatpush.msra.mxu0 %v2855
        %3084 = vmatpush.msra.mxu0 %v2851
        %3085 = vmatmul.f32.gmra.mxu0 %v2532
        %v3086 = vpop.f32.mrf.mxu0
        %v3087 = vadd.f32 %v3067, %v3086
        %3088 = vdwg.mxu0
        %3089 = vmatpush.msra.mxu0 0.0
        %3090 = vmatpush.msra.mxu0 0.0
        %3091 = vmatpush.msra.mxu0 0.0
        %3092 = vmatpush.msra.mxu0 0.0
        %3093 = vmatpush.msra.mxu0 0.0
        %3094 = vmatpush.msra.mxu0 0.0
        %3095 = vmatpush.msra.mxu0 0.0
        %3096 = vmatpush.msra.mxu0 0.0
        %3097 = vmatpush.msra.mxu0 0.0
        %3098 = vmatpush.msra.mxu0 0.0
        %3099 = vmatpush.msra.mxu0 0.0
        %3100 = vmatpush.msra.mxu0 0.0
        %3101 = vmatpush.msra.mxu0 %v2927
        %3102 = vmatpush.msra.mxu0 %v2923
        %3103 = vmatpush.msra.mxu0 %v2919
        %3104 = vmatpush.msra.mxu0 %v2915
        %3105 = vmatmul.f32.gmra.mxu0 %v2538
        %v3106 = vpop.f32.mrf.mxu0
        %v3107 = vadd.f32 %v3087, %v3106
        %3108 = vdwg.mxu0
        %3109 = vmatpush.msra.mxu0 %v2848
        %3110 = vmatpush.msra.mxu0 %v2844
        %3111 = vmatpush.msra.mxu0 %v2840
        %3112 = vmatpush.msra.mxu0 %v2836
        %3113 = vmatpush.msra.mxu0 %v2832
        %3114 = vmatpush.msra.mxu0 %v2828
        %3115 = vmatpush.msra.mxu0 %v2824
        %3116 = vmatpush.msra.mxu0 %v2820
        %3117 = vmatpush.msra.mxu0 %v2816
        %3118 = vmatpush.msra.mxu0 %v2812
        %3119 = vmatpush.msra.mxu0 %v2808
        %3120 = vmatpush.msra.mxu0 %v2804
        %3121 = vmatpush.msra.mxu0 %v2800
        %3122 = vmatpush.msra.mxu0 %v2796
        %3123 = vmatpush.msra.mxu0 %v2792
        %3124 = vmatpush.msra.mxu0 %v2788
        %3125 = vmatmul.f32.gmra.mxu0 %v2529
        %v3126 = vpop.f32.mrf.mxu0
        %v3127 = vadd.f32 0.0, %v3126
        %3128 = vdwg.mxu0
        %3129 = vmatpush.msra.mxu0 %v2912
        %3130 = vmatpush.msra.mxu0 %v2908
        %3131 = vmatpush.msra.mxu0 %v2904
        %3132 = vmatpush.msra.mxu0 %v2900
        %3133 = vmatpush.msra.mxu0 %v2896
        %3134 = vmatpush.msra.mxu0 %v2892
        %3135 = vmatpush.msra.mxu0 %v2888
        %3136 = vmatpush.msra.mxu0 %v2884
        %3137 = vmatpush.msra.mxu0 %v2880
        %3138 = vmatpush.msra.mxu0 %v2876
        %3139 = vmatpush.msra.mxu0 %v2872
        %3140 = vmatpush.msra.mxu0 %v2868
        %3141 = vmatpush.msra.mxu0 %v2864
        %3142 = vmatpush.msra.mxu0 %v2860
        %3143 = vmatpush.msra.mxu0 %v2856
        %3144 = vmatpush.msra.mxu0 %v2852
        %3145 = vmatmul.f32.gmra.mxu0 %v2532
        %v3146 = vpop.f32.mrf.mxu0
        %v3147 = vadd.f32 %v3127, %v3146
        %3148 = vdwg.mxu0
        %3149 = vmatpush.msra.mxu0 0.0
        %3150 = vmatpush.msra.mxu0 0.0
        %3151 = vmatpush.msra.mxu0 0.0
        %3152 = vmatpush.msra.mxu0 0.0
        %3153 = vmatpush.msra.mxu0 0.0
        %3154 = vmatpush.msra.mxu0 0.0
        %3155 = vmatpush.msra.mxu0 0.0
        %3156 = vmatpush.msra.mxu0 0.0
        %3157 = vmatpush.msra.mxu0 0.0
        %3158 = vmatpush.msra.mxu0 0.0
        %3159 = vmatpush.msra.mxu0 0.0
        %3160 = vmatpush.msra.mxu0 0.0
        %3161 = vmatpush.msra.mxu0 %v2928
        %3162 = vmatpush.msra.mxu0 %v2924
        %3163 = vmatpush.msra.mxu0 %v2920
        %3164 = vmatpush.msra.mxu0 %v2916
        %3165 = vmatmul.f32.gmra.mxu0 %v2538
        %v3166 = vpop.f32.mrf.mxu0
        %v3167 = vadd.f32 %v3147, %v3166
        %3168 = vdwg.mxu0
        %v3169 = vadd.f32 %v2510, %v2987
        %v3170 = vadd.f32 %v2511, %v3047
        %v3171 = vadd.f32 %v2512, %v3107
        %v3172 = vadd.f32 %v2513, %v3167
        %v3173 = vld [vmem:[%s350] sm:$0xfc]
        %v3174 = vld [vmem:[%s350 + $0x8] sm:$0xfc]
        %v3175 = vld [vmem:[%s350 + $0x10] sm:$0xfc]
        %v3176 = vld [vmem:[%s350 + $0x18] sm:$0x1]
        %v3177 = vld [vmem:[%s350 + $0x20] sm:$0x1]
        %v3178 = vld [vmem:[%s350 + $0x28] sm:$0x1]
        %v3185 = vrot.slane %v3173, 2
        %v3186 = vrot.slane %v3176, 2
        %v3187 = vsel %vm2526, %v3185, %v3186
        %v3188 = vrot.slane %v3174, 2
        %v3189 = vrot.slane %v3177, 2
        %v3190 = vsel %vm2526, %v3188, %v3189
        %v3191 = vrot.slane %v3175, 2
        %v3192 = vrot.slane %v3178, 2
        %v3193 = vsel %vm2526, %v3191, %v3192
        %v3196 = vsel %vm499, %v3193, 0
        %3198 = vmatpush.msra.mxu0 %v2845
        %3199 = vmatpush.msra.mxu0 %v2841
        %3200 = vmatpush.msra.mxu0 %v2837
        %3201 = vmatpush.msra.mxu0 %v2833
        %3202 = vmatpush.msra.mxu0 %v2829
        %3203 = vmatpush.msra.mxu0 %v2825
        %3204 = vmatpush.msra.mxu0 %v2821
        %3205 = vmatpush.msra.mxu0 %v2817
        %3206 = vmatpush.msra.mxu0 %v2813
        %3207 = vmatpush.msra.mxu0 %v2809
        %3208 = vmatpush.msra.mxu0 %v2805
        %3209 = vmatpush.msra.mxu0 %v2801
        %3210 = vmatpush.msra.mxu0 %v2797
        %3211 = vmatpush.msra.mxu0 %v2793
        %3212 = vmatpush.msra.mxu0 %v2789
        %3213 = vmatpush.msra.mxu0 %v2785
        %3214 = vmatmul.f32.gmra.mxu0 %v3187
        %v3215 = vpop.f32.mrf.mxu0
        %v3216 = vadd.f32 0.0, %v3215
        %3217 = vdwg.mxu0
        %3218 = vmatpush.msra.mxu0 %v2909
        %3219 = vmatpush.msra.mxu0 %v2905
        %3220 = vmatpush.msra.mxu0 %v2901
        %3221 = vmatpush.msra.mxu0 %v2897
        %3222 = vmatpush.msra.mxu0 %v2893
        %3223 = vmatpush.msra.mxu0 %v2889
        %3224 = vmatpush.msra.mxu0 %v2885
        %3225 = vmatpush.msra.mxu0 %v2881
        %3226 = vmatpush.msra.mxu0 %v2877
        %3227 = vmatpush.msra.mxu0 %v2873
        %3228 = vmatpush.msra.mxu0 %v2869
        %3229 = vmatpush.msra.mxu0 %v2865
        %3230 = vmatpush.msra.mxu0 %v2861
        %3231 = vmatpush.msra.mxu0 %v2857
        %3232 = vmatpush.msra.mxu0 %v2853
        %3233 = vmatpush.msra.mxu0 %v2849
        %3234 = vmatmul.f32.gmra.mxu0 %v3190
        %v3235 = vpop.f32.mrf.mxu0
        %v3236 = vadd.f32 %v3216, %v3235
        %3237 = vdwg.mxu0
        %3238 = vmatpush.msra.mxu0 0.0
        %3239 = vmatpush.msra.mxu0 0.0
        %3240 = vmatpush.msra.mxu0 0.0
        %3241 = vmatpush.msra.mxu0 0.0
        %3242 = vmatpush.msra.mxu0 0.0
        %3243 = vmatpush.msra.mxu0 0.0
        %3244 = vmatpush.msra.mxu0 0.0
        %3245 = vmatpush.msra.mxu0 0.0
        %3246 = vmatpush.msra.mxu0 0.0
        %3247 = vmatpush.msra.mxu0 0.0
        %3248 = vmatpush.msra.mxu0 0.0
        %3249 = vmatpush.msra.mxu0 0.0
        %3250 = vmatpush.msra.mxu0 %v2925
        %3251 = vmatpush.msra.mxu0 %v2921
        %3252 = vmatpush.msra.mxu0 %v2917
        %3253 = vmatpush.msra.mxu0 %v2913
        %3254 = vmatmul.f32.gmra.mxu0 %v3196
        %v3255 = vpop.f32.mrf.mxu0
        %v3256 = vadd.f32 %v3236, %v3255
        %3257 = vdwg.mxu0
        %3258 = vmatpush.msra.mxu0 %v2846
        %3259 = vmatpush.msra.mxu0 %v2842
        %3260 = vmatpush.msra.mxu0 %v2838
        %3261 = vmatpush.msra.mxu0 %v2834
        %3262 = vmatpush.msra.mxu0 %v2830
        %3263 = vmatpush.msra.mxu0 %v2826
        %3264 = vmatpush.msra.mxu0 %v2822
        %3265 = vmatpush.msra.mxu0 %v2818
        %3266 = vmatpush.msra.mxu0 %v2814
        %3267 = vmatpush.msra.mxu0 %v2810
        %3268 = vmatpush.msra.mxu0 %v2806
        %3269 = vmatpush.msra.mxu0 %v2802
        %3270 = vmatpush.msra.mxu0 %v2798
        %3271 = vmatpush.msra.mxu0 %v2794
        %3272 = vmatpush.msra.mxu0 %v2790
        %3273 = vmatpush.msra.mxu0 %v2786
        %3274 = vmatmul.f32.gmra.mxu0 %v3187
        %v3275 = vpop.f32.mrf.mxu0
        %v3276 = vadd.f32 0.0, %v3275
        %3277 = vdwg.mxu0
        %3278 = vmatpush.msra.mxu0 %v2910
        %3279 = vmatpush.msra.mxu0 %v2906
        %3280 = vmatpush.msra.mxu0 %v2902
        %3281 = vmatpush.msra.mxu0 %v2898
        %3282 = vmatpush.msra.mxu0 %v2894
        %3283 = vmatpush.msra.mxu0 %v2890
        %3284 = vmatpush.msra.mxu0 %v2886
        %3285 = vmatpush.msra.mxu0 %v2882
        %3286 = vmatpush.msra.mxu0 %v2878
        %3287 = vmatpush.msra.mxu0 %v2874
        %3288 = vmatpush.msra.mxu0 %v2870
        %3289 = vmatpush.msra.mxu0 %v2866
        %3290 = vmatpush.msra.mxu0 %v2862
        %3291 = vmatpush.msra.mxu0 %v2858
        %3292 = vmatpush.msra.mxu0 %v2854
        %3293 = vmatpush.msra.mxu0 %v2850
        %3294 = vmatmul.f32.gmra.mxu0 %v3190
        %v3295 = vpop.f32.mrf.mxu0
        %v3296 = vadd.f32 %v3276, %v3295
        %3297 = vdwg.mxu0
        %3298 = vmatpush.msra.mxu0 0.0
        %3299 = vmatpush.msra.mxu0 0.0
        %3300 = vmatpush.msra.mxu0 0.0
        %3301 = vmatpush.msra.mxu0 0.0
        %3302 = vmatpush.msra.mxu0 0.0
        %3303 = vmatpush.msra.mxu0 0.0
        %3304 = vmatpush.msra.mxu0 0.0
        %3305 = vmatpush.msra.mxu0 0.0
        %3306 = vmatpush.msra.mxu0 0.0
        %3307 = vmatpush.msra.mxu0 0.0
        %3308 = vmatpush.msra.mxu0 0.0
        %3309 = vmatpush.msra.mxu0 0.0
        %3310 = vmatpush.msra.mxu0 %v2926
        %3311 = vmatpush.msra.mxu0 %v2922
        %3312 = vmatpush.msra.mxu0 %v2918
        %3313 = vmatpush.msra.mxu0 %v2914
        %3314 = vmatmul.f32.gmra.mxu0 %v3196
        %v3315 = vpop.f32.mrf.mxu0
        %v3316 = vadd.f32 %v3296, %v3315
        %3317 = vdwg.mxu0
        %3318 = vmatpush.msra.mxu0 %v2847
        %3319 = vmatpush.msra.mxu0 %v2843
        %3320 = vmatpush.msra.mxu0 %v2839
        %3321 = vmatpush.msra.mxu0 %v2835
        %3322 = vmatpush.msra.mxu0 %v2831
        %3323 = vmatpush.msra.mxu0 %v2827
        %3324 = vmatpush.msra.mxu0 %v2823
        %3325 = vmatpush.msra.mxu0 %v2819
        %3326 = vmatpush.msra.mxu0 %v2815
        %3327 = vmatpush.msra.mxu0 %v2811
        %3328 = vmatpush.msra.mxu0 %v2807
        %3329 = vmatpush.msra.mxu0 %v2803
        %3330 = vmatpush.msra.mxu0 %v2799
        %3331 = vmatpush.msra.mxu0 %v2795
        %3332 = vmatpush.msra.mxu0 %v2791
        %3333 = vmatpush.msra.mxu0 %v2787
        %3334 = vmatmul.f32.gmra.mxu0 %v3187
        %v3335 = vpop.f32.mrf.mxu0
        %v3336 = vadd.f32 0.0, %v3335
        %3337 = vdwg.mxu0
        %3338 = vmatpush.msra.mxu0 %v2911
        %3339 = vmatpush.msra.mxu0 %v2907
        %3340 = vmatpush.msra.mxu0 %v2903
        %3341 = vmatpush.msra.mxu0 %v2899
        %3342 = vmatpush.msra.mxu0 %v2895
        %3343 = vmatpush.msra.mxu0 %v2891
        %3344 = vmatpush.msra.mxu0 %v2887
        %3345 = vmatpush.msra.mxu0 %v2883
        %3346 = vmatpush.msra.mxu0 %v2879
        %3347 = vmatpush.msra.mxu0 %v2875
        %3348 = vmatpush.msra.mxu0 %v2871
        %3349 = vmatpush.msra.mxu0 %v2867
        %3350 = vmatpush.msra.mxu0 %v2863
        %3351 = vmatpush.msra.mxu0 %v2859
        %3352 = vmatpush.msra.mxu0 %v2855
        %3353 = vmatpush.msra.mxu0 %v2851
        %3354 = vmatmul.f32.gmra.mxu0 %v3190
        %v3355 = vpop.f32.mrf.mxu0
        %v3356 = vadd.f32 %v3336, %v3355
        %3357 = vdwg.mxu0
        %3358 = vmatpush.msra.mxu0 0.0
        %3359 = vmatpush.msra.mxu0 0.0
        %3360 = vmatpush.msra.mxu0 0.0
        %3361 = vmatpush.msra.mxu0 0.0
        %3362 = vmatpush.msra.mxu0 0.0
        %3363 = vmatpush.msra.mxu0 0.0
        %3364 = vmatpush.msra.mxu0 0.0
        %3365 = vmatpush.msra.mxu0 0.0
        %3366 = vmatpush.msra.mxu0 0.0
        %3367 = vmatpush.msra.mxu0 0.0
        %3368 = vmatpush.msra.mxu0 0.0
        %3369 = vmatpush.msra.mxu0 0.0
        %3370 = vmatpush.msra.mxu0 %v2927
        %3371 = vmatpush.msra.mxu0 %v2923
        %3372 = vmatpush.msra.mxu0 %v2919
        %3373 = vmatpush.msra.mxu0 %v2915
        %3374 = vmatmul.f32.gmra.mxu0 %v3196
        %v3375 = vpop.f32.mrf.mxu0
        %v3376 = vadd.f32 %v3356, %v3375
        %3377 = vdwg.mxu0
        %3378 = vmatpush.msra.mxu0 %v2848
        %3379 = vmatpush.msra.mxu0 %v2844
        %3380 = vmatpush.msra.mxu0 %v2840
        %3381 = vmatpush.msra.mxu0 %v2836
        %3382 = vmatpush.msra.mxu0 %v2832
        %3383 = vmatpush.msra.mxu0 %v2828
        %3384 = vmatpush.msra.mxu0 %v2824
        %3385 = vmatpush.msra.mxu0 %v2820
        %3386 = vmatpush.msra.mxu0 %v2816
        %3387 = vmatpush.msra.mxu0 %v2812
        %3388 = vmatpush.msra.mxu0 %v2808
        %3389 = vmatpush.msra.mxu0 %v2804
        %3390 = vmatpush.msra.mxu0 %v2800
        %3391 = vmatpush.msra.mxu0 %v2796
        %3392 = vmatpush.msra.mxu0 %v2792
        %3393 = vmatpush.msra.mxu0 %v2788
        %3394 = vmatmul.f32.gmra.mxu0 %v3187
        %v3395 = vpop.f32.mrf.mxu0
        %v3396 = vadd.f32 0.0, %v3395
        %3397 = vdwg.mxu0
        %3398 = vmatpush.msra.mxu0 %v2912
        %3399 = vmatpush.msra.mxu0 %v2908
        %3400 = vmatpush.msra.mxu0 %v2904
        %3401 = vmatpush.msra.mxu0 %v2900
        %3402 = vmatpush.msra.mxu0 %v2896
        %3403 = vmatpush.msra.mxu0 %v2892
        %3404 = vmatpush.msra.mxu0 %v2888
        %3405 = vmatpush.msra.mxu0 %v2884
        %3406 = vmatpush.msra.mxu0 %v2880
        %3407 = vmatpush.msra.mxu0 %v2876
        %3408 = vmatpush.msra.mxu0 %v2872
        %3409 = vmatpush.msra.mxu0 %v2868
        %3410 = vmatpush.msra.mxu0 %v2864
        %3411 = vmatpush.msra.mxu0 %v2860
        %3412 = vmatpush.msra.mxu0 %v2856
        %3413 = vmatpush.msra.mxu0 %v2852
        %3414 = vmatmul.f32.gmra.mxu0 %v3190
        %v3415 = vpop.f32.mrf.mxu0
        %v3416 = vadd.f32 %v3396, %v3415
        %3417 = vdwg.mxu0
        %3418 = vmatpush.msra.mxu0 0.0
        %3419 = vmatpush.msra.mxu0 0.0
        %3420 = vmatpush.msra.mxu0 0.0
        %3421 = vmatpush.msra.mxu0 0.0
        %3422 = vmatpush.msra.mxu0 0.0
        %3423 = vmatpush.msra.mxu0 0.0
        %3424 = vmatpush.msra.mxu0 0.0
        %3425 = vmatpush.msra.mxu0 0.0
        %3426 = vmatpush.msra.mxu0 0.0
        %3427 = vmatpush.msra.mxu0 0.0
        %3428 = vmatpush.msra.mxu0 0.0
        %3429 = vmatpush.msra.mxu0 0.0
        %3430 = vmatpush.msra.mxu0 %v2928
        %3431 = vmatpush.msra.mxu0 %v2924
        %3432 = vmatpush.msra.mxu0 %v2920
        %3433 = vmatpush.msra.mxu0 %v2916
        %3434 = vmatmul.f32.gmra.mxu0 %v3196
        %v3435 = vpop.f32.mrf.mxu0
        %v3436 = vadd.f32 %v3416, %v3435
        %3437 = vdwg.mxu0
        %v3438 = vadd.f32 %v2780, %v3256
        %v3439 = vadd.f32 %v2781, %v3316
        %v3440 = vadd.f32 %v2782, %v3376
        %v3441 = vadd.f32 %v2783, %v3436
        %v3442 = vld [vmem:[#allocation4] sm:$0xf]
        %v3444 = vperm.slane %v3442, 0
        %v3445 = vperm.slane %v3442, 1
        %v3446 = vperm.slane %v3442, 2
        %v3447 = vperm.slane %v3442, 3
        %v3452 = vadd.f32 %v3169, %v3444
        %v3453 = vadd.f32 %v3170, %v3445
        %v3454 = vadd.f32 %v3171, %v3446
        %v3455 = vadd.f32 %v3172, %v3447
        %v3456 = vmax.f32 %v3452, 0.0
        %v3457 = vmax.f32 %v3453, 0.0
        %v3458 = vmax.f32 %v3454, 0.0
        %v3459 = vmax.f32 %v3455, 0.0
        %v3460 = vadd.f32 %v3438, %v3444
        %v3461 = vadd.f32 %v3439, %v3445
        %v3462 = vadd.f32 %v3440, %v3446
        %v3463 = vadd.f32 %v3441, %v3447
        %v3464 = vmax.f32 %v3460, 0.0
        %v3465 = vmax.f32 %v3461, 0.0
        %v3466 = vmax.f32 %v3462, 0.0
        %v3467 = vmax.f32 %v3463, 0.0
        %v3468 = vmax.f32 %v3456, %v3464
        %v3469 = vmax.f32 %v3457, %v3465
        %v3470 = vmax.f32 %v3458, %v3466
        %v3471 = vmax.f32 %v3459, %v3467
        %v3472 = vmax.f32 %v3468, %v3470
        %v3473 = vmax.f32 %v3469, %v3471
        %3474 = vst [vmem:[%s202] sm:$0x7f] %v3472
        %vm3475 = vcmask 784384
        %3476 = vst.msk [vmem:[%s202 + $0x8] sm:$0x7f] %vm3475, %v3473
        %p3477 = scmp.lt.s32.totalorder %s16, 1
        %s3478 = scalar_select %p3477, %s16, 1
        %s3479 = smul.addr %s3478, 2
        %s3480 = smul.addr %s3479, 8
        %s3481 = scalar_lea.vmem %s3, %s3480
        // Predicated region
        $region41: #{cnn_forward.4} parent=31 // pred_check
          %p3482 = pneg %p102
        $region42: #{cnn_forward.4} parent=31 // pred_check_branch
          %3484 = sbr.rel (%p3482) target = $region44
        $region43: #{cnn_forward.4} parent=31 // pred_region
          _
        $region44: #{cnn_forward.4} parent=31 // pred_fallthru
          _
      $region32: #{cnn_forward.4} parent=5 // pred_fallthru
        _
      %p3485 = scmp.le.s32.totalorder 2, %s11
      // Predicated region
      $region45: #{cnn_forward.4} parent=5 // pred_check
        %p3486 = pneg %p3485
      $region46: #{cnn_forward.4} parent=5 // pred_check_branch
        %3488 = sbr.rel (%p3486) target = $region48
      $region47: #{cnn_forward.4} parent=5 // pred_region
        %s3489 = ssub.s32 %s11, 2
        // Predicated region
        $region49: #{cnn_forward.4} parent=47 // pred_check
          %p3490 = pneg %p108
        $region50: #{cnn_forward.4} parent=47 // pred_check_branch
          %3492 = sbr.rel (%p3490) target = $region52
        $region51: #{cnn_forward.4} parent=47 // pred_region
          %p3493 = scmp.lt.s32.totalorder %s17, 1
          %s3494 = scalar_select %p3493, %s17, 1
          %s3495 = smul.addr %s3494, 2
          %s3496 = smul.addr %s3495, 8
          %s3497 = scalar_lea.vmem %s3, %s3496
        $region52: #{cnn_forward.4} parent=47 // pred_fallthru
          _
      $region48: #{cnn_forward.4} parent=5 // pred_fallthru
        _
    $region6: #{cnn_forward.4} parent=1 // loop_footer
      %s15 = sadd.s32 1, %s11
    $region7: #{cnn_forward.4} parent=1 // loop_footer_branch
      %10 = sbr.rel target = $region3
    $region8: #{cnn_forward.4} parent=1 // loop_exit
      _
    %3498 = vsyncpa [#allocation3], 1
    %s3499 = scalar_lea.sflag [#allocation3], 1
    %3500 = vsyncpa %s3499, 1
    %3501 = vsyncpa [#allocation5], 1

</llo_original>
